<compile_context>
chip_gen: v7x
topology: tpu7x:2x2x1
jax: 0.10.0
libtpu: 0.0.40
codegen_flags: <defaults>
</compile_context>

<pallas_src>
import functools

import numpy as np
import jax
import jax.numpy as jnp
from jax.experimental import pallas as pl
from jax.experimental.pallas import tpu as pltpu


# ------------------------- Pallas kernel (fused conv + separable resize) -------------------------

def _fused_conv_resize_kernel(x_ref, wk_ref, b_ref, awt_ref, ah_ref, o_ref):
    # x_ref  : (N, Cin, (H+3)*(W+2))  bf16  zero-padded image, rows flattened
    # wk_ref : (9, Cout, Cin)         bf16  conv taps, k = kh*3 + kw
    # b_ref  : (Cout, 1)              f32   conv bias
    # awt_ref: (Cout, W, Wout)        bf16  A_w^T broadcast over Cout
    # ah_ref : (Cout, Hout, H)        bf16  A_h   broadcast over Cout
    # o_ref  : (N, Cout, Hout, Wout)  f32   NCHW output
    N = x_ref.shape[0]
    _, Cout, _Cin = wk_ref.shape
    _, W, Wout = awt_ref.shape
    _, Hout, H = ah_ref.shape
    Wp = W + 2            # padded width
    L = H * Wp            # flat conv window length per tap

    awt = awt_ref[...]    # (Cout, W, Wout)  bf16
    ah = ah_ref[...]      # (Cout, Hout, H)  bf16
    b = b_ref[...]        # (Cout, 1)        f32

    # Whole batch handled in this single kernel step (no grid); N is tiny -> unroll.
    for n in range(N):
        xn = x_ref[n]                                   # (Cin, (H+3)*Wp) bf16

        # ---- 3x3 conv (pad=1): 9 accumulated MXU dots over shifted flat windows ----
        acc = None
        for kh in range(3):
            for kw in range(3):
                off = kh * Wp + kw                      # static offset
                slab = xn[:, off:off + L]               # (Cin, H*Wp)
                d = jnp.dot(wk_ref[3 * kh + kw], slab,
                            preferred_element_type=jnp.float32)   # (Cout, H*Wp) f32
                acc = d if acc is None else acc + d
        y = acc + b                                     # (Cout, H*Wp) f32
        # valid conv outputs sit at flat index h*Wp + w with w < W; drop the pad cols
        y3 = y.reshape(Cout, H, Wp)[:, :, :W].astype(jnp.bfloat16)   # (Cout, H, W)

        # ---- separable bilinear resize (align_corners=False), batched over Cout ----
        t = jnp.einsum("chw,cwq->chq", y3, awt,
                       preferred_element_type=jnp.float32)          # (Cout, H, Wout)
        z = jnp.einsum("cph,chq->cpq", ah, t.astype(jnp.bfloat16),
                       preferred_element_type=jnp.float32)          # (Cout, Hout, Wout)

        o_ref[n] = z.astype(o_ref.dtype)


def _fused_conv_resize(xflat, wk, b2, awt_b, ah_b, out_shape):
    """Single pallas_call, no grid: all operands are tiny and live whole in VMEM."""
    return pl.pallas_call(
        _fused_conv_resize_kernel,
        out_shape=jax.ShapeDtypeStruct(out_shape, jnp.float32),
        in_specs=[pl.BlockSpec(memory_space=pltpu.MemorySpace.VMEM)] * 5,
        out_specs=pl.BlockSpec(memory_space=pltpu.MemorySpace.VMEM),
    )(xflat, wk, b2, awt_b, ah_b)


# ------------------------- constants (hoisted & cached) -------------------------

def _bilinear_matrix(in_size, out_size):
    """Row-stochastic interpolation matrix matching
    F.interpolate(mode='bilinear', align_corners=False)."""
    A = np.zeros((out_size, in_size), dtype=np.float32)
    scale = in_size / out_size
    for d in range(out_size):
        src = (d + 0.5) * scale - 0.5
        src = max(src, 0.0)
        i0 = min(int(np.floor(src)), in_size - 1)
        i1 = min(i0 + 1, in_size - 1)
        lam = src - i0
        A[d, i0] += 1.0 - lam
        A[d, i1] += lam
    return A


@functools.lru_cache(maxsize=None)
def _resize_operators(hin, win, hout, wout, cout):
    """Separable bilinear operators, pre-broadcast over Cout so the in-kernel
    contractions are plain batched matmuls.  Weights (0.0/0.25/0.75/1.0) are exact
    in bfloat16."""
    ah = _bilinear_matrix(hin, hout)                    # (hout, hin)
    awt = _bilinear_matrix(win, wout).T                 # (win, wout) = A_w^T
    ah_b = np.ascontiguousarray(np.broadcast_to(ah, (cout, hout, hin)))
    awt_b = np.ascontiguousarray(np.broadcast_to(awt, (cout, win, wout)))
    return ah_b, awt_b


# ------------------------- the layer (conv3x3 + bilinear upsample) -------------------------

@functools.partial(jax.jit, static_argnames=("target_shape",))
def conv3x3_bilinear(x_nchw, weight, bias, target_shape):
    """x: [N, Cin, H, W]; weight: [Cout, Cin, 3, 3]; bias: [Cout]
    -> conv(3x3, pad=1) then bilinear resize (align_corners=False) to target_shape, NCHW."""
    N, Cin, H, W = x_nchw.shape
    Cout = weight.shape[0]
    Hout, Wout = target_shape
    Wp = W + 2

    # zero-pad 1 ring (+1 extra bottom row so every 3x3 tap's flat window stays in
    # bounds), cast to bf16, flatten rows.  ~5 KB/image, one tiny fusion.
    xpad = jnp.pad(x_nchw, ((0, 0), (0, 0), (1, 2), (1, 1))).astype(jnp.bfloat16)
    xflat = xpad.reshape(N, Cin, (H + 3) * Wp)

    # wk[kh*3+kw, co, ci] = weight[co, ci, kh, kw]
    wk = jnp.transpose(weight, (2, 3, 0, 1)).reshape(9, Cout, Cin).astype(jnp.bfloat16)
    b2 = bias.reshape(Cout, 1).astype(jnp.float32)

    ah_b, awt_b = _resize_operators(H, W, Hout, Wout, Cout)     # numpy constants
    ah_b = jnp.asarray(ah_b, dtype=jnp.bfloat16)
    awt_b = jnp.asarray(awt_b, dtype=jnp.bfloat16)

    return _fused_conv_resize(xflat, wk, b2, awt_b, ah_b, (N, Cout, Hout, Wout))


# ------------------------- Parallel module semantics -------------------------

def parallel_forward(x, *, weight, bias, target_shape, content=True, style=True):
    """PyTorch `Parallel.forward`: x = (img, content_list, style_list).
    The list appends are host-side Python bookkeeping, not kernel work."""
    img, content_list, style_list = x
    img = conv3x3_bilinear(img, weight, bias, target_shape)     # self.layer(img)
    if content:
        content_list.append(img)
    if style:
        style_list.append(img)
    return (img, content_list, style_list)


if __name__ == "__main__":
    key = jax.random.PRNGKey(0)
    kx, kw, kb = jax.random.split(key, 3)

    N, Cin, H, W = 2, 4, 16, 16
    Cout = 8
    target_shape = (32, 32)
    Hout, Wout = target_shape

    x = jax.random.normal(kx, (N, Cin, H, W), dtype=jnp.float32)
    weight = jax.random.normal(kw, (Cout, Cin, 3, 3), dtype=jnp.float32) * 0.1
    bias = jax.random.normal(kb, (Cout,), dtype=jnp.float32) * 0.1

    img, content_list, style_list = parallel_forward(
        (x, [], []), weight=weight, bias=bias, target_shape=target_shape)
    img = jax.block_until_ready(img)

    assert img.shape == (N, Cout, Hout, Wout), img.shape
    assert len(content_list) == 1 and len(style_list) == 1
    assert bool(jnp.all(jnp.isfinite(img)))

    # pure-JAX reference with the same bf16 operand rounding (f32 accumulation)
    xb = x.astype(jnp.bfloat16).astype(jnp.float32)
    wb = weight.astype(jnp.bfloat16).astype(jnp.float32)
    xpr = jnp.pad(xb, ((0, 0), (0, 0), (1, 1), (1, 1)))
    cols = [xpr[:, :, kh:kh + H, kw:kw + W] for kh in range(3) for kw in range(3)]
    pt = jnp.stack(cols, axis=1).reshape(N, 9 * Cin, H * W)
    wm = jnp.transpose(wb, (0, 2, 3, 1)).reshape(Cout, 9 * Cin)
    y = (jnp.einsum("ok,nks->nos", wm, pt) + bias[None, :, None]).reshape(N, Cout, H, W)
    y = y.astype(jnp.bfloat16).astype(jnp.float32)
    ah = jnp.asarray(_bilinear_matrix(H, Hout))
    aw = jnp.asarray(_bilinear_matrix(W, Wout))
    t = jnp.einsum("nchw,qw->nchq", y, aw)
    t = t.astype(jnp.bfloat16).astype(jnp.float32)
    ref = jnp.einsum("ph,nchq->ncpq", ah, t)
    assert bool(jnp.allclose(img, ref, rtol=1e-2, atol=1e-2))

    print("KERNEL_OK")
</pallas_src>

<mosaic_0001>
module attributes {stable_mosaic.version = 11 : i64} {
  func.func @_fused_conv_resize_kernel(%arg0: memref<2x4x342xbf16, #tpu.memory_space<vmem>>, %arg1: memref<9x8x4xbf16, #tpu.memory_space<vmem>>, %arg2: memref<8x1xf32, #tpu.memory_space<vmem>>, %arg3: memref<8x16x32xbf16, #tpu.memory_space<vmem>>, %arg4: memref<8x32x16xbf16, #tpu.memory_space<vmem>>, %arg5: memref<2x8x32x32xf32, #tpu.memory_space<vmem>>) attributes {dimension_semantics = [], scalar_prefetch = 0 : i64, scratch_operands = 0 : i64, tpu.core_type = #tpu.core_type<tc>} {
    %c0 = arith.constant 0 : index
    %c0_0 = arith.constant 0 : index
    %c0_1 = arith.constant 0 : index
    %0 = vector.load %arg3[%c0, %c0_0, %c0_1] : memref<8x16x32xbf16, #tpu.memory_space<vmem>>, vector<8x16x32xbf16>
    %c0_2 = arith.constant 0 : index
    %c0_3 = arith.constant 0 : index
    %c0_4 = arith.constant 0 : index
    %1 = vector.load %arg4[%c0_2, %c0_3, %c0_4] : memref<8x32x16xbf16, #tpu.memory_space<vmem>>, vector<8x32x16xbf16>
    %c0_5 = arith.constant 0 : index
    %c0_6 = arith.constant 0 : index
    %2 = vector.load %arg2[%c0_5, %c0_6] : memref<8x1xf32, #tpu.memory_space<vmem>>, vector<8x1xf32>
    %c0_7 = arith.constant 0 : index
    %c0_8 = arith.constant 0 : index
    %c0_9 = arith.constant 0 : index
    %3 = vector.load %arg0[%c0_7, %c0_8, %c0_9] : memref<2x4x342xbf16, #tpu.memory_space<vmem>>, vector<1x4x342xbf16>
    %4 = vector.shape_cast %3 : vector<1x4x342xbf16> to vector<4x342xbf16>
    %5 = vector.extract_strided_slice %4 {offsets = [0, 0], sizes = [4, 288], strides = [1, 1]} : vector<4x342xbf16> to vector<4x288xbf16>
    %c0_10 = arith.constant 0 : index
    %c0_11 = arith.constant 0 : index
    %c0_12 = arith.constant 0 : index
    %6 = vector.load %arg1[%c0_10, %c0_11, %c0_12] : memref<9x8x4xbf16, #tpu.memory_space<vmem>>, vector<1x8x4xbf16>
    %7 = vector.shape_cast %6 : vector<1x8x4xbf16> to vector<8x4xbf16>
    %cst = arith.constant dense<0.000000e+00> : vector<8x288xf32>
    %8 = tpu.matmul %7, %5, %cst {dimension_numbers = #tpu.dot_dimension_numbers<[1], [0], [0], [1], [0, 0, 1, 1], [], []>} : vector<8x4xbf16>, vector<4x288xbf16>, vector<8x288xf32> -> vector<8x288xf32>
    %9 = vector.extract_strided_slice %4 {offsets = [0, 1], sizes = [4, 288], strides = [1, 1]} : vector<4x342xbf16> to vector<4x288xbf16>
    %c1 = arith.constant 1 : index
    %c0_13 = arith.constant 0 : index
    %c0_14 = arith.constant 0 : index
    %10 = vector.load %arg1[%c1, %c0_13, %c0_14] : memref<9x8x4xbf16, #tpu.memory_space<vmem>>, vector<1x8x4xbf16>
    %11 = vector.shape_cast %10 : vector<1x8x4xbf16> to vector<8x4xbf16>
    %cst_15 = arith.constant dense<0.000000e+00> : vector<8x288xf32>
    %12 = tpu.matmul %11, %9, %cst_15 {dimension_numbers = #tpu.dot_dimension_numbers<[1], [0], [0], [1], [0, 0, 1, 1], [], []>} : vector<8x4xbf16>, vector<4x288xbf16>, vector<8x288xf32> -> vector<8x288xf32>
    %13 = arith.addf %8, %12 : vector<8x288xf32>
    %14 = vector.extract_strided_slice %4 {offsets = [0, 2], sizes = [4, 288], strides = [1, 1]} : vector<4x342xbf16> to vector<4x288xbf16>
    %c2 = arith.constant 2 : index
    %c0_16 = arith.constant 0 : index
    %c0_17 = arith.constant 0 : index
    %15 = vector.load %arg1[%c2, %c0_16, %c0_17] : memref<9x8x4xbf16, #tpu.memory_space<vmem>>, vector<1x8x4xbf16>
    %16 = vector.shape_cast %15 : vector<1x8x4xbf16> to vector<8x4xbf16>
    %cst_18 = arith.constant dense<0.000000e+00> : vector<8x288xf32>
    %17 = tpu.matmul %16, %14, %cst_18 {dimension_numbers = #tpu.dot_dimension_numbers<[1], [0], [0], [1], [0, 0, 1, 1], [], []>} : vector<8x4xbf16>, vector<4x288xbf16>, vector<8x288xf32> -> vector<8x288xf32>
    %18 = arith.addf %13, %17 : vector<8x288xf32>
    %19 = vector.extract_strided_slice %4 {offsets = [0, 18], sizes = [4, 288], strides = [1, 1]} : vector<4x342xbf16> to vector<4x288xbf16>
    %c3 = arith.constant 3 : index
    %c0_19 = arith.constant 0 : index
    %c0_20 = arith.constant 0 : index
    %20 = vector.load %arg1[%c3, %c0_19, %c0_20] : memref<9x8x4xbf16, #tpu.memory_space<vmem>>, vector<1x8x4xbf16>
    %21 = vector.shape_cast %20 : vector<1x8x4xbf16> to vector<8x4xbf16>
    %cst_21 = arith.constant dense<0.000000e+00> : vector<8x288xf32>
    %22 = tpu.matmul %21, %19, %cst_21 {dimension_numbers = #tpu.dot_dimension_numbers<[1], [0], [0], [1], [0, 0, 1, 1], [], []>} : vector<8x4xbf16>, vector<4x288xbf16>, vector<8x288xf32> -> vector<8x288xf32>
    %23 = arith.addf %18, %22 : vector<8x288xf32>
    %24 = vector.extract_strided_slice %4 {offsets = [0, 19], sizes = [4, 288], strides = [1, 1]} : vector<4x342xbf16> to vector<4x288xbf16>
    %c4 = arith.constant 4 : index
    %c0_22 = arith.constant 0 : index
    %c0_23 = arith.constant 0 : index
    %25 = vector.load %arg1[%c4, %c0_22, %c0_23] : memref<9x8x4xbf16, #tpu.memory_space<vmem>>, vector<1x8x4xbf16>
    %26 = vector.shape_cast %25 : vector<1x8x4xbf16> to vector<8x4xbf16>
    %cst_24 = arith.constant dense<0.000000e+00> : vector<8x288xf32>
    %27 = tpu.matmul %26, %24, %cst_24 {dimension_numbers = #tpu.dot_dimension_numbers<[1], [0], [0], [1], [0, 0, 1, 1], [], []>} : vector<8x4xbf16>, vector<4x288xbf16>, vector<8x288xf32> -> vector<8x288xf32>
    %28 = arith.addf %23, %27 : vector<8x288xf32>
    %29 = vector.extract_strided_slice %4 {offsets = [0, 20], sizes = [4, 288], strides = [1, 1]} : vector<4x342xbf16> to vector<4x288xbf16>
    %c5 = arith.constant 5 : index
    %c0_25 = arith.constant 0 : index
    %c0_26 = arith.constant 0 : index
    %30 = vector.load %arg1[%c5, %c0_25, %c0_26] : memref<9x8x4xbf16, #tpu.memory_space<vmem>>, vector<1x8x4xbf16>
    %31 = vector.shape_cast %30 : vector<1x8x4xbf16> to vector<8x4xbf16>
    %cst_27 = arith.constant dense<0.000000e+00> : vector<8x288xf32>
    %32 = tpu.matmul %31, %29, %cst_27 {dimension_numbers = #tpu.dot_dimension_numbers<[1], [0], [0], [1], [0, 0, 1, 1], [], []>} : vector<8x4xbf16>, vector<4x288xbf16>, vector<8x288xf32> -> vector<8x288xf32>
    %33 = arith.addf %28, %32 : vector<8x288xf32>
    %34 = vector.extract_strided_slice %4 {offsets = [0, 36], sizes = [4, 288], strides = [1, 1]} : vector<4x342xbf16> to vector<4x288xbf16>
    %c6 = arith.constant 6 : index
    %c0_28 = arith.constant 0 : index
    %c0_29 = arith.constant 0 : index
    %35 = vector.load %arg1[%c6, %c0_28, %c0_29] : memref<9x8x4xbf16, #tpu.memory_space<vmem>>, vector<1x8x4xbf16>
    %36 = vector.shape_cast %35 : vector<1x8x4xbf16> to vector<8x4xbf16>
    %cst_30 = arith.constant dense<0.000000e+00> : vector<8x288xf32>
    %37 = tpu.matmul %36, %34, %cst_30 {dimension_numbers = #tpu.dot_dimension_numbers<[1], [0], [0], [1], [0, 0, 1, 1], [], []>} : vector<8x4xbf16>, vector<4x288xbf16>, vector<8x288xf32> -> vector<8x288xf32>
    %38 = arith.addf %33, %37 : vector<8x288xf32>
    %39 = vector.extract_strided_slice %4 {offsets = [0, 37], sizes = [4, 288], strides = [1, 1]} : vector<4x342xbf16> to vector<4x288xbf16>
    %c7 = arith.constant 7 : index
    %c0_31 = arith.constant 0 : index
    %c0_32 = arith.constant 0 : index
    %40 = vector.load %arg1[%c7, %c0_31, %c0_32] : memref<9x8x4xbf16, #tpu.memory_space<vmem>>, vector<1x8x4xbf16>
    %41 = vector.shape_cast %40 : vector<1x8x4xbf16> to vector<8x4xbf16>
    %cst_33 = arith.constant dense<0.000000e+00> : vector<8x288xf32>
    %42 = tpu.matmul %41, %39, %cst_33 {dimension_numbers = #tpu.dot_dimension_numbers<[1], [0], [0], [1], [0, 0, 1, 1], [], []>} : vector<8x4xbf16>, vector<4x288xbf16>, vector<8x288xf32> -> vector<8x288xf32>
    %43 = arith.addf %38, %42 : vector<8x288xf32>
    %44 = vector.extract_strided_slice %4 {offsets = [0, 38], sizes = [4, 288], strides = [1, 1]} : vector<4x342xbf16> to vector<4x288xbf16>
    %c8 = arith.constant 8 : index
    %c0_34 = arith.constant 0 : index
    %c0_35 = arith.constant 0 : index
    %45 = vector.load %arg1[%c8, %c0_34, %c0_35] : memref<9x8x4xbf16, #tpu.memory_space<vmem>>, vector<1x8x4xbf16>
    %46 = vector.shape_cast %45 : vector<1x8x4xbf16> to vector<8x4xbf16>
    %cst_36 = arith.constant dense<0.000000e+00> : vector<8x288xf32>
    %47 = tpu.matmul %46, %44, %cst_36 {dimension_numbers = #tpu.dot_dimension_numbers<[1], [0], [0], [1], [0, 0, 1, 1], [], []>} : vector<8x4xbf16>, vector<4x288xbf16>, vector<8x288xf32> -> vector<8x288xf32>
    %48 = arith.addf %43, %47 : vector<8x288xf32>
    %49 = vector.broadcast %2 : vector<8x1xf32> to vector<8x288xf32>
    %50 = arith.addf %48, %49 : vector<8x288xf32>
    %51 = vector.shape_cast %50 : vector<8x288xf32> to vector<8x16x18xf32>
    %52 = vector.extract_strided_slice %51 {offsets = [0, 0, 0], sizes = [8, 16, 16], strides = [1, 1, 1]} : vector<8x16x18xf32> to vector<8x16x16xf32>
    %53 = arith.truncf %52 : vector<8x16x16xf32> to vector<8x16x16xbf16>
    "tpu.trace_start"() <{level = 10 : i32, message = "chw,cwq->chq"}> : () -> ()
    %cst_37 = arith.constant dense<0.000000e+00> : vector<8x16x32xf32>
    %54 = tpu.matmul %53, %0, %cst_37 {dimension_numbers = #tpu.dot_dimension_numbers<[2], [1], [1], [2], [0, 0, 0, 1, 1, 2], [0], [0]>} : vector<8x16x16xbf16>, vector<8x16x32xbf16>, vector<8x16x32xf32> -> vector<8x16x32xf32>
    "tpu.trace_stop"() : () -> ()
    %55 = arith.truncf %54 : vector<8x16x32xf32> to vector<8x16x32xbf16>
    "tpu.trace_start"() <{level = 10 : i32, message = "cph,chq->cpq"}> : () -> ()
    %cst_38 = arith.constant dense<0.000000e+00> : vector<8x32x32xf32>
    %56 = tpu.matmul %1, %55, %cst_38 {dimension_numbers = #tpu.dot_dimension_numbers<[2], [1], [1], [2], [0, 0, 0, 1, 1, 2], [0], [0]>} : vector<8x32x16xbf16>, vector<8x16x32xbf16>, vector<8x32x32xf32> -> vector<8x32x32xf32>
    "tpu.trace_stop"() : () -> ()
    %c0_39 = arith.constant 0 : index
    %c0_40 = arith.constant 0 : index
    %c0_41 = arith.constant 0 : index
    %c0_42 = arith.constant 0 : index
    %57 = vector.load %arg5[%c0_39, %c0_40, %c0_41, %c0_42] : memref<2x8x32x32xf32, #tpu.memory_space<vmem>>, vector<1x8x32x32xf32>
    %58 = vector.shape_cast %57 : vector<1x8x32x32xf32> to vector<8x32x32xf32>
    %59 = vector.shape_cast %56 : vector<8x32x32xf32> to vector<1x8x32x32xf32>
    tpu.vector_store %arg5[%c0_39, %c0_40, %c0_41, %c0_42], %59 {strides = array<i32>} : memref<2x8x32x32xf32, #tpu.memory_space<vmem>>, vector<1x8x32x32xf32>,
    %c1_43 = arith.constant 1 : index
    %c0_44 = arith.constant 0 : index
    %c0_45 = arith.constant 0 : index
    %60 = vector.load %arg0[%c1_43, %c0_44, %c0_45] : memref<2x4x342xbf16, #tpu.memory_space<vmem>>, vector<1x4x342xbf16>
    %61 = vector.shape_cast %60 : vector<1x4x342xbf16> to vector<4x342xbf16>
    %62 = vector.extract_strided_slice %61 {offsets = [0, 0], sizes = [4, 288], strides = [1, 1]} : vector<4x342xbf16> to vector<4x288xbf16>
    %c0_46 = arith.constant 0 : index
    %c0_47 = arith.constant 0 : index
    %c0_48 = arith.constant 0 : index
    %63 = vector.load %arg1[%c0_46, %c0_47, %c0_48] : memref<9x8x4xbf16, #tpu.memory_space<vmem>>, vector<1x8x4xbf16>
    %64 = vector.shape_cast %63 : vector<1x8x4xbf16> to vector<8x4xbf16>
    %cst_49 = arith.constant dense<0.000000e+00> : vector<8x288xf32>
    %65 = tpu.matmul %64, %62, %cst_49 {dimension_numbers = #tpu.dot_dimension_numbers<[1], [0], [0], [1], [0, 0, 1, 1], [], []>} : vector<8x4xbf16>, vector<4x288xbf16>, vector<8x288xf32> -> vector<8x288xf32>
    %66 = vector.extract_strided_slice %61 {offsets = [0, 1], sizes = [4, 288], strides = [1, 1]} : vector<4x342xbf16> to vector<4x288xbf16>
    %c1_50 = arith.constant 1 : index
    %c0_51 = arith.constant 0 : index
    %c0_52 = arith.constant 0 : index
    %67 = vector.load %arg1[%c1_50, %c0_51, %c0_52] : memref<9x8x4xbf16, #tpu.memory_space<vmem>>, vector<1x8x4xbf16>
    %68 = vector.shape_cast %67 : vector<1x8x4xbf16> to vector<8x4xbf16>
    %cst_53 = arith.constant dense<0.000000e+00> : vector<8x288xf32>
    %69 = tpu.matmul %68, %66, %cst_53 {dimension_numbers = #tpu.dot_dimension_numbers<[1], [0], [0], [1], [0, 0, 1, 1], [], []>} : vector<8x4xbf16>, vector<4x288xbf16>, vector<8x288xf32> -> vector<8x288xf32>
    %70 = arith.addf %65, %69 : vector<8x288xf32>
    %71 = vector.extract_strided_slice %61 {offsets = [0, 2], sizes = [4, 288], strides = [1, 1]} : vector<4x342xbf16> to vector<4x288xbf16>
    %c2_54 = arith.constant 2 : index
    %c0_55 = arith.constant 0 : index
    %c0_56 = arith.constant 0 : index
    %72 = vector.load %arg1[%c2_54, %c0_55, %c0_56] : memref<9x8x4xbf16, #tpu.memory_space<vmem>>, vector<1x8x4xbf16>
    %73 = vector.shape_cast %72 : vector<1x8x4xbf16> to vector<8x4xbf16>
    %cst_57 = arith.constant dense<0.000000e+00> : vector<8x288xf32>
    %74 = tpu.matmul %73, %71, %cst_57 {dimension_numbers = #tpu.dot_dimension_numbers<[1], [0], [0], [1], [0, 0, 1, 1], [], []>} : vector<8x4xbf16>, vector<4x288xbf16>, vector<8x288xf32> -> vector<8x288xf32>
    %75 = arith.addf %70, %74 : vector<8x288xf32>
    %76 = vector.extract_strided_slice %61 {offsets = [0, 18], sizes = [4, 288], strides = [1, 1]} : vector<4x342xbf16> to vector<4x288xbf16>
    %c3_58 = arith.constant 3 : index
    %c0_59 = arith.constant 0 : index
    %c0_60 = arith.constant 0 : index
    %77 = vector.load %arg1[%c3_58, %c0_59, %c0_60] : memref<9x8x4xbf16, #tpu.memory_space<vmem>>, vector<1x8x4xbf16>
    %78 = vector.shape_cast %77 : vector<1x8x4xbf16> to vector<8x4xbf16>
    %cst_61 = arith.constant dense<0.000000e+00> : vector<8x288xf32>
    %79 = tpu.matmul %78, %76, %cst_61 {dimension_numbers = #tpu.dot_dimension_numbers<[1], [0], [0], [1], [0, 0, 1, 1], [], []>} : vector<8x4xbf16>, vector<4x288xbf16>, vector<8x288xf32> -> vector<8x288xf32>
    %80 = arith.addf %75, %79 : vector<8x288xf32>
    %81 = vector.extract_strided_slice %61 {offsets = [0, 19], sizes = [4, 288], strides = [1, 1]} : vector<4x342xbf16> to vector<4x288xbf16>
    %c4_62 = arith.constant 4 : index
    %c0_63 = arith.constant 0 : index
    %c0_64 = arith.constant 0 : index
    %82 = vector.load %arg1[%c4_62, %c0_63, %c0_64] : memref<9x8x4xbf16, #tpu.memory_space<vmem>>, vector<1x8x4xbf16>
    %83 = vector.shape_cast %82 : vector<1x8x4xbf16> to vector<8x4xbf16>
    %cst_65 = arith.constant dense<0.000000e+00> : vector<8x288xf32>
    %84 = tpu.matmul %83, %81, %cst_65 {dimension_numbers = #tpu.dot_dimension_numbers<[1], [0], [0], [1], [0, 0, 1, 1], [], []>} : vector<8x4xbf16>, vector<4x288xbf16>, vector<8x288xf32> -> vector<8x288xf32>
    %85 = arith.addf %80, %84 : vector<8x288xf32>
    %86 = vector.extract_strided_slice %61 {offsets = [0, 20], sizes = [4, 288], strides = [1, 1]} : vector<4x342xbf16> to vector<4x288xbf16>
    %c5_66 = arith.constant 5 : index
    %c0_67 = arith.constant 0 : index
    %c0_68 = arith.constant 0 : index
    %87 = vector.load %arg1[%c5_66, %c0_67, %c0_68] : memref<9x8x4xbf16, #tpu.memory_space<vmem>>, vector<1x8x4xbf16>
    %88 = vector.shape_cast %87 : vector<1x8x4xbf16> to vector<8x4xbf16>
    %cst_69 = arith.constant dense<0.000000e+00> : vector<8x288xf32>
    %89 = tpu.matmul %88, %86, %cst_69 {dimension_numbers = #tpu.dot_dimension_numbers<[1], [0], [0], [1], [0, 0, 1, 1], [], []>} : vector<8x4xbf16>, vector<4x288xbf16>, vector<8x288xf32> -> vector<8x288xf32>
    %90 = arith.addf %85, %89 : vector<8x288xf32>
    %91 = vector.extract_strided_slice %61 {offsets = [0, 36], sizes = [4, 288], strides = [1, 1]} : vector<4x342xbf16> to vector<4x288xbf16>
    %c6_70 = arith.constant 6 : index
    %c0_71 = arith.constant 0 : index
    %c0_72 = arith.constant 0 : index
    %92 = vector.load %arg1[%c6_70, %c0_71, %c0_72] : memref<9x8x4xbf16, #tpu.memory_space<vmem>>, vector<1x8x4xbf16>
    %93 = vector.shape_cast %92 : vector<1x8x4xbf16> to vector<8x4xbf16>
    %cst_73 = arith.constant dense<0.000000e+00> : vector<8x288xf32>
    %94 = tpu.matmul %93, %91, %cst_73 {dimension_numbers = #tpu.dot_dimension_numbers<[1], [0], [0], [1], [0, 0, 1, 1], [], []>} : vector<8x4xbf16>, vector<4x288xbf16>, vector<8x288xf32> -> vector<8x288xf32>
    %95 = arith.addf %90, %94 : vector<8x288xf32>
    %96 = vector.extract_strided_slice %61 {offsets = [0, 37], sizes = [4, 288], strides = [1, 1]} : vector<4x342xbf16> to vector<4x288xbf16>
    %c7_74 = arith.constant 7 : index
    %c0_75 = arith.constant 0 : index
    %c0_76 = arith.constant 0 : index
    %97 = vector.load %arg1[%c7_74, %c0_75, %c0_76] : memref<9x8x4xbf16, #tpu.memory_space<vmem>>, vector<1x8x4xbf16>
    %98 = vector.shape_cast %97 : vector<1x8x4xbf16> to vector<8x4xbf16>
    %cst_77 = arith.constant dense<0.000000e+00> : vector<8x288xf32>
    %99 = tpu.matmul %98, %96, %cst_77 {dimension_numbers = #tpu.dot_dimension_numbers<[1], [0], [0], [1], [0, 0, 1, 1], [], []>} : vector<8x4xbf16>, vector<4x288xbf16>, vector<8x288xf32> -> vector<8x288xf32>
    %100 = arith.addf %95, %99 : vector<8x288xf32>
    %101 = vector.extract_strided_slice %61 {offsets = [0, 38], sizes = [4, 288], strides = [1, 1]} : vector<4x342xbf16> to vector<4x288xbf16>
    %c8_78 = arith.constant 8 : index
    %c0_79 = arith.constant 0 : index
    %c0_80 = arith.constant 0 : index
    %102 = vector.load %arg1[%c8_78, %c0_79, %c0_80] : memref<9x8x4xbf16, #tpu.memory_space<vmem>>, vector<1x8x4xbf16>
    %103 = vector.shape_cast %102 : vector<1x8x4xbf16> to vector<8x4xbf16>
    %cst_81 = arith.constant dense<0.000000e+00> : vector<8x288xf32>
    %104 = tpu.matmul %103, %101, %cst_81 {dimension_numbers = #tpu.dot_dimension_numbers<[1], [0], [0], [1], [0, 0, 1, 1], [], []>} : vector<8x4xbf16>, vector<4x288xbf16>, vector<8x288xf32> -> vector<8x288xf32>
    %105 = arith.addf %100, %104 : vector<8x288xf32>
    %106 = vector.broadcast %2 : vector<8x1xf32> to vector<8x288xf32>
    %107 = arith.addf %105, %106 : vector<8x288xf32>
    %108 = vector.shape_cast %107 : vector<8x288xf32> to vector<8x16x18xf32>
    %109 = vector.extract_strided_slice %108 {offsets = [0, 0, 0], sizes = [8, 16, 16], strides = [1, 1, 1]} : vector<8x16x18xf32> to vector<8x16x16xf32>
    %110 = arith.truncf %109 : vector<8x16x16xf32> to vector<8x16x16xbf16>
    "tpu.trace_start"() <{level = 10 : i32, message = "chw,cwq->chq"}> : () -> ()
    %cst_82 = arith.constant dense<0.000000e+00> : vector<8x16x32xf32>
    %111 = tpu.matmul %110, %0, %cst_82 {dimension_numbers = #tpu.dot_dimension_numbers<[2], [1], [1], [2], [0, 0, 0, 1, 1, 2], [0], [0]>} : vector<8x16x16xbf16>, vector<8x16x32xbf16>, vector<8x16x32xf32> -> vector<8x16x32xf32>
    "tpu.trace_stop"() : () -> ()
    %112 = arith.truncf %111 : vector<8x16x32xf32> to vector<8x16x32xbf16>
    "tpu.trace_start"() <{level = 10 : i32, message = "cph,chq->cpq"}> : () -> ()
    %cst_83 = arith.constant dense<0.000000e+00> : vector<8x32x32xf32>
    %113 = tpu.matmul %1, %112, %cst_83 {dimension_numbers = #tpu.dot_dimension_numbers<[2], [1], [1], [2], [0, 0, 0, 1, 1, 2], [0], [0]>} : vector<8x32x16xbf16>, vector<8x16x32xbf16>, vector<8x32x32xf32> -> vector<8x32x32xf32>
    "tpu.trace_stop"() : () -> ()
    %c1_84 = arith.constant 1 : index
    %c0_85 = arith.constant 0 : index
    %c0_86 = arith.constant 0 : index
    %c0_87 = arith.constant 0 : index
    %114 = vector.load %arg5[%c1_84, %c0_85, %c0_86, %c0_87] : memref<2x8x32x32xf32, #tpu.memory_space<vmem>>, vector<1x8x32x32xf32>
    %115 = vector.shape_cast %114 : vector<1x8x32x32xf32> to vector<8x32x32xf32>
    %116 = vector.shape_cast %113 : vector<8x32x32xf32> to vector<1x8x32x32xf32>
    tpu.vector_store %arg5[%c1_84, %c0_85, %c0_86, %c0_87], %116 {strides = array<i32>} : memref<2x8x32x32xf32, #tpu.memory_space<vmem>>, vector<1x8x32x32xf32>,
    return
  }
}

</mosaic_0001>

<llo_original>
// kernel: conv3x3_bilinear.1
$region0: #{conv3x3_bilinear.1}
  #allocation0 [shape = 'u32[]', space=smem, size = 0x4, offset = 0x4, fixed_abs, tag = 'smem constant byte address 0x4 - core index']
  #allocation1 [shape = 'u32[144,128]{1,0:T(1,128)}', space=vmem, size = 0x12000, scoped, tag = 'internal scratch']
  %s0 = inlined_call_operand.vmem [shape: bf16[2,4,342], index: 0, kind: input, shape index: {}]
  %s1 = inlined_call_operand.vmem [shape: bf16[9,8,4], index: 1, kind: input, shape index: {}]
  %s2 = inlined_call_operand.vmem [shape: f32[8,1], index: 2, kind: input, shape index: {}]
  %s3 = inlined_call_operand.vmem [shape: bf16[8,16,32], index: 3, kind: input, shape index: {}]
  %s4 = inlined_call_operand.vmem [shape: bf16[8,32,16], index: 4, kind: input, shape index: {}]
  %s5 = inlined_call_operand.hbm [shape: f32[2,8,32,32], index: 5, kind: output, shape index: {}]
  %s6 = sld [smem:[#allocation0]]
  $region30: #{conv3x3_bilinear.1} parent=0
    _
  %s8 = ssub.s32 1, %s6
  %s9 = scalar_select 0, %s8, %s6
  $region1: #{conv3x3_bilinear.1} parent=0
    #allocation2 [shape = 'u8[262144]{0}', space=vmem, size = 0x40000, scoped, tag = 'output window, operand 0, single buffered']
    #allocation3 [shape = 's32[1]{0}', space=sflag, size = 0x4, scoped, tag = 'scoped memory for conv3x3_bilinear.1']
    %10 = vsyncpa [#allocation3], 0
    // Predicated region
    $region2: #{conv3x3_bilinear.1} parent=1 // pred_check
      _
    $region3: #{conv3x3_bilinear.1} parent=1 // pred_check_branch
      %12 = sbr.rel (0) target = $region5
    $region4: #{conv3x3_bilinear.1} parent=1 // pred_region
      _
    $region5: #{conv3x3_bilinear.1} parent=1 // pred_fallthru
      _
    // Predicated region
    $region6: #{conv3x3_bilinear.1} parent=1 // pred_check
      _
    $region7: #{conv3x3_bilinear.1} parent=1 // pred_check_branch
      %14 = sbr.rel (0) target = $region9
    $region8: #{conv3x3_bilinear.1} parent=1 // pred_region
      _
    $region9: #{conv3x3_bilinear.1} parent=1 // pred_fallthru
      _
    // Predicated region
    $region10: #{conv3x3_bilinear.1} parent=1 // pred_check
      _
    $region11: #{conv3x3_bilinear.1} parent=1 // pred_check_branch
      %16 = sbr.rel (0) target = $region13
    $region12: #{conv3x3_bilinear.1} parent=1 // pred_region
      _
    $region13: #{conv3x3_bilinear.1} parent=1 // pred_fallthru
      _
    // Predicated region
    $region14: #{conv3x3_bilinear.1} parent=1 // pred_check
      _
    $region15: #{conv3x3_bilinear.1} parent=1 // pred_check_branch
      %18 = sbr.rel (0) target = $region17
    $region16: #{conv3x3_bilinear.1} parent=1 // pred_region
      _
    $region17: #{conv3x3_bilinear.1} parent=1 // pred_fallthru
      _
    // Predicated region
    $region18: #{conv3x3_bilinear.1} parent=1 // pred_check
      _
    $region19: #{conv3x3_bilinear.1} parent=1 // pred_check_branch
      %20 = sbr.rel (0) target = $region21
    $region20: #{conv3x3_bilinear.1} parent=1 // pred_region
      _
    $region21: #{conv3x3_bilinear.1} parent=1 // pred_fallthru
      _
    %v22 = vld [vmem:[%s3] sm:$0xf]
    %v23 = vld [vmem:[%s3 + $0x4] sm:$0xf]
    %v24 = vld [vmem:[%s3 + $0x8] sm:$0xf]
    %v25 = vld [vmem:[%s3 + $0xc] sm:$0xf]
    %v26 = vld [vmem:[%s3 + $0x10] sm:$0xf]
    %v27 = vld [vmem:[%s3 + $0x14] sm:$0xf]
    %v28 = vld [vmem:[%s3 + $0x18] sm:$0xf]
    %v29 = vld [vmem:[%s3 + $0x1c] sm:$0xf]
    %v30 = vld [vmem:[%s3 + $0x20] sm:$0xf]
    %v31 = vld [vmem:[%s3 + $0x24] sm:$0xf]
    %v32 = vld [vmem:[%s3 + $0x28] sm:$0xf]
    %v33 = vld [vmem:[%s3 + $0x2c] sm:$0xf]
    %v34 = vld [vmem:[%s3 + $0x30] sm:$0xf]
    %v35 = vld [vmem:[%s3 + $0x34] sm:$0xf]
    %v36 = vld [vmem:[%s3 + $0x38] sm:$0xf]
    %v37 = vld [vmem:[%s3 + $0x3c] sm:$0xf]
    %v38 = vld [vmem:[%s4] sm:$0xf]
    %v39 = vld [vmem:[%s4 + $0x4] sm:$0xf]
    %v40 = vld [vmem:[%s4 + $0x8] sm:$0xf]
    %v41 = vld [vmem:[%s4 + $0xc] sm:$0xf]
    %v42 = vld [vmem:[%s4 + $0x10] sm:$0xf]
    %v43 = vld [vmem:[%s4 + $0x14] sm:$0xf]
    %v44 = vld [vmem:[%s4 + $0x18] sm:$0xf]
    %v45 = vld [vmem:[%s4 + $0x1c] sm:$0xf]
    %v46 = vld [vmem:[%s4 + $0x20] sm:$0xf]
    %v47 = vld [vmem:[%s4 + $0x24] sm:$0xf]
    %v48 = vld [vmem:[%s4 + $0x28] sm:$0xf]
    %v49 = vld [vmem:[%s4 + $0x2c] sm:$0xf]
    %v50 = vld [vmem:[%s4 + $0x30] sm:$0xf]
    %v51 = vld [vmem:[%s4 + $0x34] sm:$0xf]
    %v52 = vld [vmem:[%s4 + $0x38] sm:$0xf]
    %v53 = vld [vmem:[%s4 + $0x3c] sm:$0xf]
    %v54 = vld [vmem:[%s4 + $0x40] sm:$0xf]
    %v55 = vld [vmem:[%s4 + $0x44] sm:$0xf]
    %v56 = vld [vmem:[%s4 + $0x48] sm:$0xf]
    %v57 = vld [vmem:[%s4 + $0x4c] sm:$0xf]
    %v58 = vld [vmem:[%s4 + $0x50] sm:$0xf]
    %v59 = vld [vmem:[%s4 + $0x54] sm:$0xf]
    %v60 = vld [vmem:[%s4 + $0x58] sm:$0xf]
    %v61 = vld [vmem:[%s4 + $0x5c] sm:$0xf]
    %v62 = vld [vmem:[%s4 + $0x60] sm:$0xf]
    %v63 = vld [vmem:[%s4 + $0x64] sm:$0xf]
    %v64 = vld [vmem:[%s4 + $0x68] sm:$0xf]
    %v65 = vld [vmem:[%s4 + $0x6c] sm:$0xf]
    %v66 = vld [vmem:[%s4 + $0x70] sm:$0xf]
    %v67 = vld [vmem:[%s4 + $0x74] sm:$0xf]
    %v68 = vld [vmem:[%s4 + $0x78] sm:$0xf]
    %v69 = vld [vmem:[%s4 + $0x7c] sm:$0xf]
    %v70 = vld [vmem:[%s2] sm:$0xff]
    %v71 = vld [vmem:[%s0] sm:$0x3f]
    %v72 = vld [vmem:[%s1] sm:$0xf]
    %s73 = scalar_lea.vmem %s1, 4
    %v74 = vld [vmem:[%s73] sm:$0xf]
    %v76 = vcombine.high %v71, %v71
    %v78 = vunpack.c.l.s4 1983009808
    %v79 = vunpack.c.0.s8 %v78
    %v80 = vlaneseq
    %v81 = vshrl.u32 %v80, 7
    %v82 = vsub.s32 %v79, %v81
    %v83 = vrot.slane %v71, %v82
    %v85 = vunpack.c.l.s4 1983009808
    %v86 = vunpack.c.0.s8 %v85
    %v87 = vlaneseq
    %v88 = vshrl.u32 %v87, 7
    %v89 = vsub.s32 %v86, %v88
    %v90 = vrot.slane %v76, %v89
    %v91 = vcombine.high %v83, %v83
    %92 = vrot.lane.b32.xlu0 %v83, 127
    %v93 = vpop.permute.xlu0 %92
    %94 = vrot.lane.b32.xlu0 %v91, 127
    %v95 = vpop.permute.xlu0 %94
    %96 = vrot.lane.b32.xlu0 %v90, 127
    %v97 = vpop.permute.xlu0 %96
    %vm98 = vcmask 1039360
    %v99 = vsel %vm98, %v93, %v95
    %v100 = vsel %vm98, %v95, %v97
    %vm101 = vcmask 31744
    %v103 = vsel %vm101, %v74, 0
    %vm105 = vcmask 1041408
    %v107 = vsel %vm105, %v99, 0
    %v110 = vsel %vm105, %v100, 0
    %v113 = vsel %vm105, %v97, 0
    %115 = vmatprep.subr.bf16.mxu0 %v110
    %116 = vmatpush1.bf16.msra.mxu0 %v107
    %117 = vmatprep.subr.bf16.mxu0 0
    %118 = vmatpush1.bf16.msra.mxu0 0
    %119 = vmatprep.subr.bf16.mxu0 0
    %120 = vmatpush1.bf16.msra.mxu0 0
    %121 = vmatprep.subr.bf16.mxu0 0
    %122 = vmatpush1.bf16.msra.mxu0 0
    %123 = vmatprep.subr.bf16.mxu0 0
    %124 = vmatpush1.bf16.msra.mxu0 0
    %125 = vmatprep.subr.bf16.mxu0 0
    %126 = vmatpush1.bf16.msra.mxu0 0
    %127 = vmatprep.subr.bf16.mxu0 0
    %128 = vmatpush1.bf16.msra.mxu0 0
    %129 = vmatprep.subr.bf16.mxu0 0
    %130 = vmatpush1.bf16.msra.mxu0 0
    %131 = vmatprep.subr.bf16.mxu0 0
    %132 = vmatpush1.bf16.msra.mxu0 0
    %133 = vmatprep.subr.bf16.mxu0 0
    %134 = vmatpush1.bf16.msra.mxu0 0
    %135 = vmatprep.subr.bf16.mxu0 0
    %136 = vmatpush1.bf16.msra.mxu0 0
    %137 = vmatprep.subr.bf16.mxu0 0
    %138 = vmatpush1.bf16.msra.mxu0 0
    %139 = vmatprep.subr.bf16.mxu0 0
    %140 = vmatpush1.bf16.msra.mxu0 0
    %141 = vmatprep.subr.bf16.mxu0 0
    %142 = vmatpush1.bf16.msra.mxu0 0
    %143 = vmatprep.subr.bf16.mxu0 0
    %144 = vmatpush1.bf16.msra.mxu0 0
    %145 = vmatprep.subr.bf16.mxu0 0
    %146 = vmatpush1.bf16.msra.mxu0 0
    %147 = vmatprep.mubr.bf16.mxu0 0
    %148 = vmatmul.mubr.bf16.gmra.mrb[0].mxu0 %v103
    %v149 = vpop.f32.mrb[0].mxu0
    %v150 = vadd.f32 0.0, %v149
    %v151 = vpop.f32.mrb[0].mxu0
    %v152 = vadd.f32 0.0, %v151
    %v153 = vpop.f32.mrb[0].mxu0
    %v154 = vpop.f32.mrb[0].mxu0
    %155 = vdwg.mxu0
    %156 = vmatprep.subr.bf16.mxu0 0
    %157 = vmatpush1.bf16.msra.mxu0 %v113
    %158 = vmatprep.subr.bf16.mxu0 0
    %159 = vmatpush1.bf16.msra.mxu0 0
    %160 = vmatprep.subr.bf16.mxu0 0
    %161 = vmatpush1.bf16.msra.mxu0 0
    %162 = vmatprep.subr.bf16.mxu0 0
    %163 = vmatpush1.bf16.msra.mxu0 0
    %164 = vmatprep.subr.bf16.mxu0 0
    %165 = vmatpush1.bf16.msra.mxu0 0
    %166 = vmatprep.subr.bf16.mxu0 0
    %167 = vmatpush1.bf16.msra.mxu0 0
    %168 = vmatprep.subr.bf16.mxu0 0
    %169 = vmatpush1.bf16.msra.mxu0 0
    %170 = vmatprep.subr.bf16.mxu0 0
    %171 = vmatpush1.bf16.msra.mxu0 0
    %172 = vmatprep.subr.bf16.mxu0 0
    %173 = vmatpush1.bf16.msra.mxu0 0
    %174 = vmatprep.subr.bf16.mxu0 0
    %175 = vmatpush1.bf16.msra.mxu0 0
    %176 = vmatprep.subr.bf16.mxu0 0
    %177 = vmatpush1.bf16.msra.mxu0 0
    %178 = vmatprep.subr.bf16.mxu0 0
    %179 = vmatpush1.bf16.msra.mxu0 0
    %180 = vmatprep.subr.bf16.mxu0 0
    %181 = vmatpush1.bf16.msra.mxu0 0
    %182 = vmatprep.subr.bf16.mxu0 0
    %183 = vmatpush1.bf16.msra.mxu0 0
    %184 = vmatprep.subr.bf16.mxu0 0
    %185 = vmatpush1.bf16.msra.mxu0 0
    %186 = vmatprep.subr.bf16.mxu0 0
    %187 = vmatpush1.bf16.msra.mxu0 0
    %188 = vmatprep.mubr.bf16.mxu0 0
    %189 = vmatmul.mubr.bf16.gmra.mrb[0].mxu0 %v103
    %v190 = vpop.f32.mrb[0].mxu0
    %v191 = vadd.f32 0.0, %v190
    %v192 = vpop.f32.mrb[0].mxu0
    %v193 = vpop.f32.mrb[0].mxu0
    %v194 = vpop.f32.mrb[0].mxu0
    %195 = vdwg.mxu0
    %v197 = vsel %vm101, %v72, 0
    %v200 = vsel %vm105, %v83, 0
    %v203 = vsel %vm105, %v91, 0
    %v206 = vsel %vm105, %v90, 0
    %208 = vmatprep.subr.bf16.mxu0 %v203
    %209 = vmatpush1.bf16.msra.mxu0 %v200
    %210 = vmatprep.subr.bf16.mxu0 0
    %211 = vmatpush1.bf16.msra.mxu0 0
    %212 = vmatprep.subr.bf16.mxu0 0
    %213 = vmatpush1.bf16.msra.mxu0 0
    %214 = vmatprep.subr.bf16.mxu0 0
    %215 = vmatpush1.bf16.msra.mxu0 0
    %216 = vmatprep.subr.bf16.mxu0 0
    %217 = vmatpush1.bf16.msra.mxu0 0
    %218 = vmatprep.subr.bf16.mxu0 0
    %219 = vmatpush1.bf16.msra.mxu0 0
    %220 = vmatprep.subr.bf16.mxu0 0
    %221 = vmatpush1.bf16.msra.mxu0 0
    %222 = vmatprep.subr.bf16.mxu0 0
    %223 = vmatpush1.bf16.msra.mxu0 0
    %224 = vmatprep.subr.bf16.mxu0 0
    %225 = vmatpush1.bf16.msra.mxu0 0
    %226 = vmatprep.subr.bf16.mxu0 0
    %227 = vmatpush1.bf16.msra.mxu0 0
    %228 = vmatprep.subr.bf16.mxu0 0
    %229 = vmatpush1.bf16.msra.mxu0 0
    %230 = vmatprep.subr.bf16.mxu0 0
    %231 = vmatpush1.bf16.msra.mxu0 0
    %232 = vmatprep.subr.bf16.mxu0 0
    %233 = vmatpush1.bf16.msra.mxu0 0
    %234 = vmatprep.subr.bf16.mxu0 0
    %235 = vmatpush1.bf16.msra.mxu0 0
    %236 = vmatprep.subr.bf16.mxu0 0
    %237 = vmatpush1.bf16.msra.mxu0 0
    %238 = vmatprep.subr.bf16.mxu0 0
    %239 = vmatpush1.bf16.msra.mxu0 0
    %240 = vmatprep.mubr.bf16.mxu0 0
    %241 = vmatmul.mubr.bf16.gmra.mrb[0].mxu0 %v197
    %v242 = vpop.f32.mrb[0].mxu0
    %v243 = vadd.f32 %v150, %v242
    %v244 = vpop.f32.mrb[0].mxu0
    %v245 = vadd.f32 %v152, %v244
    %v246 = vpop.f32.mrb[0].mxu0
    %v247 = vpop.f32.mrb[0].mxu0
    %248 = vdwg.mxu0
    %249 = vmatprep.subr.bf16.mxu0 0
    %250 = vmatpush1.bf16.msra.mxu0 %v206
    %251 = vmatprep.subr.bf16.mxu0 0
    %252 = vmatpush1.bf16.msra.mxu0 0
    %253 = vmatprep.subr.bf16.mxu0 0
    %254 = vmatpush1.bf16.msra.mxu0 0
    %255 = vmatprep.subr.bf16.mxu0 0
    %256 = vmatpush1.bf16.msra.mxu0 0
    %257 = vmatprep.subr.bf16.mxu0 0
    %258 = vmatpush1.bf16.msra.mxu0 0
    %259 = vmatprep.subr.bf16.mxu0 0
    %260 = vmatpush1.bf16.msra.mxu0 0
    %261 = vmatprep.subr.bf16.mxu0 0
    %262 = vmatpush1.bf16.msra.mxu0 0
    %263 = vmatprep.subr.bf16.mxu0 0
    %264 = vmatpush1.bf16.msra.mxu0 0
    %265 = vmatprep.subr.bf16.mxu0 0
    %266 = vmatpush1.bf16.msra.mxu0 0
    %267 = vmatprep.subr.bf16.mxu0 0
    %268 = vmatpush1.bf16.msra.mxu0 0
    %269 = vmatprep.subr.bf16.mxu0 0
    %270 = vmatpush1.bf16.msra.mxu0 0
    %271 = vmatprep.subr.bf16.mxu0 0
    %272 = vmatpush1.bf16.msra.mxu0 0
    %273 = vmatprep.subr.bf16.mxu0 0
    %274 = vmatpush1.bf16.msra.mxu0 0
    %275 = vmatprep.subr.bf16.mxu0 0
    %276 = vmatpush1.bf16.msra.mxu0 0
    %277 = vmatprep.subr.bf16.mxu0 0
    %278 = vmatpush1.bf16.msra.mxu0 0
    %279 = vmatprep.subr.bf16.mxu0 0
    %280 = vmatpush1.bf16.msra.mxu0 0
    %281 = vmatprep.mubr.bf16.mxu0 0
    %282 = vmatmul.mubr.bf16.gmra.mrb[0].mxu0 %v197
    %v283 = vpop.f32.mrb[0].mxu0
    %v284 = vadd.f32 %v191, %v283
    %v285 = vpop.f32.mrb[0].mxu0
    %v286 = vpop.f32.mrb[0].mxu0
    %v287 = vpop.f32.mrb[0].mxu0
    %288 = vdwg.mxu0
    %s289 = scalar_lea.vmem %s1, 8
    %v290 = vld [vmem:[%s289] sm:$0xf]
    %291 = vrot.lane.b32.xlu0 %v83, 126
    %v292 = vpop.permute.xlu0 %291
    %293 = vrot.lane.b32.xlu0 %v91, 126
    %v294 = vpop.permute.xlu0 %293
    %295 = vrot.lane.b32.xlu0 %v90, 126
    %v296 = vpop.permute.xlu0 %295
    %vm297 = vcmask 1031168
    %v298 = vsel %vm297, %v292, %v294
    %v299 = vsel %vm297, %v294, %v296
    %v301 = vsel %vm101, %v290, 0
    %v304 = vsel %vm105, %v298, 0
    %v307 = vsel %vm105, %v299, 0
    %v310 = vsel %vm105, %v296, 0
    %312 = vmatprep.subr.bf16.mxu0 %v307
    %313 = vmatpush1.bf16.msra.mxu0 %v304
    %314 = vmatprep.subr.bf16.mxu0 0
    %315 = vmatpush1.bf16.msra.mxu0 0
    %316 = vmatprep.subr.bf16.mxu0 0
    %317 = vmatpush1.bf16.msra.mxu0 0
    %318 = vmatprep.subr.bf16.mxu0 0
    %319 = vmatpush1.bf16.msra.mxu0 0
    %320 = vmatprep.subr.bf16.mxu0 0
    %321 = vmatpush1.bf16.msra.mxu0 0
    %322 = vmatprep.subr.bf16.mxu0 0
    %323 = vmatpush1.bf16.msra.mxu0 0
    %324 = vmatprep.subr.bf16.mxu0 0
    %325 = vmatpush1.bf16.msra.mxu0 0
    %326 = vmatprep.subr.bf16.mxu0 0
    %327 = vmatpush1.bf16.msra.mxu0 0
    %328 = vmatprep.subr.bf16.mxu0 0
    %329 = vmatpush1.bf16.msra.mxu0 0
    %330 = vmatprep.subr.bf16.mxu0 0
    %331 = vmatpush1.bf16.msra.mxu0 0
    %332 = vmatprep.subr.bf16.mxu0 0
    %333 = vmatpush1.bf16.msra.mxu0 0
    %334 = vmatprep.subr.bf16.mxu0 0
    %335 = vmatpush1.bf16.msra.mxu0 0
    %336 = vmatprep.subr.bf16.mxu0 0
    %337 = vmatpush1.bf16.msra.mxu0 0
    %338 = vmatprep.subr.bf16.mxu0 0
    %339 = vmatpush1.bf16.msra.mxu0 0
    %340 = vmatprep.subr.bf16.mxu0 0
    %341 = vmatpush1.bf16.msra.mxu0 0
    %342 = vmatprep.subr.bf16.mxu0 0
    %343 = vmatpush1.bf16.msra.mxu0 0
    %344 = vmatprep.mubr.bf16.mxu0 0
    %345 = vmatmul.mubr.bf16.gmra.mrb[0].mxu0 %v301
    %v346 = vpop.f32.mrb[0].mxu0
    %v347 = vadd.f32 0.0, %v346
    %v348 = vpop.f32.mrb[0].mxu0
    %v349 = vadd.f32 0.0, %v348
    %v350 = vpop.f32.mrb[0].mxu0
    %v351 = vpop.f32.mrb[0].mxu0
    %352 = vdwg.mxu0
    %353 = vmatprep.subr.bf16.mxu0 0
    %354 = vmatpush1.bf16.msra.mxu0 %v310
    %355 = vmatprep.subr.bf16.mxu0 0
    %356 = vmatpush1.bf16.msra.mxu0 0
    %357 = vmatprep.subr.bf16.mxu0 0
    %358 = vmatpush1.bf16.msra.mxu0 0
    %359 = vmatprep.subr.bf16.mxu0 0
    %360 = vmatpush1.bf16.msra.mxu0 0
    %361 = vmatprep.subr.bf16.mxu0 0
    %362 = vmatpush1.bf16.msra.mxu0 0
    %363 = vmatprep.subr.bf16.mxu0 0
    %364 = vmatpush1.bf16.msra.mxu0 0
    %365 = vmatprep.subr.bf16.mxu0 0
    %366 = vmatpush1.bf16.msra.mxu0 0
    %367 = vmatprep.subr.bf16.mxu0 0
    %368 = vmatpush1.bf16.msra.mxu0 0
    %369 = vmatprep.subr.bf16.mxu0 0
    %370 = vmatpush1.bf16.msra.mxu0 0
    %371 = vmatprep.subr.bf16.mxu0 0
    %372 = vmatpush1.bf16.msra.mxu0 0
    %373 = vmatprep.subr.bf16.mxu0 0
    %374 = vmatpush1.bf16.msra.mxu0 0
    %375 = vmatprep.subr.bf16.mxu0 0
    %376 = vmatpush1.bf16.msra.mxu0 0
    %377 = vmatprep.subr.bf16.mxu0 0
    %378 = vmatpush1.bf16.msra.mxu0 0
    %379 = vmatprep.subr.bf16.mxu0 0
    %380 = vmatpush1.bf16.msra.mxu0 0
    %381 = vmatprep.subr.bf16.mxu0 0
    %382 = vmatpush1.bf16.msra.mxu0 0
    %383 = vmatprep.subr.bf16.mxu0 0
    %384 = vmatpush1.bf16.msra.mxu0 0
    %385 = vmatprep.mubr.bf16.mxu0 0
    %386 = vmatmul.mubr.bf16.gmra.mrb[0].mxu0 %v301
    %v387 = vpop.f32.mrb[0].mxu0
    %v388 = vadd.f32 0.0, %v387
    %v389 = vpop.f32.mrb[0].mxu0
    %v390 = vpop.f32.mrb[0].mxu0
    %v391 = vpop.f32.mrb[0].mxu0
    %392 = vdwg.mxu0
    %v393 = vadd.f32 %v243, %v347
    %v394 = vadd.f32 %v245, %v349
    %v395 = vadd.f32 %v284, %v388
    %s396 = scalar_lea.vmem %s1, 12
    %v397 = vld [vmem:[%s396] sm:$0xf]
    %398 = vrot.lane.b32.xlu0 %v83, 110
    %v399 = vpop.permute.xlu0 %398
    %400 = vrot.lane.b32.xlu0 %v91, 110
    %v401 = vpop.permute.xlu0 %400
    %402 = vrot.lane.b32.xlu0 %v90, 110
    %v403 = vpop.permute.xlu0 %402
    %vm404 = vcmask 900096
    %v405 = vsel %vm404, %v399, %v401
    %v406 = vsel %vm404, %v401, %v403
    %v408 = vsel %vm101, %v397, 0
    %v411 = vsel %vm105, %v405, 0
    %v414 = vsel %vm105, %v406, 0
    %v417 = vsel %vm105, %v403, 0
    %419 = vmatprep.subr.bf16.mxu0 %v414
    %420 = vmatpush1.bf16.msra.mxu0 %v411
    %421 = vmatprep.subr.bf16.mxu0 0
    %422 = vmatpush1.bf16.msra.mxu0 0
    %423 = vmatprep.subr.bf16.mxu0 0
    %424 = vmatpush1.bf16.msra.mxu0 0
    %425 = vmatprep.subr.bf16.mxu0 0
    %426 = vmatpush1.bf16.msra.mxu0 0
    %427 = vmatprep.subr.bf16.mxu0 0
    %428 = vmatpush1.bf16.msra.mxu0 0
    %429 = vmatprep.subr.bf16.mxu0 0
    %430 = vmatpush1.bf16.msra.mxu0 0
    %431 = vmatprep.subr.bf16.mxu0 0
    %432 = vmatpush1.bf16.msra.mxu0 0
    %433 = vmatprep.subr.bf16.mxu0 0
    %434 = vmatpush1.bf16.msra.mxu0 0
    %435 = vmatprep.subr.bf16.mxu0 0
    %436 = vmatpush1.bf16.msra.mxu0 0
    %437 = vmatprep.subr.bf16.mxu0 0
    %438 = vmatpush1.bf16.msra.mxu0 0
    %439 = vmatprep.subr.bf16.mxu0 0
    %440 = vmatpush1.bf16.msra.mxu0 0
    %441 = vmatprep.subr.bf16.mxu0 0
    %442 = vmatpush1.bf16.msra.mxu0 0
    %443 = vmatprep.subr.bf16.mxu0 0
    %444 = vmatpush1.bf16.msra.mxu0 0
    %445 = vmatprep.subr.bf16.mxu0 0
    %446 = vmatpush1.bf16.msra.mxu0 0
    %447 = vmatprep.subr.bf16.mxu0 0
    %448 = vmatpush1.bf16.msra.mxu0 0
    %449 = vmatprep.subr.bf16.mxu0 0
    %450 = vmatpush1.bf16.msra.mxu0 0
    %451 = vmatprep.mubr.bf16.mxu0 0
    %452 = vmatmul.mubr.bf16.gmra.mrb[0].mxu0 %v408
    %v453 = vpop.f32.mrb[0].mxu0
    %v454 = vadd.f32 0.0, %v453
    %v455 = vpop.f32.mrb[0].mxu0
    %v456 = vadd.f32 0.0, %v455
    %v457 = vpop.f32.mrb[0].mxu0
    %v458 = vpop.f32.mrb[0].mxu0
    %459 = vdwg.mxu0
    %460 = vmatprep.subr.bf16.mxu0 0
    %461 = vmatpush1.bf16.msra.mxu0 %v417
    %462 = vmatprep.subr.bf16.mxu0 0
    %463 = vmatpush1.bf16.msra.mxu0 0
    %464 = vmatprep.subr.bf16.mxu0 0
    %465 = vmatpush1.bf16.msra.mxu0 0
    %466 = vmatprep.subr.bf16.mxu0 0
    %467 = vmatpush1.bf16.msra.mxu0 0
    %468 = vmatprep.subr.bf16.mxu0 0
    %469 = vmatpush1.bf16.msra.mxu0 0
    %470 = vmatprep.subr.bf16.mxu0 0
    %471 = vmatpush1.bf16.msra.mxu0 0
    %472 = vmatprep.subr.bf16.mxu0 0
    %473 = vmatpush1.bf16.msra.mxu0 0
    %474 = vmatprep.subr.bf16.mxu0 0
    %475 = vmatpush1.bf16.msra.mxu0 0
    %476 = vmatprep.subr.bf16.mxu0 0
    %477 = vmatpush1.bf16.msra.mxu0 0
    %478 = vmatprep.subr.bf16.mxu0 0
    %479 = vmatpush1.bf16.msra.mxu0 0
    %480 = vmatprep.subr.bf16.mxu0 0
    %481 = vmatpush1.bf16.msra.mxu0 0
    %482 = vmatprep.subr.bf16.mxu0 0
    %483 = vmatpush1.bf16.msra.mxu0 0
    %484 = vmatprep.subr.bf16.mxu0 0
    %485 = vmatpush1.bf16.msra.mxu0 0
    %486 = vmatprep.subr.bf16.mxu0 0
    %487 = vmatpush1.bf16.msra.mxu0 0
    %488 = vmatprep.subr.bf16.mxu0 0
    %489 = vmatpush1.bf16.msra.mxu0 0
    %490 = vmatprep.subr.bf16.mxu0 0
    %491 = vmatpush1.bf16.msra.mxu0 0
    %492 = vmatprep.mubr.bf16.mxu0 0
    %493 = vmatmul.mubr.bf16.gmra.mrb[0].mxu0 %v408
    %v494 = vpop.f32.mrb[0].mxu0
    %v495 = vadd.f32 0.0, %v494
    %v496 = vpop.f32.mrb[0].mxu0
    %v497 = vpop.f32.mrb[0].mxu0
    %v498 = vpop.f32.mrb[0].mxu0
    %499 = vdwg.mxu0
    %v500 = vadd.f32 %v393, %v454
    %v501 = vadd.f32 %v394, %v456
    %v502 = vadd.f32 %v395, %v495
    %s503 = scalar_lea.vmem %s1, 16
    %v504 = vld [vmem:[%s503] sm:$0xf]
    %505 = vrot.lane.b32.xlu0 %v83, 109
    %v506 = vpop.permute.xlu0 %505
    %507 = vrot.lane.b32.xlu0 %v91, 109
    %v508 = vpop.permute.xlu0 %507
    %509 = vrot.lane.b32.xlu0 %v90, 109
    %v510 = vpop.permute.xlu0 %509
    %vm511 = vcmask 891904
    %v512 = vsel %vm511, %v506, %v508
    %v513 = vsel %vm511, %v508, %v510
    %v515 = vsel %vm101, %v504, 0
    %v518 = vsel %vm105, %v512, 0
    %v521 = vsel %vm105, %v513, 0
    %v524 = vsel %vm105, %v510, 0
    %526 = vmatprep.subr.bf16.mxu0 %v521
    %527 = vmatpush1.bf16.msra.mxu0 %v518
    %528 = vmatprep.subr.bf16.mxu0 0
    %529 = vmatpush1.bf16.msra.mxu0 0
    %530 = vmatprep.subr.bf16.mxu0 0
    %531 = vmatpush1.bf16.msra.mxu0 0
    %532 = vmatprep.subr.bf16.mxu0 0
    %533 = vmatpush1.bf16.msra.mxu0 0
    %534 = vmatprep.subr.bf16.mxu0 0
    %535 = vmatpush1.bf16.msra.mxu0 0
    %536 = vmatprep.subr.bf16.mxu0 0
    %537 = vmatpush1.bf16.msra.mxu0 0
    %538 = vmatprep.subr.bf16.mxu0 0
    %539 = vmatpush1.bf16.msra.mxu0 0
    %540 = vmatprep.subr.bf16.mxu0 0
    %541 = vmatpush1.bf16.msra.mxu0 0
    %542 = vmatprep.subr.bf16.mxu0 0
    %543 = vmatpush1.bf16.msra.mxu0 0
    %544 = vmatprep.subr.bf16.mxu0 0
    %545 = vmatpush1.bf16.msra.mxu0 0
    %546 = vmatprep.subr.bf16.mxu0 0
    %547 = vmatpush1.bf16.msra.mxu0 0
    %548 = vmatprep.subr.bf16.mxu0 0
    %549 = vmatpush1.bf16.msra.mxu0 0
    %550 = vmatprep.subr.bf16.mxu0 0
    %551 = vmatpush1.bf16.msra.mxu0 0
    %552 = vmatprep.subr.bf16.mxu0 0
    %553 = vmatpush1.bf16.msra.mxu0 0
    %554 = vmatprep.subr.bf16.mxu0 0
    %555 = vmatpush1.bf16.msra.mxu0 0
    %556 = vmatprep.subr.bf16.mxu0 0
    %557 = vmatpush1.bf16.msra.mxu0 0
    %558 = vmatprep.mubr.bf16.mxu0 0
    %559 = vmatmul.mubr.bf16.gmra.mrb[0].mxu0 %v515
    %v560 = vpop.f32.mrb[0].mxu0
    %v561 = vadd.f32 0.0, %v560
    %v562 = vpop.f32.mrb[0].mxu0
    %v563 = vadd.f32 0.0, %v562
    %v564 = vpop.f32.mrb[0].mxu0
    %v565 = vpop.f32.mrb[0].mxu0
    %566 = vdwg.mxu0
    %567 = vmatprep.subr.bf16.mxu0 0
    %568 = vmatpush1.bf16.msra.mxu0 %v524
    %569 = vmatprep.subr.bf16.mxu0 0
    %570 = vmatpush1.bf16.msra.mxu0 0
    %571 = vmatprep.subr.bf16.mxu0 0
    %572 = vmatpush1.bf16.msra.mxu0 0
    %573 = vmatprep.subr.bf16.mxu0 0
    %574 = vmatpush1.bf16.msra.mxu0 0
    %575 = vmatprep.subr.bf16.mxu0 0
    %576 = vmatpush1.bf16.msra.mxu0 0
    %577 = vmatprep.subr.bf16.mxu0 0
    %578 = vmatpush1.bf16.msra.mxu0 0
    %579 = vmatprep.subr.bf16.mxu0 0
    %580 = vmatpush1.bf16.msra.mxu0 0
    %581 = vmatprep.subr.bf16.mxu0 0
    %582 = vmatpush1.bf16.msra.mxu0 0
    %583 = vmatprep.subr.bf16.mxu0 0
    %584 = vmatpush1.bf16.msra.mxu0 0
    %585 = vmatprep.subr.bf16.mxu0 0
    %586 = vmatpush1.bf16.msra.mxu0 0
    %587 = vmatprep.subr.bf16.mxu0 0
    %588 = vmatpush1.bf16.msra.mxu0 0
    %589 = vmatprep.subr.bf16.mxu0 0
    %590 = vmatpush1.bf16.msra.mxu0 0
    %591 = vmatprep.subr.bf16.mxu0 0
    %592 = vmatpush1.bf16.msra.mxu0 0
    %593 = vmatprep.subr.bf16.mxu0 0
    %594 = vmatpush1.bf16.msra.mxu0 0
    %595 = vmatprep.subr.bf16.mxu0 0
    %596 = vmatpush1.bf16.msra.mxu0 0
    %597 = vmatprep.subr.bf16.mxu0 0
    %598 = vmatpush1.bf16.msra.mxu0 0
    %599 = vmatprep.mubr.bf16.mxu0 0
    %600 = vmatmul.mubr.bf16.gmra.mrb[0].mxu0 %v515
    %v601 = vpop.f32.mrb[0].mxu0
    %v602 = vadd.f32 0.0, %v601
    %v603 = vpop.f32.mrb[0].mxu0
    %v604 = vpop.f32.mrb[0].mxu0
    %v605 = vpop.f32.mrb[0].mxu0
    %606 = vdwg.mxu0
    %v607 = vadd.f32 %v500, %v561
    %v608 = vadd.f32 %v501, %v563
    %v609 = vadd.f32 %v502, %v602
    %s610 = scalar_lea.vmem %s1, 20
    %v611 = vld [vmem:[%s610] sm:$0xf]
    %612 = vrot.lane.b32.xlu0 %v83, 108
    %v613 = vpop.permute.xlu0 %612
    %614 = vrot.lane.b32.xlu0 %v91, 108
    %v615 = vpop.permute.xlu0 %614
    %616 = vrot.lane.b32.xlu0 %v90, 108
    %v617 = vpop.permute.xlu0 %616
    %vm618 = vcmask 883712
    %v619 = vsel %vm618, %v613, %v615
    %v620 = vsel %vm618, %v615, %v617
    %v622 = vsel %vm101, %v611, 0
    %v625 = vsel %vm105, %v619, 0
    %v628 = vsel %vm105, %v620, 0
    %v631 = vsel %vm105, %v617, 0
    %633 = vmatprep.subr.bf16.mxu0 %v628
    %634 = vmatpush1.bf16.msra.mxu0 %v625
    %635 = vmatprep.subr.bf16.mxu0 0
    %636 = vmatpush1.bf16.msra.mxu0 0
    %637 = vmatprep.subr.bf16.mxu0 0
    %638 = vmatpush1.bf16.msra.mxu0 0
    %639 = vmatprep.subr.bf16.mxu0 0
    %640 = vmatpush1.bf16.msra.mxu0 0
    %641 = vmatprep.subr.bf16.mxu0 0
    %642 = vmatpush1.bf16.msra.mxu0 0
    %643 = vmatprep.subr.bf16.mxu0 0
    %644 = vmatpush1.bf16.msra.mxu0 0
    %645 = vmatprep.subr.bf16.mxu0 0
    %646 = vmatpush1.bf16.msra.mxu0 0
    %647 = vmatprep.subr.bf16.mxu0 0
    %648 = vmatpush1.bf16.msra.mxu0 0
    %649 = vmatprep.subr.bf16.mxu0 0
    %650 = vmatpush1.bf16.msra.mxu0 0
    %651 = vmatprep.subr.bf16.mxu0 0
    %652 = vmatpush1.bf16.msra.mxu0 0
    %653 = vmatprep.subr.bf16.mxu0 0
    %654 = vmatpush1.bf16.msra.mxu0 0
    %655 = vmatprep.subr.bf16.mxu0 0
    %656 = vmatpush1.bf16.msra.mxu0 0
    %657 = vmatprep.subr.bf16.mxu0 0
    %658 = vmatpush1.bf16.msra.mxu0 0
    %659 = vmatprep.subr.bf16.mxu0 0
    %660 = vmatpush1.bf16.msra.mxu0 0
    %661 = vmatprep.subr.bf16.mxu0 0
    %662 = vmatpush1.bf16.msra.mxu0 0
    %663 = vmatprep.subr.bf16.mxu0 0
    %664 = vmatpush1.bf16.msra.mxu0 0
    %665 = vmatprep.mubr.bf16.mxu0 0
    %666 = vmatmul.mubr.bf16.gmra.mrb[0].mxu0 %v622
    %v667 = vpop.f32.mrb[0].mxu0
    %v668 = vadd.f32 0.0, %v667
    %v669 = vpop.f32.mrb[0].mxu0
    %v670 = vadd.f32 0.0, %v669
    %v671 = vpop.f32.mrb[0].mxu0
    %v672 = vpop.f32.mrb[0].mxu0
    %673 = vdwg.mxu0
    %674 = vmatprep.subr.bf16.mxu0 0
    %675 = vmatpush1.bf16.msra.mxu0 %v631
    %676 = vmatprep.subr.bf16.mxu0 0
    %677 = vmatpush1.bf16.msra.mxu0 0
    %678 = vmatprep.subr.bf16.mxu0 0
    %679 = vmatpush1.bf16.msra.mxu0 0
    %680 = vmatprep.subr.bf16.mxu0 0
    %681 = vmatpush1.bf16.msra.mxu0 0
    %682 = vmatprep.subr.bf16.mxu0 0
    %683 = vmatpush1.bf16.msra.mxu0 0
    %684 = vmatprep.subr.bf16.mxu0 0
    %685 = vmatpush1.bf16.msra.mxu0 0
    %686 = vmatprep.subr.bf16.mxu0 0
    %687 = vmatpush1.bf16.msra.mxu0 0
    %688 = vmatprep.subr.bf16.mxu0 0
    %689 = vmatpush1.bf16.msra.mxu0 0
    %690 = vmatprep.subr.bf16.mxu0 0
    %691 = vmatpush1.bf16.msra.mxu0 0
    %692 = vmatprep.subr.bf16.mxu0 0
    %693 = vmatpush1.bf16.msra.mxu0 0
    %694 = vmatprep.subr.bf16.mxu0 0
    %695 = vmatpush1.bf16.msra.mxu0 0
    %696 = vmatprep.subr.bf16.mxu0 0
    %697 = vmatpush1.bf16.msra.mxu0 0
    %698 = vmatprep.subr.bf16.mxu0 0
    %699 = vmatpush1.bf16.msra.mxu0 0
    %700 = vmatprep.subr.bf16.mxu0 0
    %701 = vmatpush1.bf16.msra.mxu0 0
    %702 = vmatprep.subr.bf16.mxu0 0
    %703 = vmatpush1.bf16.msra.mxu0 0
    %704 = vmatprep.subr.bf16.mxu0 0
    %705 = vmatpush1.bf16.msra.mxu0 0
    %706 = vmatprep.mubr.bf16.mxu0 0
    %707 = vmatmul.mubr.bf16.gmra.mrb[0].mxu0 %v622
    %v708 = vpop.f32.mrb[0].mxu0
    %v709 = vadd.f32 0.0, %v708
    %v710 = vpop.f32.mrb[0].mxu0
    %v711 = vpop.f32.mrb[0].mxu0
    %v712 = vpop.f32.mrb[0].mxu0
    %713 = vdwg.mxu0
    %v714 = vadd.f32 %v607, %v668
    %v715 = vadd.f32 %v608, %v670
    %v716 = vadd.f32 %v609, %v709
    %s717 = scalar_lea.vmem %s1, 24
    %v718 = vld [vmem:[%s717] sm:$0xf]
    %719 = vrot.lane.b32.xlu0 %v83, 92
    %v720 = vpop.permute.xlu0 %719
    %721 = vrot.lane.b32.xlu0 %v91, 92
    %v722 = vpop.permute.xlu0 %721
    %723 = vrot.lane.b32.xlu0 %v90, 92
    %v724 = vpop.permute.xlu0 %723
    %vm725 = vcmask 752640
    %v726 = vsel %vm725, %v720, %v722
    %v727 = vsel %vm725, %v722, %v724
    %v729 = vsel %vm101, %v718, 0
    %v732 = vsel %vm105, %v726, 0
    %v735 = vsel %vm105, %v727, 0
    %v738 = vsel %vm105, %v724, 0
    %740 = vmatprep.subr.bf16.mxu0 %v735
    %741 = vmatpush1.bf16.msra.mxu0 %v732
    %742 = vmatprep.subr.bf16.mxu0 0
    %743 = vmatpush1.bf16.msra.mxu0 0
    %744 = vmatprep.subr.bf16.mxu0 0
    %745 = vmatpush1.bf16.msra.mxu0 0
    %746 = vmatprep.subr.bf16.mxu0 0
    %747 = vmatpush1.bf16.msra.mxu0 0
    %748 = vmatprep.subr.bf16.mxu0 0
    %749 = vmatpush1.bf16.msra.mxu0 0
    %750 = vmatprep.subr.bf16.mxu0 0
    %751 = vmatpush1.bf16.msra.mxu0 0
    %752 = vmatprep.subr.bf16.mxu0 0
    %753 = vmatpush1.bf16.msra.mxu0 0
    %754 = vmatprep.subr.bf16.mxu0 0
    %755 = vmatpush1.bf16.msra.mxu0 0
    %756 = vmatprep.subr.bf16.mxu0 0
    %757 = vmatpush1.bf16.msra.mxu0 0
    %758 = vmatprep.subr.bf16.mxu0 0
    %759 = vmatpush1.bf16.msra.mxu0 0
    %760 = vmatprep.subr.bf16.mxu0 0
    %761 = vmatpush1.bf16.msra.mxu0 0
    %762 = vmatprep.subr.bf16.mxu0 0
    %763 = vmatpush1.bf16.msra.mxu0 0
    %764 = vmatprep.subr.bf16.mxu0 0
    %765 = vmatpush1.bf16.msra.mxu0 0
    %766 = vmatprep.subr.bf16.mxu0 0
    %767 = vmatpush1.bf16.msra.mxu0 0
    %768 = vmatprep.subr.bf16.mxu0 0
    %769 = vmatpush1.bf16.msra.mxu0 0
    %770 = vmatprep.subr.bf16.mxu0 0
    %771 = vmatpush1.bf16.msra.mxu0 0
    %772 = vmatprep.mubr.bf16.mxu0 0
    %773 = vmatmul.mubr.bf16.gmra.mrb[0].mxu0 %v729
    %v774 = vpop.f32.mrb[0].mxu0
    %v775 = vadd.f32 0.0, %v774
    %v776 = vpop.f32.mrb[0].mxu0
    %v777 = vadd.f32 0.0, %v776
    %v778 = vpop.f32.mrb[0].mxu0
    %v779 = vpop.f32.mrb[0].mxu0
    %780 = vdwg.mxu0
    %781 = vmatprep.subr.bf16.mxu0 0
    %782 = vmatpush1.bf16.msra.mxu0 %v738
    %783 = vmatprep.subr.bf16.mxu0 0
    %784 = vmatpush1.bf16.msra.mxu0 0
    %785 = vmatprep.subr.bf16.mxu0 0
    %786 = vmatpush1.bf16.msra.mxu0 0
    %787 = vmatprep.subr.bf16.mxu0 0
    %788 = vmatpush1.bf16.msra.mxu0 0
    %789 = vmatprep.subr.bf16.mxu0 0
    %790 = vmatpush1.bf16.msra.mxu0 0
    %791 = vmatprep.subr.bf16.mxu0 0
    %792 = vmatpush1.bf16.msra.mxu0 0
    %793 = vmatprep.subr.bf16.mxu0 0
    %794 = vmatpush1.bf16.msra.mxu0 0
    %795 = vmatprep.subr.bf16.mxu0 0
    %796 = vmatpush1.bf16.msra.mxu0 0
    %797 = vmatprep.subr.bf16.mxu0 0
    %798 = vmatpush1.bf16.msra.mxu0 0
    %799 = vmatprep.subr.bf16.mxu0 0
    %800 = vmatpush1.bf16.msra.mxu0 0
    %801 = vmatprep.subr.bf16.mxu0 0
    %802 = vmatpush1.bf16.msra.mxu0 0
    %803 = vmatprep.subr.bf16.mxu0 0
    %804 = vmatpush1.bf16.msra.mxu0 0
    %805 = vmatprep.subr.bf16.mxu0 0
    %806 = vmatpush1.bf16.msra.mxu0 0
    %807 = vmatprep.subr.bf16.mxu0 0
    %808 = vmatpush1.bf16.msra.mxu0 0
    %809 = vmatprep.subr.bf16.mxu0 0
    %810 = vmatpush1.bf16.msra.mxu0 0
    %811 = vmatprep.subr.bf16.mxu0 0
    %812 = vmatpush1.bf16.msra.mxu0 0
    %813 = vmatprep.mubr.bf16.mxu0 0
    %814 = vmatmul.mubr.bf16.gmra.mrb[0].mxu0 %v729
    %v815 = vpop.f32.mrb[0].mxu0
    %v816 = vadd.f32 0.0, %v815
    %v817 = vpop.f32.mrb[0].mxu0
    %v818 = vpop.f32.mrb[0].mxu0
    %v819 = vpop.f32.mrb[0].mxu0
    %820 = vdwg.mxu0
    %v821 = vadd.f32 %v714, %v775
    %v822 = vadd.f32 %v715, %v777
    %v823 = vadd.f32 %v716, %v816
    %s824 = scalar_lea.vmem %s1, 28
    %v825 = vld [vmem:[%s824] sm:$0xf]
    %826 = vrot.lane.b32.xlu0 %v83, 91
    %v827 = vpop.permute.xlu0 %826
    %828 = vrot.lane.b32.xlu0 %v91, 91
    %v829 = vpop.permute.xlu0 %828
    %830 = vrot.lane.b32.xlu0 %v90, 91
    %v831 = vpop.permute.xlu0 %830
    %vm832 = vcmask 744448
    %v833 = vsel %vm832, %v827, %v829
    %v834 = vsel %vm832, %v829, %v831
    %v836 = vsel %vm101, %v825, 0
    %v839 = vsel %vm105, %v833, 0
    %v842 = vsel %vm105, %v834, 0
    %v845 = vsel %vm105, %v831, 0
    %847 = vmatprep.subr.bf16.mxu0 %v842
    %848 = vmatpush1.bf16.msra.mxu0 %v839
    %849 = vmatprep.subr.bf16.mxu0 0
    %850 = vmatpush1.bf16.msra.mxu0 0
    %851 = vmatprep.subr.bf16.mxu0 0
    %852 = vmatpush1.bf16.msra.mxu0 0
    %853 = vmatprep.subr.bf16.mxu0 0
    %854 = vmatpush1.bf16.msra.mxu0 0
    %855 = vmatprep.subr.bf16.mxu0 0
    %856 = vmatpush1.bf16.msra.mxu0 0
    %857 = vmatprep.subr.bf16.mxu0 0
    %858 = vmatpush1.bf16.msra.mxu0 0
    %859 = vmatprep.subr.bf16.mxu0 0
    %860 = vmatpush1.bf16.msra.mxu0 0
    %861 = vmatprep.subr.bf16.mxu0 0
    %862 = vmatpush1.bf16.msra.mxu0 0
    %863 = vmatprep.subr.bf16.mxu0 0
    %864 = vmatpush1.bf16.msra.mxu0 0
    %865 = vmatprep.subr.bf16.mxu0 0
    %866 = vmatpush1.bf16.msra.mxu0 0
    %867 = vmatprep.subr.bf16.mxu0 0
    %868 = vmatpush1.bf16.msra.mxu0 0
    %869 = vmatprep.subr.bf16.mxu0 0
    %870 = vmatpush1.bf16.msra.mxu0 0
    %871 = vmatprep.subr.bf16.mxu0 0
    %872 = vmatpush1.bf16.msra.mxu0 0
    %873 = vmatprep.subr.bf16.mxu0 0
    %874 = vmatpush1.bf16.msra.mxu0 0
    %875 = vmatprep.subr.bf16.mxu0 0
    %876 = vmatpush1.bf16.msra.mxu0 0
    %877 = vmatprep.subr.bf16.mxu0 0
    %878 = vmatpush1.bf16.msra.mxu0 0
    %879 = vmatprep.mubr.bf16.mxu0 0
    %880 = vmatmul.mubr.bf16.gmra.mrb[0].mxu0 %v836
    %v881 = vpop.f32.mrb[0].mxu0
    %v882 = vadd.f32 0.0, %v881
    %v883 = vpop.f32.mrb[0].mxu0
    %v884 = vadd.f32 0.0, %v883
    %v885 = vpop.f32.mrb[0].mxu0
    %v886 = vpop.f32.mrb[0].mxu0
    %887 = vdwg.mxu0
    %888 = vmatprep.subr.bf16.mxu0 0
    %889 = vmatpush1.bf16.msra.mxu0 %v845
    %890 = vmatprep.subr.bf16.mxu0 0
    %891 = vmatpush1.bf16.msra.mxu0 0
    %892 = vmatprep.subr.bf16.mxu0 0
    %893 = vmatpush1.bf16.msra.mxu0 0
    %894 = vmatprep.subr.bf16.mxu0 0
    %895 = vmatpush1.bf16.msra.mxu0 0
    %896 = vmatprep.subr.bf16.mxu0 0
    %897 = vmatpush1.bf16.msra.mxu0 0
    %898 = vmatprep.subr.bf16.mxu0 0
    %899 = vmatpush1.bf16.msra.mxu0 0
    %900 = vmatprep.subr.bf16.mxu0 0
    %901 = vmatpush1.bf16.msra.mxu0 0
    %902 = vmatprep.subr.bf16.mxu0 0
    %903 = vmatpush1.bf16.msra.mxu0 0
    %904 = vmatprep.subr.bf16.mxu0 0
    %905 = vmatpush1.bf16.msra.mxu0 0
    %906 = vmatprep.subr.bf16.mxu0 0
    %907 = vmatpush1.bf16.msra.mxu0 0
    %908 = vmatprep.subr.bf16.mxu0 0
    %909 = vmatpush1.bf16.msra.mxu0 0
    %910 = vmatprep.subr.bf16.mxu0 0
    %911 = vmatpush1.bf16.msra.mxu0 0
    %912 = vmatprep.subr.bf16.mxu0 0
    %913 = vmatpush1.bf16.msra.mxu0 0
    %914 = vmatprep.subr.bf16.mxu0 0
    %915 = vmatpush1.bf16.msra.mxu0 0
    %916 = vmatprep.subr.bf16.mxu0 0
    %917 = vmatpush1.bf16.msra.mxu0 0
    %918 = vmatprep.subr.bf16.mxu0 0
    %919 = vmatpush1.bf16.msra.mxu0 0
    %920 = vmatprep.mubr.bf16.mxu0 0
    %921 = vmatmul.mubr.bf16.gmra.mrb[0].mxu0 %v836
    %v922 = vpop.f32.mrb[0].mxu0
    %v923 = vadd.f32 0.0, %v922
    %v924 = vpop.f32.mrb[0].mxu0
    %v925 = vpop.f32.mrb[0].mxu0
    %v926 = vpop.f32.mrb[0].mxu0
    %927 = vdwg.mxu0
    %v928 = vadd.f32 %v821, %v882
    %v929 = vadd.f32 %v822, %v884
    %v930 = vadd.f32 %v823, %v923
    %s931 = scalar_lea.vmem %s1, 32
    %v932 = vld [vmem:[%s931] sm:$0xf]
    %933 = vrot.lane.b32.xlu0 %v83, 90
    %v934 = vpop.permute.xlu0 %933
    %935 = vrot.lane.b32.xlu0 %v91, 90
    %v936 = vpop.permute.xlu0 %935
    %937 = vrot.lane.b32.xlu0 %v90, 90
    %v938 = vpop.permute.xlu0 %937
    %vm939 = vcmask 736256
    %v940 = vsel %vm939, %v934, %v936
    %v941 = vsel %vm939, %v936, %v938
    %v943 = vsel %vm101, %v932, 0
    %v946 = vsel %vm105, %v940, 0
    %v949 = vsel %vm105, %v941, 0
    %v952 = vsel %vm105, %v938, 0
    %954 = vmatprep.subr.bf16.mxu0 %v949
    %955 = vmatpush1.bf16.msra.mxu0 %v946
    %956 = vmatprep.subr.bf16.mxu0 0
    %957 = vmatpush1.bf16.msra.mxu0 0
    %958 = vmatprep.subr.bf16.mxu0 0
    %959 = vmatpush1.bf16.msra.mxu0 0
    %960 = vmatprep.subr.bf16.mxu0 0
    %961 = vmatpush1.bf16.msra.mxu0 0
    %962 = vmatprep.subr.bf16.mxu0 0
    %963 = vmatpush1.bf16.msra.mxu0 0
    %964 = vmatprep.subr.bf16.mxu0 0
    %965 = vmatpush1.bf16.msra.mxu0 0
    %966 = vmatprep.subr.bf16.mxu0 0
    %967 = vmatpush1.bf16.msra.mxu0 0
    %968 = vmatprep.subr.bf16.mxu0 0
    %969 = vmatpush1.bf16.msra.mxu0 0
    %970 = vmatprep.subr.bf16.mxu0 0
    %971 = vmatpush1.bf16.msra.mxu0 0
    %972 = vmatprep.subr.bf16.mxu0 0
    %973 = vmatpush1.bf16.msra.mxu0 0
    %974 = vmatprep.subr.bf16.mxu0 0
    %975 = vmatpush1.bf16.msra.mxu0 0
    %976 = vmatprep.subr.bf16.mxu0 0
    %977 = vmatpush1.bf16.msra.mxu0 0
    %978 = vmatprep.subr.bf16.mxu0 0
    %979 = vmatpush1.bf16.msra.mxu0 0
    %980 = vmatprep.subr.bf16.mxu0 0
    %981 = vmatpush1.bf16.msra.mxu0 0
    %982 = vmatprep.subr.bf16.mxu0 0
    %983 = vmatpush1.bf16.msra.mxu0 0
    %984 = vmatprep.subr.bf16.mxu0 0
    %985 = vmatpush1.bf16.msra.mxu0 0
    %986 = vmatprep.mubr.bf16.mxu0 0
    %987 = vmatmul.mubr.bf16.gmra.mrb[0].mxu0 %v943
    %v988 = vpop.f32.mrb[0].mxu0
    %v989 = vadd.f32 0.0, %v988
    %v990 = vpop.f32.mrb[0].mxu0
    %v991 = vadd.f32 0.0, %v990
    %v992 = vpop.f32.mrb[0].mxu0
    %v993 = vpop.f32.mrb[0].mxu0
    %994 = vdwg.mxu0
    %995 = vmatprep.subr.bf16.mxu0 0
    %996 = vmatpush1.bf16.msra.mxu0 %v952
    %997 = vmatprep.subr.bf16.mxu0 0
    %998 = vmatpush1.bf16.msra.mxu0 0
    %999 = vmatprep.subr.bf16.mxu0 0
    %1000 = vmatpush1.bf16.msra.mxu0 0
    %1001 = vmatprep.subr.bf16.mxu0 0
    %1002 = vmatpush1.bf16.msra.mxu0 0
    %1003 = vmatprep.subr.bf16.mxu0 0
    %1004 = vmatpush1.bf16.msra.mxu0 0
    %1005 = vmatprep.subr.bf16.mxu0 0
    %1006 = vmatpush1.bf16.msra.mxu0 0
    %1007 = vmatprep.subr.bf16.mxu0 0
    %1008 = vmatpush1.bf16.msra.mxu0 0
    %1009 = vmatprep.subr.bf16.mxu0 0
    %1010 = vmatpush1.bf16.msra.mxu0 0
    %1011 = vmatprep.subr.bf16.mxu0 0
    %1012 = vmatpush1.bf16.msra.mxu0 0
    %1013 = vmatprep.subr.bf16.mxu0 0
    %1014 = vmatpush1.bf16.msra.mxu0 0
    %1015 = vmatprep.subr.bf16.mxu0 0
    %1016 = vmatpush1.bf16.msra.mxu0 0
    %1017 = vmatprep.subr.bf16.mxu0 0
    %1018 = vmatpush1.bf16.msra.mxu0 0
    %1019 = vmatprep.subr.bf16.mxu0 0
    %1020 = vmatpush1.bf16.msra.mxu0 0
    %1021 = vmatprep.subr.bf16.mxu0 0
    %1022 = vmatpush1.bf16.msra.mxu0 0
    %1023 = vmatprep.subr.bf16.mxu0 0
    %1024 = vmatpush1.bf16.msra.mxu0 0
    %1025 = vmatprep.subr.bf16.mxu0 0
    %1026 = vmatpush1.bf16.msra.mxu0 0
    %1027 = vmatprep.mubr.bf16.mxu0 0
    %1028 = vmatmul.mubr.bf16.gmra.mrb[0].mxu0 %v943
    %v1029 = vpop.f32.mrb[0].mxu0
    %v1030 = vadd.f32 0.0, %v1029
    %v1031 = vpop.f32.mrb[0].mxu0
    %v1032 = vpop.f32.mrb[0].mxu0
    %v1033 = vpop.f32.mrb[0].mxu0
    %1034 = vdwg.mxu0
    %v1035 = vadd.f32 %v928, %v989
    %v1036 = vadd.f32 %v929, %v991
    %v1037 = vadd.f32 %v930, %v1030
    %1039 = vset.pattern.permute.xlu0 0
    %1040 = vperm.xlu0 %1039, %v70
    %v1041 = vpop.permute.xlu0 %1040
    %v1043 = vadd.f32 %v1035, %v1041
    %v1044 = vadd.f32 %v1036, %v1041
    %v1045 = vadd.f32 %v1037, %v1041
    %1047 = vrot.lane.b32.xlu0 %v1043, 110
    %v1048 = vpop.permute.xlu0 %1047
    %1050 = vrot.lane.b32.xlu0 %v1043, 92
    %v1051 = vpop.permute.xlu0 %1050
    %1053 = vrot.lane.b32.xlu0 %v1043, 74
    %v1054 = vpop.permute.xlu0 %1053
    %1056 = vrot.lane.b32.xlu0 %v1043, 56
    %v1057 = vpop.permute.xlu0 %1056
    %1059 = vrot.lane.b32.xlu0 %v1043, 38
    %v1060 = vpop.permute.xlu0 %1059
    %1062 = vrot.lane.b32.xlu0 %v1043, 20
    %v1063 = vpop.permute.xlu0 %1062
    %1066 = vrot.lane.b32.xlu0 %v1043, 2
    %v1067 = vpop.permute.xlu0 %1066
    %1068 = vrot.lane.b32.xlu0 %v1044, 2
    %v1069 = vpop.permute.xlu0 %1068
    %vm1070 = vcmask 15360
    %v1071 = vsel %vm1070, %v1067, %v1069
    %1073 = vrot.lane.b32.xlu0 %v1044, 112
    %v1074 = vpop.permute.xlu0 %1073
    %1076 = vrot.lane.b32.xlu0 %v1044, 94
    %v1077 = vpop.permute.xlu0 %1076
    %1079 = vrot.lane.b32.xlu0 %v1044, 76
    %v1080 = vpop.permute.xlu0 %1079
    %1082 = vrot.lane.b32.xlu0 %v1044, 58
    %v1083 = vpop.permute.xlu0 %1082
    %1085 = vrot.lane.b32.xlu0 %v1044, 40
    %v1086 = vpop.permute.xlu0 %1085
    %1088 = vrot.lane.b32.xlu0 %v1044, 22
    %v1089 = vpop.permute.xlu0 %1088
    %1092 = vrot.lane.b32.xlu0 %v1044, 4
    %v1093 = vpop.permute.xlu0 %1092
    %1094 = vrot.lane.b32.xlu0 %v1045, 4
    %v1095 = vpop.permute.xlu0 %1094
    %v1096 = vsel %vm101, %v1093, %v1095
    %1098 = vrot.lane.b32.xlu0 %v1045, 114
    %v1099 = vpop.permute.xlu0 %1098
    %v1101 = vcombine.low %v1043, %v1051
    %v1102 = vcombine.high %v1043, %v1051
    %v1104 = vunpack.c.l.s4 1983009808
    %v1105 = vunpack.c.0.s8 %v1104
    %v1106 = vlaneseq
    %v1107 = vshrl.u32 %v1106, 7
    %v1108 = vsub.s32 %v1105, %v1107
    %v1109 = vrot.slane %v1101, %v1108
    %v1111 = vunpack.c.l.s4 1983009808
    %v1112 = vunpack.c.0.s8 %v1111
    %v1113 = vlaneseq
    %v1114 = vshrl.u32 %v1113, 7
    %v1115 = vsub.s32 %v1112, %v1114
    %v1116 = vrot.slane %v1102, %v1115
    %v1117 = vcombine.low %v1048, %v1054
    %v1118 = vcombine.high %v1048, %v1054
    %v1120 = vunpack.c.l.s4 1983009808
    %v1121 = vunpack.c.0.s8 %v1120
    %v1122 = vlaneseq
    %v1123 = vshrl.u32 %v1122, 7
    %v1124 = vsub.s32 %v1121, %v1123
    %v1125 = vrot.slane %v1117, %v1124
    %v1127 = vunpack.c.l.s4 1983009808
    %v1128 = vunpack.c.0.s8 %v1127
    %v1129 = vlaneseq
    %v1130 = vshrl.u32 %v1129, 7
    %v1131 = vsub.s32 %v1128, %v1130
    %v1132 = vrot.slane %v1118, %v1131
    %v1133 = vcombine.low %v1057, %v1063
    %v1134 = vcombine.high %v1057, %v1063
    %v1136 = vunpack.c.l.s4 1983009808
    %v1137 = vunpack.c.0.s8 %v1136
    %v1138 = vlaneseq
    %v1139 = vshrl.u32 %v1138, 7
    %v1140 = vsub.s32 %v1137, %v1139
    %v1141 = vrot.slane %v1133, %v1140
    %v1143 = vunpack.c.l.s4 1983009808
    %v1144 = vunpack.c.0.s8 %v1143
    %v1145 = vlaneseq
    %v1146 = vshrl.u32 %v1145, 7
    %v1147 = vsub.s32 %v1144, %v1146
    %v1148 = vrot.slane %v1134, %v1147
    %v1149 = vcombine.low %v1060, %v1071
    %v1150 = vcombine.high %v1060, %v1071
    %v1152 = vunpack.c.l.s4 1983009808
    %v1153 = vunpack.c.0.s8 %v1152
    %v1154 = vlaneseq
    %v1155 = vshrl.u32 %v1154, 7
    %v1156 = vsub.s32 %v1153, %v1155
    %v1157 = vrot.slane %v1149, %v1156
    %v1159 = vunpack.c.l.s4 1983009808
    %v1160 = vunpack.c.0.s8 %v1159
    %v1161 = vlaneseq
    %v1162 = vshrl.u32 %v1161, 7
    %v1163 = vsub.s32 %v1160, %v1162
    %v1164 = vrot.slane %v1150, %v1163
    %v1165 = vcombine.low %v1109, %v1125
    %v1166 = vcombine.high %v1109, %v1125
    %v1168 = vunpack.c.l.s4 1934713408
    %v1169 = vunpack.c.0.s8 %v1168
    %v1170 = vlaneseq
    %v1171 = vshrl.u32 %v1170, 7
    %v1172 = vsub.s32 %v1169, %v1171
    %v1173 = vrot.slane %v1165, %v1172
    %v1175 = vunpack.c.l.s4 1934713408
    %v1176 = vunpack.c.0.s8 %v1175
    %v1177 = vlaneseq
    %v1178 = vshrl.u32 %v1177, 7
    %v1179 = vsub.s32 %v1176, %v1178
    %v1180 = vrot.slane %v1166, %v1179
    %v1181 = vcombine.low %v1116, %v1132
    %v1182 = vcombine.high %v1116, %v1132
    %v1184 = vunpack.c.l.s4 1934713408
    %v1185 = vunpack.c.0.s8 %v1184
    %v1186 = vlaneseq
    %v1187 = vshrl.u32 %v1186, 7
    %v1188 = vsub.s32 %v1185, %v1187
    %v1189 = vrot.slane %v1181, %v1188
    %v1191 = vunpack.c.l.s4 1934713408
    %v1192 = vunpack.c.0.s8 %v1191
    %v1193 = vlaneseq
    %v1194 = vshrl.u32 %v1193, 7
    %v1195 = vsub.s32 %v1192, %v1194
    %v1196 = vrot.slane %v1182, %v1195
    %v1197 = vcombine.low %v1141, %v1157
    %v1198 = vcombine.high %v1141, %v1157
    %v1200 = vunpack.c.l.s4 1934713408
    %v1201 = vunpack.c.0.s8 %v1200
    %v1202 = vlaneseq
    %v1203 = vshrl.u32 %v1202, 7
    %v1204 = vsub.s32 %v1201, %v1203
    %v1205 = vrot.slane %v1197, %v1204
    %v1207 = vunpack.c.l.s4 1934713408
    %v1208 = vunpack.c.0.s8 %v1207
    %v1209 = vlaneseq
    %v1210 = vshrl.u32 %v1209, 7
    %v1211 = vsub.s32 %v1208, %v1210
    %v1212 = vrot.slane %v1198, %v1211
    %v1213 = vcombine.low %v1148, %v1164
    %v1214 = vcombine.high %v1148, %v1164
    %v1216 = vunpack.c.l.s4 1934713408
    %v1217 = vunpack.c.0.s8 %v1216
    %v1218 = vlaneseq
    %v1219 = vshrl.u32 %v1218, 7
    %v1220 = vsub.s32 %v1217, %v1219
    %v1221 = vrot.slane %v1213, %v1220
    %v1223 = vunpack.c.l.s4 1934713408
    %v1224 = vunpack.c.0.s8 %v1223
    %v1225 = vlaneseq
    %v1226 = vshrl.u32 %v1225, 7
    %v1227 = vsub.s32 %v1224, %v1226
    %v1228 = vrot.slane %v1214, %v1227
    %v1229 = vcombine.low %v1173, %v1205
    %v1230 = vcombine.high %v1173, %v1205
    %v1231 = vcombine.low %v1180, %v1212
    %v1232 = vcombine.high %v1180, %v1212
    %v1233 = vcombine.low %v1189, %v1221
    %v1234 = vcombine.high %v1189, %v1221
    %v1235 = vcombine.low %v1196, %v1228
    %v1236 = vcombine.high %v1196, %v1228
    %v1237 = vcombine.low %v1074, %v1080
    %v1238 = vcombine.high %v1074, %v1080
    %v1240 = vunpack.c.l.s4 1983009808
    %v1241 = vunpack.c.0.s8 %v1240
    %v1242 = vlaneseq
    %v1243 = vshrl.u32 %v1242, 7
    %v1244 = vsub.s32 %v1241, %v1243
    %v1245 = vrot.slane %v1237, %v1244
    %v1247 = vunpack.c.l.s4 1983009808
    %v1248 = vunpack.c.0.s8 %v1247
    %v1249 = vlaneseq
    %v1250 = vshrl.u32 %v1249, 7
    %v1251 = vsub.s32 %v1248, %v1250
    %v1252 = vrot.slane %v1238, %v1251
    %v1253 = vcombine.low %v1077, %v1083
    %v1254 = vcombine.high %v1077, %v1083
    %v1256 = vunpack.c.l.s4 1983009808
    %v1257 = vunpack.c.0.s8 %v1256
    %v1258 = vlaneseq
    %v1259 = vshrl.u32 %v1258, 7
    %v1260 = vsub.s32 %v1257, %v1259
    %v1261 = vrot.slane %v1253, %v1260
    %v1263 = vunpack.c.l.s4 1983009808
    %v1264 = vunpack.c.0.s8 %v1263
    %v1265 = vlaneseq
    %v1266 = vshrl.u32 %v1265, 7
    %v1267 = vsub.s32 %v1264, %v1266
    %v1268 = vrot.slane %v1254, %v1267
    %v1269 = vcombine.low %v1086, %v1096
    %v1270 = vcombine.high %v1086, %v1096
    %v1272 = vunpack.c.l.s4 1983009808
    %v1273 = vunpack.c.0.s8 %v1272
    %v1274 = vlaneseq
    %v1275 = vshrl.u32 %v1274, 7
    %v1276 = vsub.s32 %v1273, %v1275
    %v1277 = vrot.slane %v1269, %v1276
    %v1279 = vunpack.c.l.s4 1983009808
    %v1280 = vunpack.c.0.s8 %v1279
    %v1281 = vlaneseq
    %v1282 = vshrl.u32 %v1281, 7
    %v1283 = vsub.s32 %v1280, %v1282
    %v1284 = vrot.slane %v1270, %v1283
    %v1285 = vcombine.low %v1089, %v1099
    %v1286 = vcombine.high %v1089, %v1099
    %v1288 = vunpack.c.l.s4 1983009808
    %v1289 = vunpack.c.0.s8 %v1288
    %v1290 = vlaneseq
    %v1291 = vshrl.u32 %v1290, 7
    %v1292 = vsub.s32 %v1289, %v1291
    %v1293 = vrot.slane %v1285, %v1292
    %v1295 = vunpack.c.l.s4 1983009808
    %v1296 = vunpack.c.0.s8 %v1295
    %v1297 = vlaneseq
    %v1298 = vshrl.u32 %v1297, 7
    %v1299 = vsub.s32 %v1296, %v1298
    %v1300 = vrot.slane %v1286, %v1299
    %v1301 = vcombine.low %v1245, %v1261
    %v1302 = vcombine.high %v1245, %v1261
    %v1304 = vunpack.c.l.s4 1934713408
    %v1305 = vunpack.c.0.s8 %v1304
    %v1306 = vlaneseq
    %v1307 = vshrl.u32 %v1306, 7
    %v1308 = vsub.s32 %v1305, %v1307
    %v1309 = vrot.slane %v1301, %v1308
    %v1311 = vunpack.c.l.s4 1934713408
    %v1312 = vunpack.c.0.s8 %v1311
    %v1313 = vlaneseq
    %v1314 = vshrl.u32 %v1313, 7
    %v1315 = vsub.s32 %v1312, %v1314
    %v1316 = vrot.slane %v1302, %v1315
    %v1317 = vcombine.low %v1252, %v1268
    %v1318 = vcombine.high %v1252, %v1268
    %v1320 = vunpack.c.l.s4 1934713408
    %v1321 = vunpack.c.0.s8 %v1320
    %v1322 = vlaneseq
    %v1323 = vshrl.u32 %v1322, 7
    %v1324 = vsub.s32 %v1321, %v1323
    %v1325 = vrot.slane %v1317, %v1324
    %v1327 = vunpack.c.l.s4 1934713408
    %v1328 = vunpack.c.0.s8 %v1327
    %v1329 = vlaneseq
    %v1330 = vshrl.u32 %v1329, 7
    %v1331 = vsub.s32 %v1328, %v1330
    %v1332 = vrot.slane %v1318, %v1331
    %v1333 = vcombine.low %v1277, %v1293
    %v1334 = vcombine.high %v1277, %v1293
    %v1336 = vunpack.c.l.s4 1934713408
    %v1337 = vunpack.c.0.s8 %v1336
    %v1338 = vlaneseq
    %v1339 = vshrl.u32 %v1338, 7
    %v1340 = vsub.s32 %v1337, %v1339
    %v1341 = vrot.slane %v1333, %v1340
    %v1343 = vunpack.c.l.s4 1934713408
    %v1344 = vunpack.c.0.s8 %v1343
    %v1345 = vlaneseq
    %v1346 = vshrl.u32 %v1345, 7
    %v1347 = vsub.s32 %v1344, %v1346
    %v1348 = vrot.slane %v1334, %v1347
    %v1349 = vcombine.low %v1284, %v1300
    %v1350 = vcombine.high %v1284, %v1300
    %v1352 = vunpack.c.l.s4 1934713408
    %v1353 = vunpack.c.0.s8 %v1352
    %v1354 = vlaneseq
    %v1355 = vshrl.u32 %v1354, 7
    %v1356 = vsub.s32 %v1353, %v1355
    %v1357 = vrot.slane %v1349, %v1356
    %v1359 = vunpack.c.l.s4 1934713408
    %v1360 = vunpack.c.0.s8 %v1359
    %v1361 = vlaneseq
    %v1362 = vshrl.u32 %v1361, 7
    %v1363 = vsub.s32 %v1360, %v1362
    %v1364 = vrot.slane %v1350, %v1363
    %v1365 = vcombine.low %v1309, %v1341
    %v1366 = vcombine.high %v1309, %v1341
    %v1367 = vcombine.low %v1316, %v1348
    %v1368 = vcombine.high %v1316, %v1348
    %v1369 = vcombine.low %v1325, %v1357
    %v1370 = vcombine.high %v1325, %v1357
    %v1371 = vcombine.low %v1332, %v1364
    %v1372 = vcombine.high %v1332, %v1364
    %v1373 = vpack.c.bf16 %v1365, %v1229
    %v1374 = vpack.c.bf16 %v1366, %v1230
    %v1375 = vpack.c.bf16 %v1367, %v1231
    %v1376 = vpack.c.bf16 %v1368, %v1232
    %v1377 = vpack.c.bf16 %v1369, %v1233
    %v1378 = vpack.c.bf16 %v1370, %v1234
    %v1379 = vpack.c.bf16 %v1371, %v1235
    %v1380 = vpack.c.bf16 %v1372, %v1236
    %v1383 = vunpack.c.l.b16 %v22
    %v1384 = vunpack.c.l.b16 %v23
    %v1385 = vpack.c.b16 %v1384, %v1383
    %vm1387 = vcmask 130048
    %v1389 = vsel %vm1387, %v1373, 0
    %1391 = vmatprep.subr.bf16.mxu0 0
    %1392 = vmatpush1.bf16.msra.mxu0 %v1385
    %1393 = vmatprep.subr.bf16.mxu0 0
    %1394 = vmatpush1.bf16.msra.mxu0 0
    %1395 = vmatprep.subr.bf16.mxu0 0
    %1396 = vmatpush1.bf16.msra.mxu0 0
    %1397 = vmatprep.subr.bf16.mxu0 0
    %1398 = vmatpush1.bf16.msra.mxu0 0
    %1399 = vmatprep.subr.bf16.mxu0 0
    %1400 = vmatpush1.bf16.msra.mxu0 0
    %1401 = vmatprep.subr.bf16.mxu0 0
    %1402 = vmatpush1.bf16.msra.mxu0 0
    %1403 = vmatprep.subr.bf16.mxu0 0
    %1404 = vmatpush1.bf16.msra.mxu0 0
    %1405 = vmatprep.subr.bf16.mxu0 0
    %1406 = vmatpush1.bf16.msra.mxu0 0
    %1407 = vmatprep.subr.bf16.mxu0 0
    %1408 = vmatpush1.bf16.msra.mxu0 0
    %1409 = vmatprep.subr.bf16.mxu0 0
    %1410 = vmatpush1.bf16.msra.mxu0 0
    %1411 = vmatprep.subr.bf16.mxu0 0
    %1412 = vmatpush1.bf16.msra.mxu0 0
    %1413 = vmatprep.subr.bf16.mxu0 0
    %1414 = vmatpush1.bf16.msra.mxu0 0
    %1415 = vmatprep.subr.bf16.mxu0 0
    %1416 = vmatpush1.bf16.msra.mxu0 0
    %1417 = vmatprep.subr.bf16.mxu0 0
    %1418 = vmatpush1.bf16.msra.mxu0 0
    %1419 = vmatprep.subr.bf16.mxu0 0
    %1420 = vmatpush1.bf16.msra.mxu0 0
    %1421 = vmatprep.subr.bf16.mxu0 0
    %1422 = vmatpush1.bf16.msra.mxu0 0
    %1423 = vmatprep.mubr.bf16.mxu0 0
    %1424 = vmatmul.mubr.bf16.gmra.mrb[0].mxu0 %v1389
    %v1425 = vpop.f32.mrb[0].mxu0
    %v1426 = vadd.f32 0.0, %v1425
    %v1427 = vpop.f32.mrb[0].mxu0
    %v1428 = vpop.f32.mrb[0].mxu0
    %v1429 = vadd.f32 0.0, %v1428
    %v1430 = vpop.f32.mrb[0].mxu0
    %1431 = vdwg.mxu0
    %v1434 = vunpack.c.l.b16 %v24
    %v1435 = vunpack.c.l.b16 %v25
    %v1436 = vpack.c.b16 %v1435, %v1434
    %v1439 = vsel %vm1387, %v1374, 0
    %1441 = vmatprep.subr.bf16.mxu0 0
    %1442 = vmatpush1.bf16.msra.mxu0 %v1436
    %1443 = vmatprep.subr.bf16.mxu0 0
    %1444 = vmatpush1.bf16.msra.mxu0 0
    %1445 = vmatprep.subr.bf16.mxu0 0
    %1446 = vmatpush1.bf16.msra.mxu0 0
    %1447 = vmatprep.subr.bf16.mxu0 0
    %1448 = vmatpush1.bf16.msra.mxu0 0
    %1449 = vmatprep.subr.bf16.mxu0 0
    %1450 = vmatpush1.bf16.msra.mxu0 0
    %1451 = vmatprep.subr.bf16.mxu0 0
    %1452 = vmatpush1.bf16.msra.mxu0 0
    %1453 = vmatprep.subr.bf16.mxu0 0
    %1454 = vmatpush1.bf16.msra.mxu0 0
    %1455 = vmatprep.subr.bf16.mxu0 0
    %1456 = vmatpush1.bf16.msra.mxu0 0
    %1457 = vmatprep.subr.bf16.mxu0 0
    %1458 = vmatpush1.bf16.msra.mxu0 0
    %1459 = vmatprep.subr.bf16.mxu0 0
    %1460 = vmatpush1.bf16.msra.mxu0 0
    %1461 = vmatprep.subr.bf16.mxu0 0
    %1462 = vmatpush1.bf16.msra.mxu0 0
    %1463 = vmatprep.subr.bf16.mxu0 0
    %1464 = vmatpush1.bf16.msra.mxu0 0
    %1465 = vmatprep.subr.bf16.mxu0 0
    %1466 = vmatpush1.bf16.msra.mxu0 0
    %1467 = vmatprep.subr.bf16.mxu0 0
    %1468 = vmatpush1.bf16.msra.mxu0 0
    %1469 = vmatprep.subr.bf16.mxu0 0
    %1470 = vmatpush1.bf16.msra.mxu0 0
    %1471 = vmatprep.subr.bf16.mxu0 0
    %1472 = vmatpush1.bf16.msra.mxu0 0
    %1473 = vmatprep.mubr.bf16.mxu0 0
    %1474 = vmatmul.mubr.bf16.gmra.mrb[0].mxu0 %v1439
    %v1475 = vpop.f32.mrb[0].mxu0
    %v1476 = vadd.f32 0.0, %v1475
    %v1477 = vpop.f32.mrb[0].mxu0
    %v1478 = vpop.f32.mrb[0].mxu0
    %v1479 = vadd.f32 0.0, %v1478
    %v1480 = vpop.f32.mrb[0].mxu0
    %1481 = vdwg.mxu0
    %v1484 = vunpack.c.l.b16 %v26
    %v1485 = vunpack.c.l.b16 %v27
    %v1486 = vpack.c.b16 %v1485, %v1484
    %v1489 = vsel %vm1387, %v1375, 0
    %1491 = vmatprep.subr.bf16.mxu0 0
    %1492 = vmatpush1.bf16.msra.mxu0 %v1486
    %1493 = vmatprep.subr.bf16.mxu0 0
    %1494 = vmatpush1.bf16.msra.mxu0 0
    %1495 = vmatprep.subr.bf16.mxu0 0
    %1496 = vmatpush1.bf16.msra.mxu0 0
    %1497 = vmatprep.subr.bf16.mxu0 0
    %1498 = vmatpush1.bf16.msra.mxu0 0
    %1499 = vmatprep.subr.bf16.mxu0 0
    %1500 = vmatpush1.bf16.msra.mxu0 0
    %1501 = vmatprep.subr.bf16.mxu0 0
    %1502 = vmatpush1.bf16.msra.mxu0 0
    %1503 = vmatprep.subr.bf16.mxu0 0
    %1504 = vmatpush1.bf16.msra.mxu0 0
    %1505 = vmatprep.subr.bf16.mxu0 0
    %1506 = vmatpush1.bf16.msra.mxu0 0
    %1507 = vmatprep.subr.bf16.mxu0 0
    %1508 = vmatpush1.bf16.msra.mxu0 0
    %1509 = vmatprep.subr.bf16.mxu0 0
    %1510 = vmatpush1.bf16.msra.mxu0 0
    %1511 = vmatprep.subr.bf16.mxu0 0
    %1512 = vmatpush1.bf16.msra.mxu0 0
    %1513 = vmatprep.subr.bf16.mxu0 0
    %1514 = vmatpush1.bf16.msra.mxu0 0
    %1515 = vmatprep.subr.bf16.mxu0 0
    %1516 = vmatpush1.bf16.msra.mxu0 0
    %1517 = vmatprep.subr.bf16.mxu0 0
    %1518 = vmatpush1.bf16.msra.mxu0 0
    %1519 = vmatprep.subr.bf16.mxu0 0
    %1520 = vmatpush1.bf16.msra.mxu0 0
    %1521 = vmatprep.subr.bf16.mxu0 0
    %1522 = vmatpush1.bf16.msra.mxu0 0
    %1523 = vmatprep.mubr.bf16.mxu0 0
    %1524 = vmatmul.mubr.bf16.gmra.mrb[0].mxu0 %v1489
    %v1525 = vpop.f32.mrb[0].mxu0
    %v1526 = vadd.f32 0.0, %v1525
    %v1527 = vpop.f32.mrb[0].mxu0
    %v1528 = vpop.f32.mrb[0].mxu0
    %v1529 = vadd.f32 0.0, %v1528
    %v1530 = vpop.f32.mrb[0].mxu0
    %1531 = vdwg.mxu0
    %v1534 = vunpack.c.l.b16 %v28
    %v1535 = vunpack.c.l.b16 %v29
    %v1536 = vpack.c.b16 %v1535, %v1534
    %v1539 = vsel %vm1387, %v1376, 0
    %1541 = vmatprep.subr.bf16.mxu0 0
    %1542 = vmatpush1.bf16.msra.mxu0 %v1536
    %1543 = vmatprep.subr.bf16.mxu0 0
    %1544 = vmatpush1.bf16.msra.mxu0 0
    %1545 = vmatprep.subr.bf16.mxu0 0
    %1546 = vmatpush1.bf16.msra.mxu0 0
    %1547 = vmatprep.subr.bf16.mxu0 0
    %1548 = vmatpush1.bf16.msra.mxu0 0
    %1549 = vmatprep.subr.bf16.mxu0 0
    %1550 = vmatpush1.bf16.msra.mxu0 0
    %1551 = vmatprep.subr.bf16.mxu0 0
    %1552 = vmatpush1.bf16.msra.mxu0 0
    %1553 = vmatprep.subr.bf16.mxu0 0
    %1554 = vmatpush1.bf16.msra.mxu0 0
    %1555 = vmatprep.subr.bf16.mxu0 0
    %1556 = vmatpush1.bf16.msra.mxu0 0
    %1557 = vmatprep.subr.bf16.mxu0 0
    %1558 = vmatpush1.bf16.msra.mxu0 0
    %1559 = vmatprep.subr.bf16.mxu0 0
    %1560 = vmatpush1.bf16.msra.mxu0 0
    %1561 = vmatprep.subr.bf16.mxu0 0
    %1562 = vmatpush1.bf16.msra.mxu0 0
    %1563 = vmatprep.subr.bf16.mxu0 0
    %1564 = vmatpush1.bf16.msra.mxu0 0
    %1565 = vmatprep.subr.bf16.mxu0 0
    %1566 = vmatpush1.bf16.msra.mxu0 0
    %1567 = vmatprep.subr.bf16.mxu0 0
    %1568 = vmatpush1.bf16.msra.mxu0 0
    %1569 = vmatprep.subr.bf16.mxu0 0
    %1570 = vmatpush1.bf16.msra.mxu0 0
    %1571 = vmatprep.subr.bf16.mxu0 0
    %1572 = vmatpush1.bf16.msra.mxu0 0
    %1573 = vmatprep.mubr.bf16.mxu0 0
    %1574 = vmatmul.mubr.bf16.gmra.mrb[0].mxu0 %v1539
    %v1575 = vpop.f32.mrb[0].mxu0
    %v1576 = vadd.f32 0.0, %v1575
    %v1577 = vpop.f32.mrb[0].mxu0
    %v1578 = vpop.f32.mrb[0].mxu0
    %v1579 = vadd.f32 0.0, %v1578
    %v1580 = vpop.f32.mrb[0].mxu0
    %1581 = vdwg.mxu0
    %v1584 = vunpack.c.l.b16 %v30
    %v1585 = vunpack.c.l.b16 %v31
    %v1586 = vpack.c.b16 %v1585, %v1584
    %v1589 = vsel %vm1387, %v1377, 0
    %1591 = vmatprep.subr.bf16.mxu0 0
    %1592 = vmatpush1.bf16.msra.mxu0 %v1586
    %1593 = vmatprep.subr.bf16.mxu0 0
    %1594 = vmatpush1.bf16.msra.mxu0 0
    %1595 = vmatprep.subr.bf16.mxu0 0
    %1596 = vmatpush1.bf16.msra.mxu0 0
    %1597 = vmatprep.subr.bf16.mxu0 0
    %1598 = vmatpush1.bf16.msra.mxu0 0
    %1599 = vmatprep.subr.bf16.mxu0 0
    %1600 = vmatpush1.bf16.msra.mxu0 0
    %1601 = vmatprep.subr.bf16.mxu0 0
    %1602 = vmatpush1.bf16.msra.mxu0 0
    %1603 = vmatprep.subr.bf16.mxu0 0
    %1604 = vmatpush1.bf16.msra.mxu0 0
    %1605 = vmatprep.subr.bf16.mxu0 0
    %1606 = vmatpush1.bf16.msra.mxu0 0
    %1607 = vmatprep.subr.bf16.mxu0 0
    %1608 = vmatpush1.bf16.msra.mxu0 0
    %1609 = vmatprep.subr.bf16.mxu0 0
    %1610 = vmatpush1.bf16.msra.mxu0 0
    %1611 = vmatprep.subr.bf16.mxu0 0
    %1612 = vmatpush1.bf16.msra.mxu0 0
    %1613 = vmatprep.subr.bf16.mxu0 0
    %1614 = vmatpush1.bf16.msra.mxu0 0
    %1615 = vmatprep.subr.bf16.mxu0 0
    %1616 = vmatpush1.bf16.msra.mxu0 0
    %1617 = vmatprep.subr.bf16.mxu0 0
    %1618 = vmatpush1.bf16.msra.mxu0 0
    %1619 = vmatprep.subr.bf16.mxu0 0
    %1620 = vmatpush1.bf16.msra.mxu0 0
    %1621 = vmatprep.subr.bf16.mxu0 0
    %1622 = vmatpush1.bf16.msra.mxu0 0
    %1623 = vmatprep.mubr.bf16.mxu0 0
    %1624 = vmatmul.mubr.bf16.gmra.mrb[0].mxu0 %v1589
    %v1625 = vpop.f32.mrb[0].mxu0
    %v1626 = vadd.f32 0.0, %v1625
    %v1627 = vpop.f32.mrb[0].mxu0
    %v1628 = vpop.f32.mrb[0].mxu0
    %v1629 = vadd.f32 0.0, %v1628
    %v1630 = vpop.f32.mrb[0].mxu0
    %1631 = vdwg.mxu0
    %v1634 = vunpack.c.l.b16 %v32
    %v1635 = vunpack.c.l.b16 %v33
    %v1636 = vpack.c.b16 %v1635, %v1634
    %v1639 = vsel %vm1387, %v1378, 0
    %1641 = vmatprep.subr.bf16.mxu0 0
    %1642 = vmatpush1.bf16.msra.mxu0 %v1636
    %1643 = vmatprep.subr.bf16.mxu0 0
    %1644 = vmatpush1.bf16.msra.mxu0 0
    %1645 = vmatprep.subr.bf16.mxu0 0
    %1646 = vmatpush1.bf16.msra.mxu0 0
    %1647 = vmatprep.subr.bf16.mxu0 0
    %1648 = vmatpush1.bf16.msra.mxu0 0
    %1649 = vmatprep.subr.bf16.mxu0 0
    %1650 = vmatpush1.bf16.msra.mxu0 0
    %1651 = vmatprep.subr.bf16.mxu0 0
    %1652 = vmatpush1.bf16.msra.mxu0 0
    %1653 = vmatprep.subr.bf16.mxu0 0
    %1654 = vmatpush1.bf16.msra.mxu0 0
    %1655 = vmatprep.subr.bf16.mxu0 0
    %1656 = vmatpush1.bf16.msra.mxu0 0
    %1657 = vmatprep.subr.bf16.mxu0 0
    %1658 = vmatpush1.bf16.msra.mxu0 0
    %1659 = vmatprep.subr.bf16.mxu0 0
    %1660 = vmatpush1.bf16.msra.mxu0 0
    %1661 = vmatprep.subr.bf16.mxu0 0
    %1662 = vmatpush1.bf16.msra.mxu0 0
    %1663 = vmatprep.subr.bf16.mxu0 0
    %1664 = vmatpush1.bf16.msra.mxu0 0
    %1665 = vmatprep.subr.bf16.mxu0 0
    %1666 = vmatpush1.bf16.msra.mxu0 0
    %1667 = vmatprep.subr.bf16.mxu0 0
    %1668 = vmatpush1.bf16.msra.mxu0 0
    %1669 = vmatprep.subr.bf16.mxu0 0
    %1670 = vmatpush1.bf16.msra.mxu0 0
    %1671 = vmatprep.subr.bf16.mxu0 0
    %1672 = vmatpush1.bf16.msra.mxu0 0
    %1673 = vmatprep.mubr.bf16.mxu0 0
    %1674 = vmatmul.mubr.bf16.gmra.mrb[0].mxu0 %v1639
    %v1675 = vpop.f32.mrb[0].mxu0
    %v1676 = vadd.f32 0.0, %v1675
    %v1677 = vpop.f32.mrb[0].mxu0
    %v1678 = vpop.f32.mrb[0].mxu0
    %v1679 = vadd.f32 0.0, %v1678
    %v1680 = vpop.f32.mrb[0].mxu0
    %1681 = vdwg.mxu0
    %v1684 = vunpack.c.l.b16 %v34
    %v1685 = vunpack.c.l.b16 %v35
    %v1686 = vpack.c.b16 %v1685, %v1684
    %v1689 = vsel %vm1387, %v1379, 0
    %1691 = vmatprep.subr.bf16.mxu0 0
    %1692 = vmatpush1.bf16.msra.mxu0 %v1686
    %1693 = vmatprep.subr.bf16.mxu0 0
    %1694 = vmatpush1.bf16.msra.mxu0 0
    %1695 = vmatprep.subr.bf16.mxu0 0
    %1696 = vmatpush1.bf16.msra.mxu0 0
    %1697 = vmatprep.subr.bf16.mxu0 0
    %1698 = vmatpush1.bf16.msra.mxu0 0
    %1699 = vmatprep.subr.bf16.mxu0 0
    %1700 = vmatpush1.bf16.msra.mxu0 0
    %1701 = vmatprep.subr.bf16.mxu0 0
    %1702 = vmatpush1.bf16.msra.mxu0 0
    %1703 = vmatprep.subr.bf16.mxu0 0
    %1704 = vmatpush1.bf16.msra.mxu0 0
    %1705 = vmatprep.subr.bf16.mxu0 0
    %1706 = vmatpush1.bf16.msra.mxu0 0
    %1707 = vmatprep.subr.bf16.mxu0 0
    %1708 = vmatpush1.bf16.msra.mxu0 0
    %1709 = vmatprep.subr.bf16.mxu0 0
    %1710 = vmatpush1.bf16.msra.mxu0 0
    %1711 = vmatprep.subr.bf16.mxu0 0
    %1712 = vmatpush1.bf16.msra.mxu0 0
    %1713 = vmatprep.subr.bf16.mxu0 0
    %1714 = vmatpush1.bf16.msra.mxu0 0
    %1715 = vmatprep.subr.bf16.mxu0 0
    %1716 = vmatpush1.bf16.msra.mxu0 0
    %1717 = vmatprep.subr.bf16.mxu0 0
    %1718 = vmatpush1.bf16.msra.mxu0 0
    %1719 = vmatprep.subr.bf16.mxu0 0
    %1720 = vmatpush1.bf16.msra.mxu0 0
    %1721 = vmatprep.subr.bf16.mxu0 0
    %1722 = vmatpush1.bf16.msra.mxu0 0
    %1723 = vmatprep.mubr.bf16.mxu0 0
    %1724 = vmatmul.mubr.bf16.gmra.mrb[0].mxu0 %v1689
    %v1725 = vpop.f32.mrb[0].mxu0
    %v1726 = vadd.f32 0.0, %v1725
    %v1727 = vpop.f32.mrb[0].mxu0
    %v1728 = vpop.f32.mrb[0].mxu0
    %v1729 = vadd.f32 0.0, %v1728
    %v1730 = vpop.f32.mrb[0].mxu0
    %1731 = vdwg.mxu0
    %v1734 = vunpack.c.l.b16 %v36
    %v1735 = vunpack.c.l.b16 %v37
    %v1736 = vpack.c.b16 %v1735, %v1734
    %v1739 = vsel %vm1387, %v1380, 0
    %1741 = vmatprep.subr.bf16.mxu0 0
    %1742 = vmatpush1.bf16.msra.mxu0 %v1736
    %1743 = vmatprep.subr.bf16.mxu0 0
    %1744 = vmatpush1.bf16.msra.mxu0 0
    %1745 = vmatprep.subr.bf16.mxu0 0
    %1746 = vmatpush1.bf16.msra.mxu0 0
    %1747 = vmatprep.subr.bf16.mxu0 0
    %1748 = vmatpush1.bf16.msra.mxu0 0
    %1749 = vmatprep.subr.bf16.mxu0 0
    %1750 = vmatpush1.bf16.msra.mxu0 0
    %1751 = vmatprep.subr.bf16.mxu0 0
    %1752 = vmatpush1.bf16.msra.mxu0 0
    %1753 = vmatprep.subr.bf16.mxu0 0
    %1754 = vmatpush1.bf16.msra.mxu0 0
    %1755 = vmatprep.subr.bf16.mxu0 0
    %1756 = vmatpush1.bf16.msra.mxu0 0
    %1757 = vmatprep.subr.bf16.mxu0 0
    %1758 = vmatpush1.bf16.msra.mxu0 0
    %1759 = vmatprep.subr.bf16.mxu0 0
    %1760 = vmatpush1.bf16.msra.mxu0 0
    %1761 = vmatprep.subr.bf16.mxu0 0
    %1762 = vmatpush1.bf16.msra.mxu0 0
    %1763 = vmatprep.subr.bf16.mxu0 0
    %1764 = vmatpush1.bf16.msra.mxu0 0
    %1765 = vmatprep.subr.bf16.mxu0 0
    %1766 = vmatpush1.bf16.msra.mxu0 0
    %1767 = vmatprep.subr.bf16.mxu0 0
    %1768 = vmatpush1.bf16.msra.mxu0 0
    %1769 = vmatprep.subr.bf16.mxu0 0
    %1770 = vmatpush1.bf16.msra.mxu0 0
    %1771 = vmatprep.subr.bf16.mxu0 0
    %1772 = vmatpush1.bf16.msra.mxu0 0
    %1773 = vmatprep.mubr.bf16.mxu0 0
    %1774 = vmatmul.mubr.bf16.gmra.mrb[0].mxu0 %v1739
    %v1775 = vpop.f32.mrb[0].mxu0
    %v1776 = vadd.f32 0.0, %v1775
    %v1777 = vpop.f32.mrb[0].mxu0
    %v1778 = vpop.f32.mrb[0].mxu0
    %v1779 = vadd.f32 0.0, %v1778
    %v1780 = vpop.f32.mrb[0].mxu0
    %1781 = vdwg.mxu0
    %v1782 = vpack.c.bf16 %v1429, %v1426
    %v1783 = vpack.c.bf16 %v1479, %v1476
    %v1784 = vpack.c.bf16 %v1529, %v1526
    %v1785 = vpack.c.bf16 %v1579, %v1576
    %v1786 = vpack.c.bf16 %v1629, %v1626
    %v1787 = vpack.c.bf16 %v1679, %v1676
    %v1788 = vpack.c.bf16 %v1729, %v1726
    %v1789 = vpack.c.bf16 %v1779, %v1776
    %v1794 = vunpack.c.l.b16 %v38
    %v1795 = vunpack.c.l.b16 %v39
    %v1796 = vunpack.c.l.b16 %v40
    %v1797 = vunpack.c.l.b16 %v41
    %v1798 = vpack.c.b16 %v1795, %v1794
    %v1799 = vpack.c.b16 %v1797, %v1796
    %v1801 = vsel %vm1387, %v1798, 0
    %v1804 = vsel %vm1387, %v1799, 0
    %1806 = vmatprep.subr.bf16.mxu0 0
    %1807 = vmatpush1.bf16.msra.mxu0 %v1782
    %1808 = vmatprep.subr.bf16.mxu0 0
    %1809 = vmatpush1.bf16.msra.mxu0 0
    %1810 = vmatprep.subr.bf16.mxu0 0
    %1811 = vmatpush1.bf16.msra.mxu0 0
    %1812 = vmatprep.subr.bf16.mxu0 0
    %1813 = vmatpush1.bf16.msra.mxu0 0
    %1814 = vmatprep.subr.bf16.mxu0 0
    %1815 = vmatpush1.bf16.msra.mxu0 0
    %1816 = vmatprep.subr.bf16.mxu0 0
    %1817 = vmatpush1.bf16.msra.mxu0 0
    %1818 = vmatprep.subr.bf16.mxu0 0
    %1819 = vmatpush1.bf16.msra.mxu0 0
    %1820 = vmatprep.subr.bf16.mxu0 0
    %1821 = vmatpush1.bf16.msra.mxu0 0
    %1822 = vmatprep.subr.bf16.mxu0 0
    %1823 = vmatpush1.bf16.msra.mxu0 0
    %1824 = vmatprep.subr.bf16.mxu0 0
    %1825 = vmatpush1.bf16.msra.mxu0 0
    %1826 = vmatprep.subr.bf16.mxu0 0
    %1827 = vmatpush1.bf16.msra.mxu0 0
    %1828 = vmatprep.subr.bf16.mxu0 0
    %1829 = vmatpush1.bf16.msra.mxu0 0
    %1830 = vmatprep.subr.bf16.mxu0 0
    %1831 = vmatpush1.bf16.msra.mxu0 0
    %1832 = vmatprep.subr.bf16.mxu0 0
    %1833 = vmatpush1.bf16.msra.mxu0 0
    %1834 = vmatprep.subr.bf16.mxu0 0
    %1835 = vmatpush1.bf16.msra.mxu0 0
    %1836 = vmatprep.subr.bf16.mxu0 0
    %1837 = vmatpush1.bf16.msra.mxu0 0
    %1838 = vmatprep.mubr.bf16.mxu0 0
    %1839 = vmatmul.mubr.bf16.gmra.mrb[0].mxu0 %v1801
    %v1840 = vpop.f32.mrb[0].mxu0
    %v1841 = vadd.f32 0.0, %v1840
    %v1842 = vpop.f32.mrb[0].mxu0
    %v1843 = vpop.f32.mrb[0].mxu0
    %v1844 = vadd.f32 0.0, %v1843
    %v1845 = vpop.f32.mrb[0].mxu0
    %1846 = vmatprep.mubr.bf16.mxu0 0
    %1847 = vmatmul.mubr.bf16.gmra.mrb[0].mxu0 %v1804
    %v1848 = vpop.f32.mrb[0].mxu0
    %v1849 = vadd.f32 0.0, %v1848
    %v1850 = vpop.f32.mrb[0].mxu0
    %v1851 = vpop.f32.mrb[0].mxu0
    %v1852 = vadd.f32 0.0, %v1851
    %v1853 = vpop.f32.mrb[0].mxu0
    %1854 = vdwg.mxu0
    %v1859 = vunpack.c.l.b16 %v42
    %v1860 = vunpack.c.l.b16 %v43
    %v1861 = vunpack.c.l.b16 %v44
    %v1862 = vunpack.c.l.b16 %v45
    %v1863 = vpack.c.b16 %v1860, %v1859
    %v1864 = vpack.c.b16 %v1862, %v1861
    %v1866 = vsel %vm1387, %v1863, 0
    %v1869 = vsel %vm1387, %v1864, 0
    %1871 = vmatprep.subr.bf16.mxu0 0
    %1872 = vmatpush1.bf16.msra.mxu0 %v1783
    %1873 = vmatprep.subr.bf16.mxu0 0
    %1874 = vmatpush1.bf16.msra.mxu0 0
    %1875 = vmatprep.subr.bf16.mxu0 0
    %1876 = vmatpush1.bf16.msra.mxu0 0
    %1877 = vmatprep.subr.bf16.mxu0 0
    %1878 = vmatpush1.bf16.msra.mxu0 0
    %1879 = vmatprep.subr.bf16.mxu0 0
    %1880 = vmatpush1.bf16.msra.mxu0 0
    %1881 = vmatprep.subr.bf16.mxu0 0
    %1882 = vmatpush1.bf16.msra.mxu0 0
    %1883 = vmatprep.subr.bf16.mxu0 0
    %1884 = vmatpush1.bf16.msra.mxu0 0
    %1885 = vmatprep.subr.bf16.mxu0 0
    %1886 = vmatpush1.bf16.msra.mxu0 0
    %1887 = vmatprep.subr.bf16.mxu0 0
    %1888 = vmatpush1.bf16.msra.mxu0 0
    %1889 = vmatprep.subr.bf16.mxu0 0
    %1890 = vmatpush1.bf16.msra.mxu0 0
    %1891 = vmatprep.subr.bf16.mxu0 0
    %1892 = vmatpush1.bf16.msra.mxu0 0
    %1893 = vmatprep.subr.bf16.mxu0 0
    %1894 = vmatpush1.bf16.msra.mxu0 0
    %1895 = vmatprep.subr.bf16.mxu0 0
    %1896 = vmatpush1.bf16.msra.mxu0 0
    %1897 = vmatprep.subr.bf16.mxu0 0
    %1898 = vmatpush1.bf16.msra.mxu0 0
    %1899 = vmatprep.subr.bf16.mxu0 0
    %1900 = vmatpush1.bf16.msra.mxu0 0
    %1901 = vmatprep.subr.bf16.mxu0 0
    %1902 = vmatpush1.bf16.msra.mxu0 0
    %1903 = vmatprep.mubr.bf16.mxu0 0
    %1904 = vmatmul.mubr.bf16.gmra.mrb[0].mxu0 %v1866
    %v1905 = vpop.f32.mrb[0].mxu0
    %v1906 = vadd.f32 0.0, %v1905
    %v1907 = vpop.f32.mrb[0].mxu0
    %v1908 = vpop.f32.mrb[0].mxu0
    %v1909 = vadd.f32 0.0, %v1908
    %v1910 = vpop.f32.mrb[0].mxu0
    %1911 = vmatprep.mubr.bf16.mxu0 0
    %1912 = vmatmul.mubr.bf16.gmra.mrb[0].mxu0 %v1869
    %v1913 = vpop.f32.mrb[0].mxu0
    %v1914 = vadd.f32 0.0, %v1913
    %v1915 = vpop.f32.mrb[0].mxu0
    %v1916 = vpop.f32.mrb[0].mxu0
    %v1917 = vadd.f32 0.0, %v1916
    %v1918 = vpop.f32.mrb[0].mxu0
    %1919 = vdwg.mxu0
    %v1924 = vunpack.c.l.b16 %v46
    %v1925 = vunpack.c.l.b16 %v47
    %v1926 = vunpack.c.l.b16 %v48
    %v1927 = vunpack.c.l.b16 %v49
    %v1928 = vpack.c.b16 %v1925, %v1924
    %v1929 = vpack.c.b16 %v1927, %v1926
    %v1931 = vsel %vm1387, %v1928, 0
    %v1934 = vsel %vm1387, %v1929, 0
    %1936 = vmatprep.subr.bf16.mxu0 0
    %1937 = vmatpush1.bf16.msra.mxu0 %v1784
    %1938 = vmatprep.subr.bf16.mxu0 0
    %1939 = vmatpush1.bf16.msra.mxu0 0
    %1940 = vmatprep.subr.bf16.mxu0 0
    %1941 = vmatpush1.bf16.msra.mxu0 0
    %1942 = vmatprep.subr.bf16.mxu0 0
    %1943 = vmatpush1.bf16.msra.mxu0 0
    %1944 = vmatprep.subr.bf16.mxu0 0
    %1945 = vmatpush1.bf16.msra.mxu0 0
    %1946 = vmatprep.subr.bf16.mxu0 0
    %1947 = vmatpush1.bf16.msra.mxu0 0
    %1948 = vmatprep.subr.bf16.mxu0 0
    %1949 = vmatpush1.bf16.msra.mxu0 0
    %1950 = vmatprep.subr.bf16.mxu0 0
    %1951 = vmatpush1.bf16.msra.mxu0 0
    %1952 = vmatprep.subr.bf16.mxu0 0
    %1953 = vmatpush1.bf16.msra.mxu0 0
    %1954 = vmatprep.subr.bf16.mxu0 0
    %1955 = vmatpush1.bf16.msra.mxu0 0
    %1956 = vmatprep.subr.bf16.mxu0 0
    %1957 = vmatpush1.bf16.msra.mxu0 0
    %1958 = vmatprep.subr.bf16.mxu0 0
    %1959 = vmatpush1.bf16.msra.mxu0 0
    %1960 = vmatprep.subr.bf16.mxu0 0
    %1961 = vmatpush1.bf16.msra.mxu0 0
    %1962 = vmatprep.subr.bf16.mxu0 0
    %1963 = vmatpush1.bf16.msra.mxu0 0
    %1964 = vmatprep.subr.bf16.mxu0 0
    %1965 = vmatpush1.bf16.msra.mxu0 0
    %1966 = vmatprep.subr.bf16.mxu0 0
    %1967 = vmatpush1.bf16.msra.mxu0 0
    %1968 = vmatprep.mubr.bf16.mxu0 0
    %1969 = vmatmul.mubr.bf16.gmra.mrb[0].mxu0 %v1931
    %v1970 = vpop.f32.mrb[0].mxu0
    %v1971 = vadd.f32 0.0, %v1970
    %v1972 = vpop.f32.mrb[0].mxu0
    %v1973 = vpop.f32.mrb[0].mxu0
    %v1974 = vadd.f32 0.0, %v1973
    %v1975 = vpop.f32.mrb[0].mxu0
    %1976 = vmatprep.mubr.bf16.mxu0 0
    %1977 = vmatmul.mubr.bf16.gmra.mrb[0].mxu0 %v1934
    %v1978 = vpop.f32.mrb[0].mxu0
    %v1979 = vadd.f32 0.0, %v1978
    %v1980 = vpop.f32.mrb[0].mxu0
    %v1981 = vpop.f32.mrb[0].mxu0
    %v1982 = vadd.f32 0.0, %v1981
    %v1983 = vpop.f32.mrb[0].mxu0
    %1984 = vdwg.mxu0
    %v1989 = vunpack.c.l.b16 %v50
    %v1990 = vunpack.c.l.b16 %v51
    %v1991 = vunpack.c.l.b16 %v52
    %v1992 = vunpack.c.l.b16 %v53
    %v1993 = vpack.c.b16 %v1990, %v1989
    %v1994 = vpack.c.b16 %v1992, %v1991
    %v1996 = vsel %vm1387, %v1993, 0
    %v1999 = vsel %vm1387, %v1994, 0
    %2001 = vmatprep.subr.bf16.mxu0 0
    %2002 = vmatpush1.bf16.msra.mxu0 %v1785
    %2003 = vmatprep.subr.bf16.mxu0 0
    %2004 = vmatpush1.bf16.msra.mxu0 0
    %2005 = vmatprep.subr.bf16.mxu0 0
    %2006 = vmatpush1.bf16.msra.mxu0 0
    %2007 = vmatprep.subr.bf16.mxu0 0
    %2008 = vmatpush1.bf16.msra.mxu0 0
    %2009 = vmatprep.subr.bf16.mxu0 0
    %2010 = vmatpush1.bf16.msra.mxu0 0
    %2011 = vmatprep.subr.bf16.mxu0 0
    %2012 = vmatpush1.bf16.msra.mxu0 0
    %2013 = vmatprep.subr.bf16.mxu0 0
    %2014 = vmatpush1.bf16.msra.mxu0 0
    %2015 = vmatprep.subr.bf16.mxu0 0
    %2016 = vmatpush1.bf16.msra.mxu0 0
    %2017 = vmatprep.subr.bf16.mxu0 0
    %2018 = vmatpush1.bf16.msra.mxu0 0
    %2019 = vmatprep.subr.bf16.mxu0 0
    %2020 = vmatpush1.bf16.msra.mxu0 0
    %2021 = vmatprep.subr.bf16.mxu0 0
    %2022 = vmatpush1.bf16.msra.mxu0 0
    %2023 = vmatprep.subr.bf16.mxu0 0
    %2024 = vmatpush1.bf16.msra.mxu0 0
    %2025 = vmatprep.subr.bf16.mxu0 0
    %2026 = vmatpush1.bf16.msra.mxu0 0
    %2027 = vmatprep.subr.bf16.mxu0 0
    %2028 = vmatpush1.bf16.msra.mxu0 0
    %2029 = vmatprep.subr.bf16.mxu0 0
    %2030 = vmatpush1.bf16.msra.mxu0 0
    %2031 = vmatprep.subr.bf16.mxu0 0
    %2032 = vmatpush1.bf16.msra.mxu0 0
    %2033 = vmatprep.mubr.bf16.mxu0 0
    %2034 = vmatmul.mubr.bf16.gmra.mrb[0].mxu0 %v1996
    %v2035 = vpop.f32.mrb[0].mxu0
    %v2036 = vadd.f32 0.0, %v2035
    %v2037 = vpop.f32.mrb[0].mxu0
    %v2038 = vpop.f32.mrb[0].mxu0
    %v2039 = vadd.f32 0.0, %v2038
    %v2040 = vpop.f32.mrb[0].mxu0
    %2041 = vmatprep.mubr.bf16.mxu0 0
    %2042 = vmatmul.mubr.bf16.gmra.mrb[0].mxu0 %v1999
    %v2043 = vpop.f32.mrb[0].mxu0
    %v2044 = vadd.f32 0.0, %v2043
    %v2045 = vpop.f32.mrb[0].mxu0
    %v2046 = vpop.f32.mrb[0].mxu0
    %v2047 = vadd.f32 0.0, %v2046
    %v2048 = vpop.f32.mrb[0].mxu0
    %2049 = vdwg.mxu0
    %v2054 = vunpack.c.l.b16 %v54
    %v2055 = vunpack.c.l.b16 %v55
    %v2056 = vunpack.c.l.b16 %v56
    %v2057 = vunpack.c.l.b16 %v57
    %v2058 = vpack.c.b16 %v2055, %v2054
    %v2059 = vpack.c.b16 %v2057, %v2056
    %v2061 = vsel %vm1387, %v2058, 0
    %v2064 = vsel %vm1387, %v2059, 0
    %2066 = vmatprep.subr.bf16.mxu0 0
    %2067 = vmatpush1.bf16.msra.mxu0 %v1786
    %2068 = vmatprep.subr.bf16.mxu0 0
    %2069 = vmatpush1.bf16.msra.mxu0 0
    %2070 = vmatprep.subr.bf16.mxu0 0
    %2071 = vmatpush1.bf16.msra.mxu0 0
    %2072 = vmatprep.subr.bf16.mxu0 0
    %2073 = vmatpush1.bf16.msra.mxu0 0
    %2074 = vmatprep.subr.bf16.mxu0 0
    %2075 = vmatpush1.bf16.msra.mxu0 0
    %2076 = vmatprep.subr.bf16.mxu0 0
    %2077 = vmatpush1.bf16.msra.mxu0 0
    %2078 = vmatprep.subr.bf16.mxu0 0
    %2079 = vmatpush1.bf16.msra.mxu0 0
    %2080 = vmatprep.subr.bf16.mxu0 0
    %2081 = vmatpush1.bf16.msra.mxu0 0
    %2082 = vmatprep.subr.bf16.mxu0 0
    %2083 = vmatpush1.bf16.msra.mxu0 0
    %2084 = vmatprep.subr.bf16.mxu0 0
    %2085 = vmatpush1.bf16.msra.mxu0 0
    %2086 = vmatprep.subr.bf16.mxu0 0
    %2087 = vmatpush1.bf16.msra.mxu0 0
    %2088 = vmatprep.subr.bf16.mxu0 0
    %2089 = vmatpush1.bf16.msra.mxu0 0
    %2090 = vmatprep.subr.bf16.mxu0 0
    %2091 = vmatpush1.bf16.msra.mxu0 0
    %2092 = vmatprep.subr.bf16.mxu0 0
    %2093 = vmatpush1.bf16.msra.mxu0 0
    %2094 = vmatprep.subr.bf16.mxu0 0
    %2095 = vmatpush1.bf16.msra.mxu0 0
    %2096 = vmatprep.subr.bf16.mxu0 0
    %2097 = vmatpush1.bf16.msra.mxu0 0
    %2098 = vmatprep.mubr.bf16.mxu0 0
    %2099 = vmatmul.mubr.bf16.gmra.mrb[0].mxu0 %v2061
    %v2100 = vpop.f32.mrb[0].mxu0
    %v2101 = vadd.f32 0.0, %v2100
    %v2102 = vpop.f32.mrb[0].mxu0
    %v2103 = vpop.f32.mrb[0].mxu0
    %v2104 = vadd.f32 0.0, %v2103
    %v2105 = vpop.f32.mrb[0].mxu0
    %2106 = vmatprep.mubr.bf16.mxu0 0
    %2107 = vmatmul.mubr.bf16.gmra.mrb[0].mxu0 %v2064
    %v2108 = vpop.f32.mrb[0].mxu0
    %v2109 = vadd.f32 0.0, %v2108
    %v2110 = vpop.f32.mrb[0].mxu0
    %v2111 = vpop.f32.mrb[0].mxu0
    %v2112 = vadd.f32 0.0, %v2111
    %v2113 = vpop.f32.mrb[0].mxu0
    %2114 = vdwg.mxu0
    %v2119 = vunpack.c.l.b16 %v58
    %v2120 = vunpack.c.l.b16 %v59
    %v2121 = vunpack.c.l.b16 %v60
    %v2122 = vunpack.c.l.b16 %v61
    %v2123 = vpack.c.b16 %v2120, %v2119
    %v2124 = vpack.c.b16 %v2122, %v2121
    %v2126 = vsel %vm1387, %v2123, 0
    %v2129 = vsel %vm1387, %v2124, 0
    %2131 = vmatprep.subr.bf16.mxu0 0
    %2132 = vmatpush1.bf16.msra.mxu0 %v1787
    %2133 = vmatprep.subr.bf16.mxu0 0
    %2134 = vmatpush1.bf16.msra.mxu0 0
    %2135 = vmatprep.subr.bf16.mxu0 0
    %2136 = vmatpush1.bf16.msra.mxu0 0
    %2137 = vmatprep.subr.bf16.mxu0 0
    %2138 = vmatpush1.bf16.msra.mxu0 0
    %2139 = vmatprep.subr.bf16.mxu0 0
    %2140 = vmatpush1.bf16.msra.mxu0 0
    %2141 = vmatprep.subr.bf16.mxu0 0
    %2142 = vmatpush1.bf16.msra.mxu0 0
    %2143 = vmatprep.subr.bf16.mxu0 0
    %2144 = vmatpush1.bf16.msra.mxu0 0
    %2145 = vmatprep.subr.bf16.mxu0 0
    %2146 = vmatpush1.bf16.msra.mxu0 0
    %2147 = vmatprep.subr.bf16.mxu0 0
    %2148 = vmatpush1.bf16.msra.mxu0 0
    %2149 = vmatprep.subr.bf16.mxu0 0
    %2150 = vmatpush1.bf16.msra.mxu0 0
    %2151 = vmatprep.subr.bf16.mxu0 0
    %2152 = vmatpush1.bf16.msra.mxu0 0
    %2153 = vmatprep.subr.bf16.mxu0 0
    %2154 = vmatpush1.bf16.msra.mxu0 0
    %2155 = vmatprep.subr.bf16.mxu0 0
    %2156 = vmatpush1.bf16.msra.mxu0 0
    %2157 = vmatprep.subr.bf16.mxu0 0
    %2158 = vmatpush1.bf16.msra.mxu0 0
    %2159 = vmatprep.subr.bf16.mxu0 0
    %2160 = vmatpush1.bf16.msra.mxu0 0
    %2161 = vmatprep.subr.bf16.mxu0 0
    %2162 = vmatpush1.bf16.msra.mxu0 0
    %2163 = vmatprep.mubr.bf16.mxu0 0
    %2164 = vmatmul.mubr.bf16.gmra.mrb[0].mxu0 %v2126
    %v2165 = vpop.f32.mrb[0].mxu0
    %v2166 = vadd.f32 0.0, %v2165
    %v2167 = vpop.f32.mrb[0].mxu0
    %v2168 = vpop.f32.mrb[0].mxu0
    %v2169 = vadd.f32 0.0, %v2168
    %v2170 = vpop.f32.mrb[0].mxu0
    %2171 = vmatprep.mubr.bf16.mxu0 0
    %2172 = vmatmul.mubr.bf16.gmra.mrb[0].mxu0 %v2129
    %v2173 = vpop.f32.mrb[0].mxu0
    %v2174 = vadd.f32 0.0, %v2173
    %v2175 = vpop.f32.mrb[0].mxu0
    %v2176 = vpop.f32.mrb[0].mxu0
    %v2177 = vadd.f32 0.0, %v2176
    %v2178 = vpop.f32.mrb[0].mxu0
    %2179 = vdwg.mxu0
    %v2184 = vunpack.c.l.b16 %v62
    %v2185 = vunpack.c.l.b16 %v63
    %v2186 = vunpack.c.l.b16 %v64
    %v2187 = vunpack.c.l.b16 %v65
    %v2188 = vpack.c.b16 %v2185, %v2184
    %v2189 = vpack.c.b16 %v2187, %v2186
    %v2191 = vsel %vm1387, %v2188, 0
    %v2194 = vsel %vm1387, %v2189, 0
    %2196 = vmatprep.subr.bf16.mxu0 0
    %2197 = vmatpush1.bf16.msra.mxu0 %v1788
    %2198 = vmatprep.subr.bf16.mxu0 0
    %2199 = vmatpush1.bf16.msra.mxu0 0
    %2200 = vmatprep.subr.bf16.mxu0 0
    %2201 = vmatpush1.bf16.msra.mxu0 0
    %2202 = vmatprep.subr.bf16.mxu0 0
    %2203 = vmatpush1.bf16.msra.mxu0 0
    %2204 = vmatprep.subr.bf16.mxu0 0
    %2205 = vmatpush1.bf16.msra.mxu0 0
    %2206 = vmatprep.subr.bf16.mxu0 0
    %2207 = vmatpush1.bf16.msra.mxu0 0
    %2208 = vmatprep.subr.bf16.mxu0 0
    %2209 = vmatpush1.bf16.msra.mxu0 0
    %2210 = vmatprep.subr.bf16.mxu0 0
    %2211 = vmatpush1.bf16.msra.mxu0 0
    %2212 = vmatprep.subr.bf16.mxu0 0
    %2213 = vmatpush1.bf16.msra.mxu0 0
    %2214 = vmatprep.subr.bf16.mxu0 0
    %2215 = vmatpush1.bf16.msra.mxu0 0
    %2216 = vmatprep.subr.bf16.mxu0 0
    %2217 = vmatpush1.bf16.msra.mxu0 0
    %2218 = vmatprep.subr.bf16.mxu0 0
    %2219 = vmatpush1.bf16.msra.mxu0 0
    %2220 = vmatprep.subr.bf16.mxu0 0
    %2221 = vmatpush1.bf16.msra.mxu0 0
    %2222 = vmatprep.subr.bf16.mxu0 0
    %2223 = vmatpush1.bf16.msra.mxu0 0
    %2224 = vmatprep.subr.bf16.mxu0 0
    %2225 = vmatpush1.bf16.msra.mxu0 0
    %2226 = vmatprep.subr.bf16.mxu0 0
    %2227 = vmatpush1.bf16.msra.mxu0 0
    %2228 = vmatprep.mubr.bf16.mxu0 0
    %2229 = vmatmul.mubr.bf16.gmra.mrb[0].mxu0 %v2191
    %v2230 = vpop.f32.mrb[0].mxu0
    %v2231 = vadd.f32 0.0, %v2230
    %v2232 = vpop.f32.mrb[0].mxu0
    %v2233 = vpop.f32.mrb[0].mxu0
    %v2234 = vadd.f32 0.0, %v2233
    %v2235 = vpop.f32.mrb[0].mxu0
    %2236 = vmatprep.mubr.bf16.mxu0 0
    %2237 = vmatmul.mubr.bf16.gmra.mrb[0].mxu0 %v2194
    %v2238 = vpop.f32.mrb[0].mxu0
    %v2239 = vadd.f32 0.0, %v2238
    %v2240 = vpop.f32.mrb[0].mxu0
    %v2241 = vpop.f32.mrb[0].mxu0
    %v2242 = vadd.f32 0.0, %v2241
    %v2243 = vpop.f32.mrb[0].mxu0
    %2244 = vdwg.mxu0
    %v2249 = vunpack.c.l.b16 %v66
    %v2250 = vunpack.c.l.b16 %v67
    %v2251 = vunpack.c.l.b16 %v68
    %v2252 = vunpack.c.l.b16 %v69
    %v2253 = vpack.c.b16 %v2250, %v2249
    %v2254 = vpack.c.b16 %v2252, %v2251
    %v2256 = vsel %vm1387, %v2253, 0
    %v2259 = vsel %vm1387, %v2254, 0
    %2261 = vmatprep.subr.bf16.mxu0 0
    %2262 = vmatpush1.bf16.msra.mxu0 %v1789
    %2263 = vmatprep.subr.bf16.mxu0 0
    %2264 = vmatpush1.bf16.msra.mxu0 0
    %2265 = vmatprep.subr.bf16.mxu0 0
    %2266 = vmatpush1.bf16.msra.mxu0 0
    %2267 = vmatprep.subr.bf16.mxu0 0
    %2268 = vmatpush1.bf16.msra.mxu0 0
    %2269 = vmatprep.subr.bf16.mxu0 0
    %2270 = vmatpush1.bf16.msra.mxu0 0
    %2271 = vmatprep.subr.bf16.mxu0 0
    %2272 = vmatpush1.bf16.msra.mxu0 0
    %2273 = vmatprep.subr.bf16.mxu0 0
    %2274 = vmatpush1.bf16.msra.mxu0 0
    %2275 = vmatprep.subr.bf16.mxu0 0
    %2276 = vmatpush1.bf16.msra.mxu0 0
    %2277 = vmatprep.subr.bf16.mxu0 0
    %2278 = vmatpush1.bf16.msra.mxu0 0
    %2279 = vmatprep.subr.bf16.mxu0 0
    %2280 = vmatpush1.bf16.msra.mxu0 0
    %2281 = vmatprep.subr.bf16.mxu0 0
    %2282 = vmatpush1.bf16.msra.mxu0 0
    %2283 = vmatprep.subr.bf16.mxu0 0
    %2284 = vmatpush1.bf16.msra.mxu0 0
    %2285 = vmatprep.subr.bf16.mxu0 0
    %2286 = vmatpush1.bf16.msra.mxu0 0
    %2287 = vmatprep.subr.bf16.mxu0 0
    %2288 = vmatpush1.bf16.msra.mxu0 0
    %2289 = vmatprep.subr.bf16.mxu0 0
    %2290 = vmatpush1.bf16.msra.mxu0 0
    %2291 = vmatprep.subr.bf16.mxu0 0
    %2292 = vmatpush1.bf16.msra.mxu0 0
    %2293 = vmatprep.mubr.bf16.mxu0 0
    %2294 = vmatmul.mubr.bf16.gmra.mrb[0].mxu0 %v2256
    %v2295 = vpop.f32.mrb[0].mxu0
    %v2296 = vadd.f32 0.0, %v2295
    %v2297 = vpop.f32.mrb[0].mxu0
    %v2298 = vpop.f32.mrb[0].mxu0
    %v2299 = vadd.f32 0.0, %v2298
    %v2300 = vpop.f32.mrb[0].mxu0
    %2301 = vmatprep.mubr.bf16.mxu0 0
    %2302 = vmatmul.mubr.bf16.gmra.mrb[0].mxu0 %v2259
    %v2303 = vpop.f32.mrb[0].mxu0
    %v2304 = vadd.f32 0.0, %v2303
    %v2305 = vpop.f32.mrb[0].mxu0
    %v2306 = vpop.f32.mrb[0].mxu0
    %v2307 = vadd.f32 0.0, %v2306
    %v2308 = vpop.f32.mrb[0].mxu0
    %2309 = vdwg.mxu0
    %vm2310 = vcmask 261120
    %2311 = vst.msk [vmem:[#allocation2] sm:$0xff] %vm2310, %v1841
    %2312 = vst.msk [vmem:[#allocation2 + $0x8] sm:$0xff] %vm2310, %v1844
    %2313 = vst.msk [vmem:[#allocation2 + $0x10] sm:$0xff] %vm2310, %v1849
    %2314 = vst.msk [vmem:[#allocation2 + $0x18] sm:$0xff] %vm2310, %v1852
    %2315 = vst.msk [vmem:[#allocation2 + $0x20] sm:$0xff] %vm2310, %v1906
    %2316 = vst.msk [vmem:[#allocation2 + $0x28] sm:$0xff] %vm2310, %v1909
    %2317 = vst.msk [vmem:[#allocation2 + $0x30] sm:$0xff] %vm2310, %v1914
    %2318 = vst.msk [vmem:[#allocation2 + $0x38] sm:$0xff] %vm2310, %v1917
    %2319 = vst.msk [vmem:[#allocation2 + $0x40] sm:$0xff] %vm2310, %v1971
    %2320 = vst.msk [vmem:[#allocation2 + $0x48] sm:$0xff] %vm2310, %v1974
    %2321 = vst.msk [vmem:[#allocation2 + $0x50] sm:$0xff] %vm2310, %v1979
    %2322 = vst.msk [vmem:[#allocation2 + $0x58] sm:$0xff] %vm2310, %v1982
    %2323 = vst.msk [vmem:[#allocation2 + $0x60] sm:$0xff] %vm2310, %v2036
    %2324 = vst.msk [vmem:[#allocation2 + $0x68] sm:$0xff] %vm2310, %v2039
    %2325 = vst.msk [vmem:[#allocation2 + $0x70] sm:$0xff] %vm2310, %v2044
    %2326 = vst.msk [vmem:[#allocation2 + $0x78] sm:$0xff] %vm2310, %v2047
    %2327 = vst.msk [vmem:[#allocation2 + $0x80] sm:$0xff] %vm2310, %v2101
    %2328 = vst.msk [vmem:[#allocation2 + $0x88] sm:$0xff] %vm2310, %v2104
    %2329 = vst.msk [vmem:[#allocation2 + $0x90] sm:$0xff] %vm2310, %v2109
    %2330 = vst.msk [vmem:[#allocation2 + $0x98] sm:$0xff] %vm2310, %v2112
    %2331 = vst.msk [vmem:[#allocation2 + $0xa0] sm:$0xff] %vm2310, %v2166
    %2332 = vst.msk [vmem:[#allocation2 + $0xa8] sm:$0xff] %vm2310, %v2169
    %2333 = vst.msk [vmem:[#allocation2 + $0xb0] sm:$0xff] %vm2310, %v2174
    %2334 = vst.msk [vmem:[#allocation2 + $0xb8] sm:$0xff] %vm2310, %v2177
    %2335 = vst.msk [vmem:[#allocation2 + $0xc0] sm:$0xff] %vm2310, %v2231
    %2336 = vst.msk [vmem:[#allocation2 + $0xc8] sm:$0xff] %vm2310, %v2234
    %2337 = vst.msk [vmem:[#allocation2 + $0xd0] sm:$0xff] %vm2310, %v2239
    %2338 = vst.msk [vmem:[#allocation2 + $0xd8] sm:$0xff] %vm2310, %v2242
    %2339 = vst.msk [vmem:[#allocation2 + $0xe0] sm:$0xff] %vm2310, %v2296
    %2340 = vst.msk [vmem:[#allocation2 + $0xe8] sm:$0xff] %vm2310, %v2299
    %2341 = vst.msk [vmem:[#allocation2 + $0xf0] sm:$0xff] %vm2310, %v2304
    %2342 = vst.msk [vmem:[#allocation2 + $0xf8] sm:$0xff] %vm2310, %v2307
    %s2343 = scalar_lea.vmem %s0, 6
    %v2344 = vld [vmem:[%s2343] sm:$0x3f]
    %v2345 = vld [vmem:[%s1] sm:$0xf]
    %v2346 = vld [vmem:[%s73] sm:$0xf]
    %v2348 = vcombine.high %v2344, %v2344
    %v2350 = vunpack.c.l.s4 1983009808
    %v2351 = vunpack.c.0.s8 %v2350
    %v2352 = vlaneseq
    %v2353 = vshrl.u32 %v2352, 7
    %v2354 = vsub.s32 %v2351, %v2353
    %v2355 = vrot.slane %v2344, %v2354
    %v2357 = vunpack.c.l.s4 1983009808
    %v2358 = vunpack.c.0.s8 %v2357
    %v2359 = vlaneseq
    %v2360 = vshrl.u32 %v2359, 7
    %v2361 = vsub.s32 %v2358, %v2360
    %v2362 = vrot.slane %v2348, %v2361
    %v2363 = vcombine.high %v2355, %v2355
    %2364 = vrot.lane.b32.xlu0 %v2355, 127
    %v2365 = vpop.permute.xlu0 %2364
    %2366 = vrot.lane.b32.xlu0 %v2363, 127
    %v2367 = vpop.permute.xlu0 %2366
    %2368 = vrot.lane.b32.xlu0 %v2362, 127
    %v2369 = vpop.permute.xlu0 %2368
    %v2370 = vsel %vm98, %v2365, %v2367
    %v2371 = vsel %vm98, %v2367, %v2369
    %v2373 = vsel %vm101, %v2346, 0
    %v2376 = vsel %vm105, %v2370, 0
    %v2379 = vsel %vm105, %v2371, 0
    %v2382 = vsel %vm105, %v2369, 0
    %2384 = vmatprep.subr.bf16.mxu0 %v2379
    %2385 = vmatpush1.bf16.msra.mxu0 %v2376
    %2386 = vmatprep.subr.bf16.mxu0 0
    %2387 = vmatpush1.bf16.msra.mxu0 0
    %2388 = vmatprep.subr.bf16.mxu0 0
    %2389 = vmatpush1.bf16.msra.mxu0 0
    %2390 = vmatprep.subr.bf16.mxu0 0
    %2391 = vmatpush1.bf16.msra.mxu0 0
    %2392 = vmatprep.subr.bf16.mxu0 0
    %2393 = vmatpush1.bf16.msra.mxu0 0
    %2394 = vmatprep.subr.bf16.mxu0 0
    %2395 = vmatpush1.bf16.msra.mxu0 0
    %2396 = vmatprep.subr.bf16.mxu0 0
    %2397 = vmatpush1.bf16.msra.mxu0 0
    %2398 = vmatprep.subr.bf16.mxu0 0
    %2399 = vmatpush1.bf16.msra.mxu0 0
    %2400 = vmatprep.subr.bf16.mxu0 0
    %2401 = vmatpush1.bf16.msra.mxu0 0
    %2402 = vmatprep.subr.bf16.mxu0 0
    %2403 = vmatpush1.bf16.msra.mxu0 0
    %2404 = vmatprep.subr.bf16.mxu0 0
    %2405 = vmatpush1.bf16.msra.mxu0 0
    %2406 = vmatprep.subr.bf16.mxu0 0
    %2407 = vmatpush1.bf16.msra.mxu0 0
    %2408 = vmatprep.subr.bf16.mxu0 0
    %2409 = vmatpush1.bf16.msra.mxu0 0
    %2410 = vmatprep.subr.bf16.mxu0 0
    %2411 = vmatpush1.bf16.msra.mxu0 0
    %2412 = vmatprep.subr.bf16.mxu0 0
    %2413 = vmatpush1.bf16.msra.mxu0 0
    %2414 = vmatprep.subr.bf16.mxu0 0
    %2415 = vmatpush1.bf16.msra.mxu0 0
    %2416 = vmatprep.mubr.bf16.mxu0 0
    %2417 = vmatmul.mubr.bf16.gmra.mrb[0].mxu0 %v2373
    %v2418 = vpop.f32.mrb[0].mxu0
    %v2419 = vadd.f32 0.0, %v2418
    %v2420 = vpop.f32.mrb[0].mxu0
    %v2421 = vadd.f32 0.0, %v2420
    %v2422 = vpop.f32.mrb[0].mxu0
    %v2423 = vpop.f32.mrb[0].mxu0
    %2424 = vdwg.mxu0
    %2425 = vmatprep.subr.bf16.mxu0 0
    %2426 = vmatpush1.bf16.msra.mxu0 %v2382
    %2427 = vmatprep.subr.bf16.mxu0 0
    %2428 = vmatpush1.bf16.msra.mxu0 0
    %2429 = vmatprep.subr.bf16.mxu0 0
    %2430 = vmatpush1.bf16.msra.mxu0 0
    %2431 = vmatprep.subr.bf16.mxu0 0
    %2432 = vmatpush1.bf16.msra.mxu0 0
    %2433 = vmatprep.subr.bf16.mxu0 0
    %2434 = vmatpush1.bf16.msra.mxu0 0
    %2435 = vmatprep.subr.bf16.mxu0 0
    %2436 = vmatpush1.bf16.msra.mxu0 0
    %2437 = vmatprep.subr.bf16.mxu0 0
    %2438 = vmatpush1.bf16.msra.mxu0 0
    %2439 = vmatprep.subr.bf16.mxu0 0
    %2440 = vmatpush1.bf16.msra.mxu0 0
    %2441 = vmatprep.subr.bf16.mxu0 0
    %2442 = vmatpush1.bf16.msra.mxu0 0
    %2443 = vmatprep.subr.bf16.mxu0 0
    %2444 = vmatpush1.bf16.msra.mxu0 0
    %2445 = vmatprep.subr.bf16.mxu0 0
    %2446 = vmatpush1.bf16.msra.mxu0 0
    %2447 = vmatprep.subr.bf16.mxu0 0
    %2448 = vmatpush1.bf16.msra.mxu0 0
    %2449 = vmatprep.subr.bf16.mxu0 0
    %2450 = vmatpush1.bf16.msra.mxu0 0
    %2451 = vmatprep.subr.bf16.mxu0 0
    %2452 = vmatpush1.bf16.msra.mxu0 0
    %2453 = vmatprep.subr.bf16.mxu0 0
    %2454 = vmatpush1.bf16.msra.mxu0 0
    %2455 = vmatprep.subr.bf16.mxu0 0
    %2456 = vmatpush1.bf16.msra.mxu0 0
    %2457 = vmatprep.mubr.bf16.mxu0 0
    %2458 = vmatmul.mubr.bf16.gmra.mrb[0].mxu0 %v2373
    %v2459 = vpop.f32.mrb[0].mxu0
    %v2460 = vadd.f32 0.0, %v2459
    %v2461 = vpop.f32.mrb[0].mxu0
    %v2462 = vpop.f32.mrb[0].mxu0
    %v2463 = vpop.f32.mrb[0].mxu0
    %2464 = vdwg.mxu0
    %v2466 = vsel %vm101, %v2345, 0
    %v2469 = vsel %vm105, %v2355, 0
    %v2472 = vsel %vm105, %v2363, 0
    %v2475 = vsel %vm105, %v2362, 0
    %2477 = vmatprep.subr.bf16.mxu0 %v2472
    %2478 = vmatpush1.bf16.msra.mxu0 %v2469
    %2479 = vmatprep.subr.bf16.mxu0 0
    %2480 = vmatpush1.bf16.msra.mxu0 0
    %2481 = vmatprep.subr.bf16.mxu0 0
    %2482 = vmatpush1.bf16.msra.mxu0 0
    %2483 = vmatprep.subr.bf16.mxu0 0
    %2484 = vmatpush1.bf16.msra.mxu0 0
    %2485 = vmatprep.subr.bf16.mxu0 0
    %2486 = vmatpush1.bf16.msra.mxu0 0
    %2487 = vmatprep.subr.bf16.mxu0 0
    %2488 = vmatpush1.bf16.msra.mxu0 0
    %2489 = vmatprep.subr.bf16.mxu0 0
    %2490 = vmatpush1.bf16.msra.mxu0 0
    %2491 = vmatprep.subr.bf16.mxu0 0
    %2492 = vmatpush1.bf16.msra.mxu0 0
    %2493 = vmatprep.subr.bf16.mxu0 0
    %2494 = vmatpush1.bf16.msra.mxu0 0
    %2495 = vmatprep.subr.bf16.mxu0 0
    %2496 = vmatpush1.bf16.msra.mxu0 0
    %2497 = vmatprep.subr.bf16.mxu0 0
    %2498 = vmatpush1.bf16.msra.mxu0 0
    %2499 = vmatprep.subr.bf16.mxu0 0
    %2500 = vmatpush1.bf16.msra.mxu0 0
    %2501 = vmatprep.subr.bf16.mxu0 0
    %2502 = vmatpush1.bf16.msra.mxu0 0
    %2503 = vmatprep.subr.bf16.mxu0 0
    %2504 = vmatpush1.bf16.msra.mxu0 0
    %2505 = vmatprep.subr.bf16.mxu0 0
    %2506 = vmatpush1.bf16.msra.mxu0 0
    %2507 = vmatprep.subr.bf16.mxu0 0
    %2508 = vmatpush1.bf16.msra.mxu0 0
    %2509 = vmatprep.mubr.bf16.mxu0 0
    %2510 = vmatmul.mubr.bf16.gmra.mrb[0].mxu0 %v2466
    %v2511 = vpop.f32.mrb[0].mxu0
    %v2512 = vadd.f32 %v2419, %v2511
    %v2513 = vpop.f32.mrb[0].mxu0
    %v2514 = vadd.f32 %v2421, %v2513
    %v2515 = vpop.f32.mrb[0].mxu0
    %v2516 = vpop.f32.mrb[0].mxu0
    %2517 = vdwg.mxu0
    %2518 = vmatprep.subr.bf16.mxu0 0
    %2519 = vmatpush1.bf16.msra.mxu0 %v2475
    %2520 = vmatprep.subr.bf16.mxu0 0
    %2521 = vmatpush1.bf16.msra.mxu0 0
    %2522 = vmatprep.subr.bf16.mxu0 0
    %2523 = vmatpush1.bf16.msra.mxu0 0
    %2524 = vmatprep.subr.bf16.mxu0 0
    %2525 = vmatpush1.bf16.msra.mxu0 0
    %2526 = vmatprep.subr.bf16.mxu0 0
    %2527 = vmatpush1.bf16.msra.mxu0 0
    %2528 = vmatprep.subr.bf16.mxu0 0
    %2529 = vmatpush1.bf16.msra.mxu0 0
    %2530 = vmatprep.subr.bf16.mxu0 0
    %2531 = vmatpush1.bf16.msra.mxu0 0
    %2532 = vmatprep.subr.bf16.mxu0 0
    %2533 = vmatpush1.bf16.msra.mxu0 0
    %2534 = vmatprep.subr.bf16.mxu0 0
    %2535 = vmatpush1.bf16.msra.mxu0 0
    %2536 = vmatprep.subr.bf16.mxu0 0
    %2537 = vmatpush1.bf16.msra.mxu0 0
    %2538 = vmatprep.subr.bf16.mxu0 0
    %2539 = vmatpush1.bf16.msra.mxu0 0
    %2540 = vmatprep.subr.bf16.mxu0 0
    %2541 = vmatpush1.bf16.msra.mxu0 0
    %2542 = vmatprep.subr.bf16.mxu0 0
    %2543 = vmatpush1.bf16.msra.mxu0 0
    %2544 = vmatprep.subr.bf16.mxu0 0
    %2545 = vmatpush1.bf16.msra.mxu0 0
    %2546 = vmatprep.subr.bf16.mxu0 0
    %2547 = vmatpush1.bf16.msra.mxu0 0
    %2548 = vmatprep.subr.bf16.mxu0 0
    %2549 = vmatpush1.bf16.msra.mxu0 0
    %2550 = vmatprep.mubr.bf16.mxu0 0
    %2551 = vmatmul.mubr.bf16.gmra.mrb[0].mxu0 %v2466
    %v2552 = vpop.f32.mrb[0].mxu0
    %v2553 = vadd.f32 %v2460, %v2552
    %v2554 = vpop.f32.mrb[0].mxu0
    %v2555 = vpop.f32.mrb[0].mxu0
    %v2556 = vpop.f32.mrb[0].mxu0
    %2557 = vdwg.mxu0
    %v2558 = vld [vmem:[%s289] sm:$0xf]
    %2559 = vrot.lane.b32.xlu0 %v2355, 126
    %v2560 = vpop.permute.xlu0 %2559
    %2561 = vrot.lane.b32.xlu0 %v2363, 126
    %v2562 = vpop.permute.xlu0 %2561
    %2563 = vrot.lane.b32.xlu0 %v2362, 126
    %v2564 = vpop.permute.xlu0 %2563
    %v2565 = vsel %vm297, %v2560, %v2562
    %v2566 = vsel %vm297, %v2562, %v2564
    %v2568 = vsel %vm101, %v2558, 0
    %v2571 = vsel %vm105, %v2565, 0
    %v2574 = vsel %vm105, %v2566, 0
    %v2577 = vsel %vm105, %v2564, 0
    %2579 = vmatprep.subr.bf16.mxu0 %v2574
    %2580 = vmatpush1.bf16.msra.mxu0 %v2571
    %2581 = vmatprep.subr.bf16.mxu0 0
    %2582 = vmatpush1.bf16.msra.mxu0 0
    %2583 = vmatprep.subr.bf16.mxu0 0
    %2584 = vmatpush1.bf16.msra.mxu0 0
    %2585 = vmatprep.subr.bf16.mxu0 0
    %2586 = vmatpush1.bf16.msra.mxu0 0
    %2587 = vmatprep.subr.bf16.mxu0 0
    %2588 = vmatpush1.bf16.msra.mxu0 0
    %2589 = vmatprep.subr.bf16.mxu0 0
    %2590 = vmatpush1.bf16.msra.mxu0 0
    %2591 = vmatprep.subr.bf16.mxu0 0
    %2592 = vmatpush1.bf16.msra.mxu0 0
    %2593 = vmatprep.subr.bf16.mxu0 0
    %2594 = vmatpush1.bf16.msra.mxu0 0
    %2595 = vmatprep.subr.bf16.mxu0 0
    %2596 = vmatpush1.bf16.msra.mxu0 0
    %2597 = vmatprep.subr.bf16.mxu0 0
    %2598 = vmatpush1.bf16.msra.mxu0 0
    %2599 = vmatprep.subr.bf16.mxu0 0
    %2600 = vmatpush1.bf16.msra.mxu0 0
    %2601 = vmatprep.subr.bf16.mxu0 0
    %2602 = vmatpush1.bf16.msra.mxu0 0
    %2603 = vmatprep.subr.bf16.mxu0 0
    %2604 = vmatpush1.bf16.msra.mxu0 0
    %2605 = vmatprep.subr.bf16.mxu0 0
    %2606 = vmatpush1.bf16.msra.mxu0 0
    %2607 = vmatprep.subr.bf16.mxu0 0
    %2608 = vmatpush1.bf16.msra.mxu0 0
    %2609 = vmatprep.subr.bf16.mxu0 0
    %2610 = vmatpush1.bf16.msra.mxu0 0
    %2611 = vmatprep.mubr.bf16.mxu0 0
    %2612 = vmatmul.mubr.bf16.gmra.mrb[0].mxu0 %v2568
    %v2613 = vpop.f32.mrb[0].mxu0
    %v2614 = vadd.f32 0.0, %v2613
    %v2615 = vpop.f32.mrb[0].mxu0
    %v2616 = vadd.f32 0.0, %v2615
    %v2617 = vpop.f32.mrb[0].mxu0
    %v2618 = vpop.f32.mrb[0].mxu0
    %2619 = vdwg.mxu0
    %2620 = vmatprep.subr.bf16.mxu0 0
    %2621 = vmatpush1.bf16.msra.mxu0 %v2577
    %2622 = vmatprep.subr.bf16.mxu0 0
    %2623 = vmatpush1.bf16.msra.mxu0 0
    %2624 = vmatprep.subr.bf16.mxu0 0
    %2625 = vmatpush1.bf16.msra.mxu0 0
    %2626 = vmatprep.subr.bf16.mxu0 0
    %2627 = vmatpush1.bf16.msra.mxu0 0
    %2628 = vmatprep.subr.bf16.mxu0 0
    %2629 = vmatpush1.bf16.msra.mxu0 0
    %2630 = vmatprep.subr.bf16.mxu0 0
    %2631 = vmatpush1.bf16.msra.mxu0 0
    %2632 = vmatprep.subr.bf16.mxu0 0
    %2633 = vmatpush1.bf16.msra.mxu0 0
    %2634 = vmatprep.subr.bf16.mxu0 0
    %2635 = vmatpush1.bf16.msra.mxu0 0
    %2636 = vmatprep.subr.bf16.mxu0 0
    %2637 = vmatpush1.bf16.msra.mxu0 0
    %2638 = vmatprep.subr.bf16.mxu0 0
    %2639 = vmatpush1.bf16.msra.mxu0 0
    %2640 = vmatprep.subr.bf16.mxu0 0
    %2641 = vmatpush1.bf16.msra.mxu0 0
    %2642 = vmatprep.subr.bf16.mxu0 0
    %2643 = vmatpush1.bf16.msra.mxu0 0
    %2644 = vmatprep.subr.bf16.mxu0 0
    %2645 = vmatpush1.bf16.msra.mxu0 0
    %2646 = vmatprep.subr.bf16.mxu0 0
    %2647 = vmatpush1.bf16.msra.mxu0 0
    %2648 = vmatprep.subr.bf16.mxu0 0
    %2649 = vmatpush1.bf16.msra.mxu0 0
    %2650 = vmatprep.subr.bf16.mxu0 0
    %2651 = vmatpush1.bf16.msra.mxu0 0
    %2652 = vmatprep.mubr.bf16.mxu0 0
    %2653 = vmatmul.mubr.bf16.gmra.mrb[0].mxu0 %v2568
    %v2654 = vpop.f32.mrb[0].mxu0
    %v2655 = vadd.f32 0.0, %v2654
    %v2656 = vpop.f32.mrb[0].mxu0
    %v2657 = vpop.f32.mrb[0].mxu0
    %v2658 = vpop.f32.mrb[0].mxu0
    %2659 = vdwg.mxu0
    %v2660 = vadd.f32 %v2512, %v2614
    %v2661 = vadd.f32 %v2514, %v2616
    %v2662 = vadd.f32 %v2553, %v2655
    %v2663 = vld [vmem:[%s396] sm:$0xf]
    %2664 = vrot.lane.b32.xlu0 %v2355, 110
    %v2665 = vpop.permute.xlu0 %2664
    %2666 = vrot.lane.b32.xlu0 %v2363, 110
    %v2667 = vpop.permute.xlu0 %2666
    %2668 = vrot.lane.b32.xlu0 %v2362, 110
    %v2669 = vpop.permute.xlu0 %2668
    %v2670 = vsel %vm404, %v2665, %v2667
    %v2671 = vsel %vm404, %v2667, %v2669
    %v2673 = vsel %vm101, %v2663, 0
    %v2676 = vsel %vm105, %v2670, 0
    %v2679 = vsel %vm105, %v2671, 0
    %v2682 = vsel %vm105, %v2669, 0
    %2684 = vmatprep.subr.bf16.mxu0 %v2679
    %2685 = vmatpush1.bf16.msra.mxu0 %v2676
    %2686 = vmatprep.subr.bf16.mxu0 0
    %2687 = vmatpush1.bf16.msra.mxu0 0
    %2688 = vmatprep.subr.bf16.mxu0 0
    %2689 = vmatpush1.bf16.msra.mxu0 0
    %2690 = vmatprep.subr.bf16.mxu0 0
    %2691 = vmatpush1.bf16.msra.mxu0 0
    %2692 = vmatprep.subr.bf16.mxu0 0
    %2693 = vmatpush1.bf16.msra.mxu0 0
    %2694 = vmatprep.subr.bf16.mxu0 0
    %2695 = vmatpush1.bf16.msra.mxu0 0
    %2696 = vmatprep.subr.bf16.mxu0 0
    %2697 = vmatpush1.bf16.msra.mxu0 0
    %2698 = vmatprep.subr.bf16.mxu0 0
    %2699 = vmatpush1.bf16.msra.mxu0 0
    %2700 = vmatprep.subr.bf16.mxu0 0
    %2701 = vmatpush1.bf16.msra.mxu0 0
    %2702 = vmatprep.subr.bf16.mxu0 0
    %2703 = vmatpush1.bf16.msra.mxu0 0
    %2704 = vmatprep.subr.bf16.mxu0 0
    %2705 = vmatpush1.bf16.msra.mxu0 0
    %2706 = vmatprep.subr.bf16.mxu0 0
    %2707 = vmatpush1.bf16.msra.mxu0 0
    %2708 = vmatprep.subr.bf16.mxu0 0
    %2709 = vmatpush1.bf16.msra.mxu0 0
    %2710 = vmatprep.subr.bf16.mxu0 0
    %2711 = vmatpush1.bf16.msra.mxu0 0
    %2712 = vmatprep.subr.bf16.mxu0 0
    %2713 = vmatpush1.bf16.msra.mxu0 0
    %2714 = vmatprep.subr.bf16.mxu0 0
    %2715 = vmatpush1.bf16.msra.mxu0 0
    %2716 = vmatprep.mubr.bf16.mxu0 0
    %2717 = vmatmul.mubr.bf16.gmra.mrb[0].mxu0 %v2673
    %v2718 = vpop.f32.mrb[0].mxu0
    %v2719 = vadd.f32 0.0, %v2718
    %v2720 = vpop.f32.mrb[0].mxu0
    %v2721 = vadd.f32 0.0, %v2720
    %v2722 = vpop.f32.mrb[0].mxu0
    %v2723 = vpop.f32.mrb[0].mxu0
    %2724 = vdwg.mxu0
    %2725 = vmatprep.subr.bf16.mxu0 0
    %2726 = vmatpush1.bf16.msra.mxu0 %v2682
    %2727 = vmatprep.subr.bf16.mxu0 0
    %2728 = vmatpush1.bf16.msra.mxu0 0
    %2729 = vmatprep.subr.bf16.mxu0 0
    %2730 = vmatpush1.bf16.msra.mxu0 0
    %2731 = vmatprep.subr.bf16.mxu0 0
    %2732 = vmatpush1.bf16.msra.mxu0 0
    %2733 = vmatprep.subr.bf16.mxu0 0
    %2734 = vmatpush1.bf16.msra.mxu0 0
    %2735 = vmatprep.subr.bf16.mxu0 0
    %2736 = vmatpush1.bf16.msra.mxu0 0
    %2737 = vmatprep.subr.bf16.mxu0 0
    %2738 = vmatpush1.bf16.msra.mxu0 0
    %2739 = vmatprep.subr.bf16.mxu0 0
    %2740 = vmatpush1.bf16.msra.mxu0 0
    %2741 = vmatprep.subr.bf16.mxu0 0
    %2742 = vmatpush1.bf16.msra.mxu0 0
    %2743 = vmatprep.subr.bf16.mxu0 0
    %2744 = vmatpush1.bf16.msra.mxu0 0
    %2745 = vmatprep.subr.bf16.mxu0 0
    %2746 = vmatpush1.bf16.msra.mxu0 0
    %2747 = vmatprep.subr.bf16.mxu0 0
    %2748 = vmatpush1.bf16.msra.mxu0 0
    %2749 = vmatprep.subr.bf16.mxu0 0
    %2750 = vmatpush1.bf16.msra.mxu0 0
    %2751 = vmatprep.subr.bf16.mxu0 0
    %2752 = vmatpush1.bf16.msra.mxu0 0
    %2753 = vmatprep.subr.bf16.mxu0 0
    %2754 = vmatpush1.bf16.msra.mxu0 0
    %2755 = vmatprep.subr.bf16.mxu0 0
    %2756 = vmatpush1.bf16.msra.mxu0 0
    %2757 = vmatprep.mubr.bf16.mxu0 0
    %2758 = vmatmul.mubr.bf16.gmra.mrb[0].mxu0 %v2673
    %v2759 = vpop.f32.mrb[0].mxu0
    %v2760 = vadd.f32 0.0, %v2759
    %v2761 = vpop.f32.mrb[0].mxu0
    %v2762 = vpop.f32.mrb[0].mxu0
    %v2763 = vpop.f32.mrb[0].mxu0
    %2764 = vdwg.mxu0
    %v2765 = vadd.f32 %v2660, %v2719
    %v2766 = vadd.f32 %v2661, %v2721
    %v2767 = vadd.f32 %v2662, %v2760
    %v2768 = vld [vmem:[%s503] sm:$0xf]
    %2769 = vrot.lane.b32.xlu0 %v2355, 109
    %v2770 = vpop.permute.xlu0 %2769
    %2771 = vrot.lane.b32.xlu0 %v2363, 109
    %v2772 = vpop.permute.xlu0 %2771
    %2773 = vrot.lane.b32.xlu0 %v2362, 109
    %v2774 = vpop.permute.xlu0 %2773
    %v2775 = vsel %vm511, %v2770, %v2772
    %v2776 = vsel %vm511, %v2772, %v2774
    %v2778 = vsel %vm101, %v2768, 0
    %v2781 = vsel %vm105, %v2775, 0
    %v2784 = vsel %vm105, %v2776, 0
    %v2787 = vsel %vm105, %v2774, 0
    %2789 = vmatprep.subr.bf16.mxu0 %v2784
    %2790 = vmatpush1.bf16.msra.mxu0 %v2781
    %2791 = vmatprep.subr.bf16.mxu0 0
    %2792 = vmatpush1.bf16.msra.mxu0 0
    %2793 = vmatprep.subr.bf16.mxu0 0
    %2794 = vmatpush1.bf16.msra.mxu0 0
    %2795 = vmatprep.subr.bf16.mxu0 0
    %2796 = vmatpush1.bf16.msra.mxu0 0
    %2797 = vmatprep.subr.bf16.mxu0 0
    %2798 = vmatpush1.bf16.msra.mxu0 0
    %2799 = vmatprep.subr.bf16.mxu0 0
    %2800 = vmatpush1.bf16.msra.mxu0 0
    %2801 = vmatprep.subr.bf16.mxu0 0
    %2802 = vmatpush1.bf16.msra.mxu0 0
    %2803 = vmatprep.subr.bf16.mxu0 0
    %2804 = vmatpush1.bf16.msra.mxu0 0
    %2805 = vmatprep.subr.bf16.mxu0 0
    %2806 = vmatpush1.bf16.msra.mxu0 0
    %2807 = vmatprep.subr.bf16.mxu0 0
    %2808 = vmatpush1.bf16.msra.mxu0 0
    %2809 = vmatprep.subr.bf16.mxu0 0
    %2810 = vmatpush1.bf16.msra.mxu0 0
    %2811 = vmatprep.subr.bf16.mxu0 0
    %2812 = vmatpush1.bf16.msra.mxu0 0
    %2813 = vmatprep.subr.bf16.mxu0 0
    %2814 = vmatpush1.bf16.msra.mxu0 0
    %2815 = vmatprep.subr.bf16.mxu0 0
    %2816 = vmatpush1.bf16.msra.mxu0 0
    %2817 = vmatprep.subr.bf16.mxu0 0
    %2818 = vmatpush1.bf16.msra.mxu0 0
    %2819 = vmatprep.subr.bf16.mxu0 0
    %2820 = vmatpush1.bf16.msra.mxu0 0
    %2821 = vmatprep.mubr.bf16.mxu0 0
    %2822 = vmatmul.mubr.bf16.gmra.mrb[0].mxu0 %v2778
    %v2823 = vpop.f32.mrb[0].mxu0
    %v2824 = vadd.f32 0.0, %v2823
    %v2825 = vpop.f32.mrb[0].mxu0
    %v2826 = vadd.f32 0.0, %v2825
    %v2827 = vpop.f32.mrb[0].mxu0
    %v2828 = vpop.f32.mrb[0].mxu0
    %2829 = vdwg.mxu0
    %2830 = vmatprep.subr.bf16.mxu0 0
    %2831 = vmatpush1.bf16.msra.mxu0 %v2787
    %2832 = vmatprep.subr.bf16.mxu0 0
    %2833 = vmatpush1.bf16.msra.mxu0 0
    %2834 = vmatprep.subr.bf16.mxu0 0
    %2835 = vmatpush1.bf16.msra.mxu0 0
    %2836 = vmatprep.subr.bf16.mxu0 0
    %2837 = vmatpush1.bf16.msra.mxu0 0
    %2838 = vmatprep.subr.bf16.mxu0 0
    %2839 = vmatpush1.bf16.msra.mxu0 0
    %2840 = vmatprep.subr.bf16.mxu0 0
    %2841 = vmatpush1.bf16.msra.mxu0 0
    %2842 = vmatprep.subr.bf16.mxu0 0
    %2843 = vmatpush1.bf16.msra.mxu0 0
    %2844 = vmatprep.subr.bf16.mxu0 0
    %2845 = vmatpush1.bf16.msra.mxu0 0
    %2846 = vmatprep.subr.bf16.mxu0 0
    %2847 = vmatpush1.bf16.msra.mxu0 0
    %2848 = vmatprep.subr.bf16.mxu0 0
    %2849 = vmatpush1.bf16.msra.mxu0 0
    %2850 = vmatprep.subr.bf16.mxu0 0
    %2851 = vmatpush1.bf16.msra.mxu0 0
    %2852 = vmatprep.subr.bf16.mxu0 0
    %2853 = vmatpush1.bf16.msra.mxu0 0
    %2854 = vmatprep.subr.bf16.mxu0 0
    %2855 = vmatpush1.bf16.msra.mxu0 0
    %2856 = vmatprep.subr.bf16.mxu0 0
    %2857 = vmatpush1.bf16.msra.mxu0 0
    %2858 = vmatprep.subr.bf16.mxu0 0
    %2859 = vmatpush1.bf16.msra.mxu0 0
    %2860 = vmatprep.subr.bf16.mxu0 0
    %2861 = vmatpush1.bf16.msra.mxu0 0
    %2862 = vmatprep.mubr.bf16.mxu0 0
    %2863 = vmatmul.mubr.bf16.gmra.mrb[0].mxu0 %v2778
    %v2864 = vpop.f32.mrb[0].mxu0
    %v2865 = vadd.f32 0.0, %v2864
    %v2866 = vpop.f32.mrb[0].mxu0
    %v2867 = vpop.f32.mrb[0].mxu0
    %v2868 = vpop.f32.mrb[0].mxu0
    %2869 = vdwg.mxu0
    %v2870 = vadd.f32 %v2765, %v2824
    %v2871 = vadd.f32 %v2766, %v2826
    %v2872 = vadd.f32 %v2767, %v2865
    %v2873 = vld [vmem:[%s610] sm:$0xf]
    %2874 = vrot.lane.b32.xlu0 %v2355, 108
    %v2875 = vpop.permute.xlu0 %2874
    %2876 = vrot.lane.b32.xlu0 %v2363, 108
    %v2877 = vpop.permute.xlu0 %2876
    %2878 = vrot.lane.b32.xlu0 %v2362, 108
    %v2879 = vpop.permute.xlu0 %2878
    %v2880 = vsel %vm618, %v2875, %v2877
    %v2881 = vsel %vm618, %v2877, %v2879
    %v2883 = vsel %vm101, %v2873, 0
    %v2886 = vsel %vm105, %v2880, 0
    %v2889 = vsel %vm105, %v2881, 0
    %v2892 = vsel %vm105, %v2879, 0
    %2894 = vmatprep.subr.bf16.mxu0 %v2889
    %2895 = vmatpush1.bf16.msra.mxu0 %v2886
    %2896 = vmatprep.subr.bf16.mxu0 0
    %2897 = vmatpush1.bf16.msra.mxu0 0
    %2898 = vmatprep.subr.bf16.mxu0 0
    %2899 = vmatpush1.bf16.msra.mxu0 0
    %2900 = vmatprep.subr.bf16.mxu0 0
    %2901 = vmatpush1.bf16.msra.mxu0 0
    %2902 = vmatprep.subr.bf16.mxu0 0
    %2903 = vmatpush1.bf16.msra.mxu0 0
    %2904 = vmatprep.subr.bf16.mxu0 0
    %2905 = vmatpush1.bf16.msra.mxu0 0
    %2906 = vmatprep.subr.bf16.mxu0 0
    %2907 = vmatpush1.bf16.msra.mxu0 0
    %2908 = vmatprep.subr.bf16.mxu0 0
    %2909 = vmatpush1.bf16.msra.mxu0 0
    %2910 = vmatprep.subr.bf16.mxu0 0
    %2911 = vmatpush1.bf16.msra.mxu0 0
    %2912 = vmatprep.subr.bf16.mxu0 0
    %2913 = vmatpush1.bf16.msra.mxu0 0
    %2914 = vmatprep.subr.bf16.mxu0 0
    %2915 = vmatpush1.bf16.msra.mxu0 0
    %2916 = vmatprep.subr.bf16.mxu0 0
    %2917 = vmatpush1.bf16.msra.mxu0 0
    %2918 = vmatprep.subr.bf16.mxu0 0
    %2919 = vmatpush1.bf16.msra.mxu0 0
    %2920 = vmatprep.subr.bf16.mxu0 0
    %2921 = vmatpush1.bf16.msra.mxu0 0
    %2922 = vmatprep.subr.bf16.mxu0 0
    %2923 = vmatpush1.bf16.msra.mxu0 0
    %2924 = vmatprep.subr.bf16.mxu0 0
    %2925 = vmatpush1.bf16.msra.mxu0 0
    %2926 = vmatprep.mubr.bf16.mxu0 0
    %2927 = vmatmul.mubr.bf16.gmra.mrb[0].mxu0 %v2883
    %v2928 = vpop.f32.mrb[0].mxu0
    %v2929 = vadd.f32 0.0, %v2928
    %v2930 = vpop.f32.mrb[0].mxu0
    %v2931 = vadd.f32 0.0, %v2930
    %v2932 = vpop.f32.mrb[0].mxu0
    %v2933 = vpop.f32.mrb[0].mxu0
    %2934 = vdwg.mxu0
    %2935 = vmatprep.subr.bf16.mxu0 0
    %2936 = vmatpush1.bf16.msra.mxu0 %v2892
    %2937 = vmatprep.subr.bf16.mxu0 0
    %2938 = vmatpush1.bf16.msra.mxu0 0
    %2939 = vmatprep.subr.bf16.mxu0 0
    %2940 = vmatpush1.bf16.msra.mxu0 0
    %2941 = vmatprep.subr.bf16.mxu0 0
    %2942 = vmatpush1.bf16.msra.mxu0 0
    %2943 = vmatprep.subr.bf16.mxu0 0
    %2944 = vmatpush1.bf16.msra.mxu0 0
    %2945 = vmatprep.subr.bf16.mxu0 0
    %2946 = vmatpush1.bf16.msra.mxu0 0
    %2947 = vmatprep.subr.bf16.mxu0 0
    %2948 = vmatpush1.bf16.msra.mxu0 0
    %2949 = vmatprep.subr.bf16.mxu0 0
    %2950 = vmatpush1.bf16.msra.mxu0 0
    %2951 = vmatprep.subr.bf16.mxu0 0
    %2952 = vmatpush1.bf16.msra.mxu0 0
    %2953 = vmatprep.subr.bf16.mxu0 0
    %2954 = vmatpush1.bf16.msra.mxu0 0
    %2955 = vmatprep.subr.bf16.mxu0 0
    %2956 = vmatpush1.bf16.msra.mxu0 0
    %2957 = vmatprep.subr.bf16.mxu0 0
    %2958 = vmatpush1.bf16.msra.mxu0 0
    %2959 = vmatprep.subr.bf16.mxu0 0
    %2960 = vmatpush1.bf16.msra.mxu0 0
    %2961 = vmatprep.subr.bf16.mxu0 0
    %2962 = vmatpush1.bf16.msra.mxu0 0
    %2963 = vmatprep.subr.bf16.mxu0 0
    %2964 = vmatpush1.bf16.msra.mxu0 0
    %2965 = vmatprep.subr.bf16.mxu0 0
    %2966 = vmatpush1.bf16.msra.mxu0 0
    %2967 = vmatprep.mubr.bf16.mxu0 0
    %2968 = vmatmul.mubr.bf16.gmra.mrb[0].mxu0 %v2883
    %v2969 = vpop.f32.mrb[0].mxu0
    %v2970 = vadd.f32 0.0, %v2969
    %v2971 = vpop.f32.mrb[0].mxu0
    %v2972 = vpop.f32.mrb[0].mxu0
    %v2973 = vpop.f32.mrb[0].mxu0
    %2974 = vdwg.mxu0
    %v2975 = vadd.f32 %v2870, %v2929
    %v2976 = vadd.f32 %v2871, %v2931
    %v2977 = vadd.f32 %v2872, %v2970
    %v2978 = vld [vmem:[%s717] sm:$0xf]
    %2979 = vrot.lane.b32.xlu0 %v2355, 92
    %v2980 = vpop.permute.xlu0 %2979
    %2981 = vrot.lane.b32.xlu0 %v2363, 92
    %v2982 = vpop.permute.xlu0 %2981
    %2983 = vrot.lane.b32.xlu0 %v2362, 92
    %v2984 = vpop.permute.xlu0 %2983
    %v2985 = vsel %vm725, %v2980, %v2982
    %v2986 = vsel %vm725, %v2982, %v2984
    %v2988 = vsel %vm101, %v2978, 0
    %v2991 = vsel %vm105, %v2985, 0
    %v2994 = vsel %vm105, %v2986, 0
    %v2997 = vsel %vm105, %v2984, 0
    %2999 = vmatprep.subr.bf16.mxu0 %v2994
    %3000 = vmatpush1.bf16.msra.mxu0 %v2991
    %3001 = vmatprep.subr.bf16.mxu0 0
    %3002 = vmatpush1.bf16.msra.mxu0 0
    %3003 = vmatprep.subr.bf16.mxu0 0
    %3004 = vmatpush1.bf16.msra.mxu0 0
    %3005 = vmatprep.subr.bf16.mxu0 0
    %3006 = vmatpush1.bf16.msra.mxu0 0
    %3007 = vmatprep.subr.bf16.mxu0 0
    %3008 = vmatpush1.bf16.msra.mxu0 0
    %3009 = vmatprep.subr.bf16.mxu0 0
    %3010 = vmatpush1.bf16.msra.mxu0 0
    %3011 = vmatprep.subr.bf16.mxu0 0
    %3012 = vmatpush1.bf16.msra.mxu0 0
    %3013 = vmatprep.subr.bf16.mxu0 0
    %3014 = vmatpush1.bf16.msra.mxu0 0
    %3015 = vmatprep.subr.bf16.mxu0 0
    %3016 = vmatpush1.bf16.msra.mxu0 0
    %3017 = vmatprep.subr.bf16.mxu0 0
    %3018 = vmatpush1.bf16.msra.mxu0 0
    %3019 = vmatprep.subr.bf16.mxu0 0
    %3020 = vmatpush1.bf16.msra.mxu0 0
    %3021 = vmatprep.subr.bf16.mxu0 0
    %3022 = vmatpush1.bf16.msra.mxu0 0
    %3023 = vmatprep.subr.bf16.mxu0 0
    %3024 = vmatpush1.bf16.msra.mxu0 0
    %3025 = vmatprep.subr.bf16.mxu0 0
    %3026 = vmatpush1.bf16.msra.mxu0 0
    %3027 = vmatprep.subr.bf16.mxu0 0
    %3028 = vmatpush1.bf16.msra.mxu0 0
    %3029 = vmatprep.subr.bf16.mxu0 0
    %3030 = vmatpush1.bf16.msra.mxu0 0
    %3031 = vmatprep.mubr.bf16.mxu0 0
    %3032 = vmatmul.mubr.bf16.gmra.mrb[0].mxu0 %v2988
    %v3033 = vpop.f32.mrb[0].mxu0
    %v3034 = vadd.f32 0.0, %v3033
    %v3035 = vpop.f32.mrb[0].mxu0
    %v3036 = vadd.f32 0.0, %v3035
    %v3037 = vpop.f32.mrb[0].mxu0
    %v3038 = vpop.f32.mrb[0].mxu0
    %3039 = vdwg.mxu0
    %3040 = vmatprep.subr.bf16.mxu0 0
    %3041 = vmatpush1.bf16.msra.mxu0 %v2997
    %3042 = vmatprep.subr.bf16.mxu0 0
    %3043 = vmatpush1.bf16.msra.mxu0 0
    %3044 = vmatprep.subr.bf16.mxu0 0
    %3045 = vmatpush1.bf16.msra.mxu0 0
    %3046 = vmatprep.subr.bf16.mxu0 0
    %3047 = vmatpush1.bf16.msra.mxu0 0
    %3048 = vmatprep.subr.bf16.mxu0 0
    %3049 = vmatpush1.bf16.msra.mxu0 0
    %3050 = vmatprep.subr.bf16.mxu0 0
    %3051 = vmatpush1.bf16.msra.mxu0 0
    %3052 = vmatprep.subr.bf16.mxu0 0
    %3053 = vmatpush1.bf16.msra.mxu0 0
    %3054 = vmatprep.subr.bf16.mxu0 0
    %3055 = vmatpush1.bf16.msra.mxu0 0
    %3056 = vmatprep.subr.bf16.mxu0 0
    %3057 = vmatpush1.bf16.msra.mxu0 0
    %3058 = vmatprep.subr.bf16.mxu0 0
    %3059 = vmatpush1.bf16.msra.mxu0 0
    %3060 = vmatprep.subr.bf16.mxu0 0
    %3061 = vmatpush1.bf16.msra.mxu0 0
    %3062 = vmatprep.subr.bf16.mxu0 0
    %3063 = vmatpush1.bf16.msra.mxu0 0
    %3064 = vmatprep.subr.bf16.mxu0 0
    %3065 = vmatpush1.bf16.msra.mxu0 0
    %3066 = vmatprep.subr.bf16.mxu0 0
    %3067 = vmatpush1.bf16.msra.mxu0 0
    %3068 = vmatprep.subr.bf16.mxu0 0
    %3069 = vmatpush1.bf16.msra.mxu0 0
    %3070 = vmatprep.subr.bf16.mxu0 0
    %3071 = vmatpush1.bf16.msra.mxu0 0
    %3072 = vmatprep.mubr.bf16.mxu0 0
    %3073 = vmatmul.mubr.bf16.gmra.mrb[0].mxu0 %v2988
    %v3074 = vpop.f32.mrb[0].mxu0
    %v3075 = vadd.f32 0.0, %v3074
    %v3076 = vpop.f32.mrb[0].mxu0
    %v3077 = vpop.f32.mrb[0].mxu0
    %v3078 = vpop.f32.mrb[0].mxu0
    %3079 = vdwg.mxu0
    %v3080 = vadd.f32 %v2975, %v3034
    %v3081 = vadd.f32 %v2976, %v3036
    %v3082 = vadd.f32 %v2977, %v3075
    %v3083 = vld [vmem:[%s824] sm:$0xf]
    %3084 = vrot.lane.b32.xlu0 %v2355, 91
    %v3085 = vpop.permute.xlu0 %3084
    %3086 = vrot.lane.b32.xlu0 %v2363, 91
    %v3087 = vpop.permute.xlu0 %3086
    %3088 = vrot.lane.b32.xlu0 %v2362, 91
    %v3089 = vpop.permute.xlu0 %3088
    %v3090 = vsel %vm832, %v3085, %v3087
    %v3091 = vsel %vm832, %v3087, %v3089
    %v3093 = vsel %vm101, %v3083, 0
    %v3096 = vsel %vm105, %v3090, 0
    %v3099 = vsel %vm105, %v3091, 0
    %v3102 = vsel %vm105, %v3089, 0
    %3104 = vmatprep.subr.bf16.mxu0 %v3099
    %3105 = vmatpush1.bf16.msra.mxu0 %v3096
    %3106 = vmatprep.subr.bf16.mxu0 0
    %3107 = vmatpush1.bf16.msra.mxu0 0
    %3108 = vmatprep.subr.bf16.mxu0 0
    %3109 = vmatpush1.bf16.msra.mxu0 0
    %3110 = vmatprep.subr.bf16.mxu0 0
    %3111 = vmatpush1.bf16.msra.mxu0 0
    %3112 = vmatprep.subr.bf16.mxu0 0
    %3113 = vmatpush1.bf16.msra.mxu0 0
    %3114 = vmatprep.subr.bf16.mxu0 0
    %3115 = vmatpush1.bf16.msra.mxu0 0
    %3116 = vmatprep.subr.bf16.mxu0 0
    %3117 = vmatpush1.bf16.msra.mxu0 0
    %3118 = vmatprep.subr.bf16.mxu0 0
    %3119 = vmatpush1.bf16.msra.mxu0 0
    %3120 = vmatprep.subr.bf16.mxu0 0
    %3121 = vmatpush1.bf16.msra.mxu0 0
    %3122 = vmatprep.subr.bf16.mxu0 0
    %3123 = vmatpush1.bf16.msra.mxu0 0
    %3124 = vmatprep.subr.bf16.mxu0 0
    %3125 = vmatpush1.bf16.msra.mxu0 0
    %3126 = vmatprep.subr.bf16.mxu0 0
    %3127 = vmatpush1.bf16.msra.mxu0 0
    %3128 = vmatprep.subr.bf16.mxu0 0
    %3129 = vmatpush1.bf16.msra.mxu0 0
    %3130 = vmatprep.subr.bf16.mxu0 0
    %3131 = vmatpush1.bf16.msra.mxu0 0
    %3132 = vmatprep.subr.bf16.mxu0 0
    %3133 = vmatpush1.bf16.msra.mxu0 0
    %3134 = vmatprep.subr.bf16.mxu0 0
    %3135 = vmatpush1.bf16.msra.mxu0 0
    %3136 = vmatprep.mubr.bf16.mxu0 0
    %3137 = vmatmul.mubr.bf16.gmra.mrb[0].mxu0 %v3093
    %v3138 = vpop.f32.mrb[0].mxu0
    %v3139 = vadd.f32 0.0, %v3138
    %v3140 = vpop.f32.mrb[0].mxu0
    %v3141 = vadd.f32 0.0, %v3140
    %v3142 = vpop.f32.mrb[0].mxu0
    %v3143 = vpop.f32.mrb[0].mxu0
    %3144 = vdwg.mxu0
    %3145 = vmatprep.subr.bf16.mxu0 0
    %3146 = vmatpush1.bf16.msra.mxu0 %v3102
    %3147 = vmatprep.subr.bf16.mxu0 0
    %3148 = vmatpush1.bf16.msra.mxu0 0
    %3149 = vmatprep.subr.bf16.mxu0 0
    %3150 = vmatpush1.bf16.msra.mxu0 0
    %3151 = vmatprep.subr.bf16.mxu0 0
    %3152 = vmatpush1.bf16.msra.mxu0 0
    %3153 = vmatprep.subr.bf16.mxu0 0
    %3154 = vmatpush1.bf16.msra.mxu0 0
    %3155 = vmatprep.subr.bf16.mxu0 0
    %3156 = vmatpush1.bf16.msra.mxu0 0
    %3157 = vmatprep.subr.bf16.mxu0 0
    %3158 = vmatpush1.bf16.msra.mxu0 0
    %3159 = vmatprep.subr.bf16.mxu0 0
    %3160 = vmatpush1.bf16.msra.mxu0 0
    %3161 = vmatprep.subr.bf16.mxu0 0
    %3162 = vmatpush1.bf16.msra.mxu0 0
    %3163 = vmatprep.subr.bf16.mxu0 0
    %3164 = vmatpush1.bf16.msra.mxu0 0
    %3165 = vmatprep.subr.bf16.mxu0 0
    %3166 = vmatpush1.bf16.msra.mxu0 0
    %3167 = vmatprep.subr.bf16.mxu0 0
    %3168 = vmatpush1.bf16.msra.mxu0 0
    %3169 = vmatprep.subr.bf16.mxu0 0
    %3170 = vmatpush1.bf16.msra.mxu0 0
    %3171 = vmatprep.subr.bf16.mxu0 0
    %3172 = vmatpush1.bf16.msra.mxu0 0
    %3173 = vmatprep.subr.bf16.mxu0 0
    %3174 = vmatpush1.bf16.msra.mxu0 0
    %3175 = vmatprep.subr.bf16.mxu0 0
    %3176 = vmatpush1.bf16.msra.mxu0 0
    %3177 = vmatprep.mubr.bf16.mxu0 0
    %3178 = vmatmul.mubr.bf16.gmra.mrb[0].mxu0 %v3093
    %v3179 = vpop.f32.mrb[0].mxu0
    %v3180 = vadd.f32 0.0, %v3179
    %v3181 = vpop.f32.mrb[0].mxu0
    %v3182 = vpop.f32.mrb[0].mxu0
    %v3183 = vpop.f32.mrb[0].mxu0
    %3184 = vdwg.mxu0
    %v3185 = vadd.f32 %v3080, %v3139
    %v3186 = vadd.f32 %v3081, %v3141
    %v3187 = vadd.f32 %v3082, %v3180
    %v3188 = vld [vmem:[%s931] sm:$0xf]
    %3189 = vrot.lane.b32.xlu0 %v2355, 90
    %v3190 = vpop.permute.xlu0 %3189
    %3191 = vrot.lane.b32.xlu0 %v2363, 90
    %v3192 = vpop.permute.xlu0 %3191
    %3193 = vrot.lane.b32.xlu0 %v2362, 90
    %v3194 = vpop.permute.xlu0 %3193
    %v3195 = vsel %vm939, %v3190, %v3192
    %v3196 = vsel %vm939, %v3192, %v3194
    %v3198 = vsel %vm101, %v3188, 0
    %v3201 = vsel %vm105, %v3195, 0
    %v3204 = vsel %vm105, %v3196, 0
    %v3207 = vsel %vm105, %v3194, 0
    %3209 = vmatprep.subr.bf16.mxu0 %v3204
    %3210 = vmatpush1.bf16.msra.mxu0 %v3201
    %3211 = vmatprep.subr.bf16.mxu0 0
    %3212 = vmatpush1.bf16.msra.mxu0 0
    %3213 = vmatprep.subr.bf16.mxu0 0
    %3214 = vmatpush1.bf16.msra.mxu0 0
    %3215 = vmatprep.subr.bf16.mxu0 0
    %3216 = vmatpush1.bf16.msra.mxu0 0
    %3217 = vmatprep.subr.bf16.mxu0 0
    %3218 = vmatpush1.bf16.msra.mxu0 0
    %3219 = vmatprep.subr.bf16.mxu0 0
    %3220 = vmatpush1.bf16.msra.mxu0 0
    %3221 = vmatprep.subr.bf16.mxu0 0
    %3222 = vmatpush1.bf16.msra.mxu0 0
    %3223 = vmatprep.subr.bf16.mxu0 0
    %3224 = vmatpush1.bf16.msra.mxu0 0
    %3225 = vmatprep.subr.bf16.mxu0 0
    %3226 = vmatpush1.bf16.msra.mxu0 0
    %3227 = vmatprep.subr.bf16.mxu0 0
    %3228 = vmatpush1.bf16.msra.mxu0 0
    %3229 = vmatprep.subr.bf16.mxu0 0
    %3230 = vmatpush1.bf16.msra.mxu0 0
    %3231 = vmatprep.subr.bf16.mxu0 0
    %3232 = vmatpush1.bf16.msra.mxu0 0
    %3233 = vmatprep.subr.bf16.mxu0 0
    %3234 = vmatpush1.bf16.msra.mxu0 0
    %3235 = vmatprep.subr.bf16.mxu0 0
    %3236 = vmatpush1.bf16.msra.mxu0 0
    %3237 = vmatprep.subr.bf16.mxu0 0
    %3238 = vmatpush1.bf16.msra.mxu0 0
    %3239 = vmatprep.subr.bf16.mxu0 0
    %3240 = vmatpush1.bf16.msra.mxu0 0
    %3241 = vmatprep.mubr.bf16.mxu0 0
    %3242 = vmatmul.mubr.bf16.gmra.mrb[0].mxu0 %v3198
    %v3243 = vpop.f32.mrb[0].mxu0
    %v3244 = vadd.f32 0.0, %v3243
    %v3245 = vpop.f32.mrb[0].mxu0
    %v3246 = vadd.f32 0.0, %v3245
    %v3247 = vpop.f32.mrb[0].mxu0
    %v3248 = vpop.f32.mrb[0].mxu0
    %3249 = vdwg.mxu0
    %3250 = vmatprep.subr.bf16.mxu0 0
    %3251 = vmatpush1.bf16.msra.mxu0 %v3207
    %3252 = vmatprep.subr.bf16.mxu0 0
    %3253 = vmatpush1.bf16.msra.mxu0 0
    %3254 = vmatprep.subr.bf16.mxu0 0
    %3255 = vmatpush1.bf16.msra.mxu0 0
    %3256 = vmatprep.subr.bf16.mxu0 0
    %3257 = vmatpush1.bf16.msra.mxu0 0
    %3258 = vmatprep.subr.bf16.mxu0 0
    %3259 = vmatpush1.bf16.msra.mxu0 0
    %3260 = vmatprep.subr.bf16.mxu0 0
    %3261 = vmatpush1.bf16.msra.mxu0 0
    %3262 = vmatprep.subr.bf16.mxu0 0
    %3263 = vmatpush1.bf16.msra.mxu0 0
    %3264 = vmatprep.subr.bf16.mxu0 0
    %3265 = vmatpush1.bf16.msra.mxu0 0
    %3266 = vmatprep.subr.bf16.mxu0 0
    %3267 = vmatpush1.bf16.msra.mxu0 0
    %3268 = vmatprep.subr.bf16.mxu0 0
    %3269 = vmatpush1.bf16.msra.mxu0 0
    %3270 = vmatprep.subr.bf16.mxu0 0
    %3271 = vmatpush1.bf16.msra.mxu0 0
    %3272 = vmatprep.subr.bf16.mxu0 0
    %3273 = vmatpush1.bf16.msra.mxu0 0
    %3274 = vmatprep.subr.bf16.mxu0 0
    %3275 = vmatpush1.bf16.msra.mxu0 0
    %3276 = vmatprep.subr.bf16.mxu0 0
    %3277 = vmatpush1.bf16.msra.mxu0 0
    %3278 = vmatprep.subr.bf16.mxu0 0
    %3279 = vmatpush1.bf16.msra.mxu0 0
    %3280 = vmatprep.subr.bf16.mxu0 0
    %3281 = vmatpush1.bf16.msra.mxu0 0
    %3282 = vmatprep.mubr.bf16.mxu0 0
    %3283 = vmatmul.mubr.bf16.gmra.mrb[0].mxu0 %v3198
    %v3284 = vpop.f32.mrb[0].mxu0
    %v3285 = vadd.f32 0.0, %v3284
    %v3286 = vpop.f32.mrb[0].mxu0
    %v3287 = vpop.f32.mrb[0].mxu0
    %v3288 = vpop.f32.mrb[0].mxu0
    %3289 = vdwg.mxu0
    %v3290 = vadd.f32 %v3185, %v3244
    %v3291 = vadd.f32 %v3186, %v3246
    %v3292 = vadd.f32 %v3187, %v3285
    %v3293 = vadd.f32 %v3290, %v1041
    %v3294 = vadd.f32 %v3291, %v1041
    %v3295 = vadd.f32 %v3292, %v1041
    %3297 = vrot.lane.b32.xlu0 %v3293, 110
    %v3298 = vpop.permute.xlu0 %3297
    %3300 = vrot.lane.b32.xlu0 %v3293, 92
    %v3301 = vpop.permute.xlu0 %3300
    %3303 = vrot.lane.b32.xlu0 %v3293, 74
    %v3304 = vpop.permute.xlu0 %3303
    %3306 = vrot.lane.b32.xlu0 %v3293, 56
    %v3307 = vpop.permute.xlu0 %3306
    %3309 = vrot.lane.b32.xlu0 %v3293, 38
    %v3310 = vpop.permute.xlu0 %3309
    %3312 = vrot.lane.b32.xlu0 %v3293, 20
    %v3313 = vpop.permute.xlu0 %3312
    %3316 = vrot.lane.b32.xlu0 %v3293, 2
    %v3317 = vpop.permute.xlu0 %3316
    %3318 = vrot.lane.b32.xlu0 %v3294, 2
    %v3319 = vpop.permute.xlu0 %3318
    %v3320 = vsel %vm1070, %v3317, %v3319
    %3322 = vrot.lane.b32.xlu0 %v3294, 112
    %v3323 = vpop.permute.xlu0 %3322
    %3325 = vrot.lane.b32.xlu0 %v3294, 94
    %v3326 = vpop.permute.xlu0 %3325
    %3328 = vrot.lane.b32.xlu0 %v3294, 76
    %v3329 = vpop.permute.xlu0 %3328
    %3331 = vrot.lane.b32.xlu0 %v3294, 58
    %v3332 = vpop.permute.xlu0 %3331
    %3334 = vrot.lane.b32.xlu0 %v3294, 40
    %v3335 = vpop.permute.xlu0 %3334
    %3337 = vrot.lane.b32.xlu0 %v3294, 22
    %v3338 = vpop.permute.xlu0 %3337
    %3341 = vrot.lane.b32.xlu0 %v3294, 4
    %v3342 = vpop.permute.xlu0 %3341
    %3343 = vrot.lane.b32.xlu0 %v3295, 4
    %v3344 = vpop.permute.xlu0 %3343
    %v3345 = vsel %vm101, %v3342, %v3344
    %3347 = vrot.lane.b32.xlu0 %v3295, 114
    %v3348 = vpop.permute.xlu0 %3347
    %v3350 = vcombine.low %v3293, %v3301
    %v3351 = vcombine.high %v3293, %v3301
    %v3353 = vunpack.c.l.s4 1983009808
    %v3354 = vunpack.c.0.s8 %v3353
    %v3355 = vlaneseq
    %v3356 = vshrl.u32 %v3355, 7
    %v3357 = vsub.s32 %v3354, %v3356
    %v3358 = vrot.slane %v3350, %v3357
    %v3360 = vunpack.c.l.s4 1983009808
    %v3361 = vunpack.c.0.s8 %v3360
    %v3362 = vlaneseq
    %v3363 = vshrl.u32 %v3362, 7
    %v3364 = vsub.s32 %v3361, %v3363
    %v3365 = vrot.slane %v3351, %v3364
    %v3366 = vcombine.low %v3298, %v3304
    %v3367 = vcombine.high %v3298, %v3304
    %v3369 = vunpack.c.l.s4 1983009808
    %v3370 = vunpack.c.0.s8 %v3369
    %v3371 = vlaneseq
    %v3372 = vshrl.u32 %v3371, 7
    %v3373 = vsub.s32 %v3370, %v3372
    %v3374 = vrot.slane %v3366, %v3373
    %v3376 = vunpack.c.l.s4 1983009808
    %v3377 = vunpack.c.0.s8 %v3376
    %v3378 = vlaneseq
    %v3379 = vshrl.u32 %v3378, 7
    %v3380 = vsub.s32 %v3377, %v3379
    %v3381 = vrot.slane %v3367, %v3380
    %v3382 = vcombine.low %v3307, %v3313
    %v3383 = vcombine.high %v3307, %v3313
    %v3385 = vunpack.c.l.s4 1983009808
    %v3386 = vunpack.c.0.s8 %v3385
    %v3387 = vlaneseq
    %v3388 = vshrl.u32 %v3387, 7
    %v3389 = vsub.s32 %v3386, %v3388
    %v3390 = vrot.slane %v3382, %v3389
    %v3392 = vunpack.c.l.s4 1983009808
    %v3393 = vunpack.c.0.s8 %v3392
    %v3394 = vlaneseq
    %v3395 = vshrl.u32 %v3394, 7
    %v3396 = vsub.s32 %v3393, %v3395
    %v3397 = vrot.slane %v3383, %v3396
    %v3398 = vcombine.low %v3310, %v3320
    %v3399 = vcombine.high %v3310, %v3320
    %v3401 = vunpack.c.l.s4 1983009808
    %v3402 = vunpack.c.0.s8 %v3401
    %v3403 = vlaneseq
    %v3404 = vshrl.u32 %v3403, 7
    %v3405 = vsub.s32 %v3402, %v3404
    %v3406 = vrot.slane %v3398, %v3405
    %v3408 = vunpack.c.l.s4 1983009808
    %v3409 = vunpack.c.0.s8 %v3408
    %v3410 = vlaneseq
    %v3411 = vshrl.u32 %v3410, 7
    %v3412 = vsub.s32 %v3409, %v3411
    %v3413 = vrot.slane %v3399, %v3412
    %v3414 = vcombine.low %v3358, %v3374
    %v3415 = vcombine.high %v3358, %v3374
    %v3417 = vunpack.c.l.s4 1934713408
    %v3418 = vunpack.c.0.s8 %v3417
    %v3419 = vlaneseq
    %v3420 = vshrl.u32 %v3419, 7
    %v3421 = vsub.s32 %v3418, %v3420
    %v3422 = vrot.slane %v3414, %v3421
    %v3424 = vunpack.c.l.s4 1934713408
    %v3425 = vunpack.c.0.s8 %v3424
    %v3426 = vlaneseq
    %v3427 = vshrl.u32 %v3426, 7
    %v3428 = vsub.s32 %v3425, %v3427
    %v3429 = vrot.slane %v3415, %v3428
    %v3430 = vcombine.low %v3365, %v3381
    %v3431 = vcombine.high %v3365, %v3381
    %v3433 = vunpack.c.l.s4 1934713408
    %v3434 = vunpack.c.0.s8 %v3433
    %v3435 = vlaneseq
    %v3436 = vshrl.u32 %v3435, 7
    %v3437 = vsub.s32 %v3434, %v3436
    %v3438 = vrot.slane %v3430, %v3437
    %v3440 = vunpack.c.l.s4 1934713408
    %v3441 = vunpack.c.0.s8 %v3440
    %v3442 = vlaneseq
    %v3443 = vshrl.u32 %v3442, 7
    %v3444 = vsub.s32 %v3441, %v3443
    %v3445 = vrot.slane %v3431, %v3444
    %v3446 = vcombine.low %v3390, %v3406
    %v3447 = vcombine.high %v3390, %v3406
    %v3449 = vunpack.c.l.s4 1934713408
    %v3450 = vunpack.c.0.s8 %v3449
    %v3451 = vlaneseq
    %v3452 = vshrl.u32 %v3451, 7
    %v3453 = vsub.s32 %v3450, %v3452
    %v3454 = vrot.slane %v3446, %v3453
    %v3456 = vunpack.c.l.s4 1934713408
    %v3457 = vunpack.c.0.s8 %v3456
    %v3458 = vlaneseq
    %v3459 = vshrl.u32 %v3458, 7
    %v3460 = vsub.s32 %v3457, %v3459
    %v3461 = vrot.slane %v3447, %v3460
    %v3462 = vcombine.low %v3397, %v3413
    %v3463 = vcombine.high %v3397, %v3413
    %v3465 = vunpack.c.l.s4 1934713408
    %v3466 = vunpack.c.0.s8 %v3465
    %v3467 = vlaneseq
    %v3468 = vshrl.u32 %v3467, 7
    %v3469 = vsub.s32 %v3466, %v3468
    %v3470 = vrot.slane %v3462, %v3469
    %v3472 = vunpack.c.l.s4 1934713408
    %v3473 = vunpack.c.0.s8 %v3472
    %v3474 = vlaneseq
    %v3475 = vshrl.u32 %v3474, 7
    %v3476 = vsub.s32 %v3473, %v3475
    %v3477 = vrot.slane %v3463, %v3476
    %v3478 = vcombine.low %v3422, %v3454
    %v3479 = vcombine.high %v3422, %v3454
    %v3480 = vcombine.low %v3429, %v3461
    %v3481 = vcombine.high %v3429, %v3461
    %v3482 = vcombine.low %v3438, %v3470
    %v3483 = vcombine.high %v3438, %v3470
    %v3484 = vcombine.low %v3445, %v3477
    %v3485 = vcombine.high %v3445, %v3477
    %v3486 = vcombine.low %v3323, %v3329
    %v3487 = vcombine.high %v3323, %v3329
    %v3489 = vunpack.c.l.s4 1983009808
    %v3490 = vunpack.c.0.s8 %v3489
    %v3491 = vlaneseq
    %v3492 = vshrl.u32 %v3491, 7
    %v3493 = vsub.s32 %v3490, %v3492
    %v3494 = vrot.slane %v3486, %v3493
    %v3496 = vunpack.c.l.s4 1983009808
    %v3497 = vunpack.c.0.s8 %v3496
    %v3498 = vlaneseq
    %v3499 = vshrl.u32 %v3498, 7
    %v3500 = vsub.s32 %v3497, %v3499
    %v3501 = vrot.slane %v3487, %v3500
    %v3502 = vcombine.low %v3326, %v3332
    %v3503 = vcombine.high %v3326, %v3332
    %v3505 = vunpack.c.l.s4 1983009808
    %v3506 = vunpack.c.0.s8 %v3505
    %v3507 = vlaneseq
    %v3508 = vshrl.u32 %v3507, 7
    %v3509 = vsub.s32 %v3506, %v3508
    %v3510 = vrot.slane %v3502, %v3509
    %v3512 = vunpack.c.l.s4 1983009808
    %v3513 = vunpack.c.0.s8 %v3512
    %v3514 = vlaneseq
    %v3515 = vshrl.u32 %v3514, 7
    %v3516 = vsub.s32 %v3513, %v3515
    %v3517 = vrot.slane %v3503, %v3516
    %v3518 = vcombine.low %v3335, %v3345
    %v3519 = vcombine.high %v3335, %v3345
    %v3521 = vunpack.c.l.s4 1983009808
    %v3522 = vunpack.c.0.s8 %v3521
    %v3523 = vlaneseq
    %v3524 = vshrl.u32 %v3523, 7
    %v3525 = vsub.s32 %v3522, %v3524
    %v3526 = vrot.slane %v3518, %v3525
    %v3528 = vunpack.c.l.s4 1983009808
    %v3529 = vunpack.c.0.s8 %v3528
    %v3530 = vlaneseq
    %v3531 = vshrl.u32 %v3530, 7
    %v3532 = vsub.s32 %v3529, %v3531
    %v3533 = vrot.slane %v3519, %v3532
    %v3534 = vcombine.low %v3338, %v3348
    %v3535 = vcombine.high %v3338, %v3348
    %v3537 = vunpack.c.l.s4 1983009808
    %v3538 = vunpack.c.0.s8 %v3537
    %v3539 = vlaneseq
    %v3540 = vshrl.u32 %v3539, 7
    %v3541 = vsub.s32 %v3538, %v3540
    %v3542 = vrot.slane %v3534, %v3541
    %v3544 = vunpack.c.l.s4 1983009808
    %v3545 = vunpack.c.0.s8 %v3544
    %v3546 = vlaneseq
    %v3547 = vshrl.u32 %v3546, 7
    %v3548 = vsub.s32 %v3545, %v3547
    %v3549 = vrot.slane %v3535, %v3548
    %v3550 = vcombine.low %v3494, %v3510
    %v3551 = vcombine.high %v3494, %v3510
    %v3553 = vunpack.c.l.s4 1934713408
    %v3554 = vunpack.c.0.s8 %v3553
    %v3555 = vlaneseq
    %v3556 = vshrl.u32 %v3555, 7
    %v3557 = vsub.s32 %v3554, %v3556
    %v3558 = vrot.slane %v3550, %v3557
    %v3560 = vunpack.c.l.s4 1934713408
    %v3561 = vunpack.c.0.s8 %v3560
    %v3562 = vlaneseq
    %v3563 = vshrl.u32 %v3562, 7
    %v3564 = vsub.s32 %v3561, %v3563
    %v3565 = vrot.slane %v3551, %v3564
    %v3566 = vcombine.low %v3501, %v3517
    %v3567 = vcombine.high %v3501, %v3517
    %v3569 = vunpack.c.l.s4 1934713408
    %v3570 = vunpack.c.0.s8 %v3569
    %v3571 = vlaneseq
    %v3572 = vshrl.u32 %v3571, 7
    %v3573 = vsub.s32 %v3570, %v3572
    %v3574 = vrot.slane %v3566, %v3573
    %v3576 = vunpack.c.l.s4 1934713408
    %v3577 = vunpack.c.0.s8 %v3576
    %v3578 = vlaneseq
    %v3579 = vshrl.u32 %v3578, 7
    %v3580 = vsub.s32 %v3577, %v3579
    %v3581 = vrot.slane %v3567, %v3580
    %v3582 = vcombine.low %v3526, %v3542
    %v3583 = vcombine.high %v3526, %v3542
    %v3585 = vunpack.c.l.s4 1934713408
    %v3586 = vunpack.c.0.s8 %v3585
    %v3587 = vlaneseq
    %v3588 = vshrl.u32 %v3587, 7
    %v3589 = vsub.s32 %v3586, %v3588
    %v3590 = vrot.slane %v3582, %v3589
    %v3592 = vunpack.c.l.s4 1934713408
    %v3593 = vunpack.c.0.s8 %v3592
    %v3594 = vlaneseq
    %v3595 = vshrl.u32 %v3594, 7
    %v3596 = vsub.s32 %v3593, %v3595
    %v3597 = vrot.slane %v3583, %v3596
    %v3598 = vcombine.low %v3533, %v3549
    %v3599 = vcombine.high %v3533, %v3549
    %v3601 = vunpack.c.l.s4 1934713408
    %v3602 = vunpack.c.0.s8 %v3601
    %v3603 = vlaneseq
    %v3604 = vshrl.u32 %v3603, 7
    %v3605 = vsub.s32 %v3602, %v3604
    %v3606 = vrot.slane %v3598, %v3605
    %v3608 = vunpack.c.l.s4 1934713408
    %v3609 = vunpack.c.0.s8 %v3608
    %v3610 = vlaneseq
    %v3611 = vshrl.u32 %v3610, 7
    %v3612 = vsub.s32 %v3609, %v3611
    %v3613 = vrot.slane %v3599, %v3612
    %v3614 = vcombine.low %v3558, %v3590
    %v3615 = vcombine.high %v3558, %v3590
    %v3616 = vcombine.low %v3565, %v3597
    %v3617 = vcombine.high %v3565, %v3597
    %v3618 = vcombine.low %v3574, %v3606
    %v3619 = vcombine.high %v3574, %v3606
    %v3620 = vcombine.low %v3581, %v3613
    %v3621 = vcombine.high %v3581, %v3613
    %v3622 = vpack.c.bf16 %v3614, %v3478
    %v3623 = vpack.c.bf16 %v3615, %v3479
    %v3624 = vpack.c.bf16 %v3616, %v3480
    %v3625 = vpack.c.bf16 %v3617, %v3481
    %v3626 = vpack.c.bf16 %v3618, %v3482
    %v3627 = vpack.c.bf16 %v3619, %v3483
    %v3628 = vpack.c.bf16 %v3620, %v3484
    %v3629 = vpack.c.bf16 %v3621, %v3485
    %v3631 = vsel %vm1387, %v3622, 0
    %3633 = vmatprep.subr.bf16.mxu0 0
    %3634 = vmatpush1.bf16.msra.mxu0 %v1385
    %3635 = vmatprep.subr.bf16.mxu0 0
    %3636 = vmatpush1.bf16.msra.mxu0 0
    %3637 = vmatprep.subr.bf16.mxu0 0
    %3638 = vmatpush1.bf16.msra.mxu0 0
    %3639 = vmatprep.subr.bf16.mxu0 0
    %3640 = vmatpush1.bf16.msra.mxu0 0
    %3641 = vmatprep.subr.bf16.mxu0 0
    %3642 = vmatpush1.bf16.msra.mxu0 0
    %3643 = vmatprep.subr.bf16.mxu0 0
    %3644 = vmatpush1.bf16.msra.mxu0 0
    %3645 = vmatprep.subr.bf16.mxu0 0
    %3646 = vmatpush1.bf16.msra.mxu0 0
    %3647 = vmatprep.subr.bf16.mxu0 0
    %3648 = vmatpush1.bf16.msra.mxu0 0
    %3649 = vmatprep.subr.bf16.mxu0 0
    %3650 = vmatpush1.bf16.msra.mxu0 0
    %3651 = vmatprep.subr.bf16.mxu0 0
    %3652 = vmatpush1.bf16.msra.mxu0 0
    %3653 = vmatprep.subr.bf16.mxu0 0
    %3654 = vmatpush1.bf16.msra.mxu0 0
    %3655 = vmatprep.subr.bf16.mxu0 0
    %3656 = vmatpush1.bf16.msra.mxu0 0
    %3657 = vmatprep.subr.bf16.mxu0 0
    %3658 = vmatpush1.bf16.msra.mxu0 0
    %3659 = vmatprep.subr.bf16.mxu0 0
    %3660 = vmatpush1.bf16.msra.mxu0 0
    %3661 = vmatprep.subr.bf16.mxu0 0
    %3662 = vmatpush1.bf16.msra.mxu0 0
    %3663 = vmatprep.subr.bf16.mxu0 0
    %3664 = vmatpush1.bf16.msra.mxu0 0
    %3665 = vmatprep.mubr.bf16.mxu0 0
    %3666 = vmatmul.mubr.bf16.gmra.mrb[0].mxu0 %v3631
    %v3667 = vpop.f32.mrb[0].mxu0
    %v3668 = vadd.f32 0.0, %v3667
    %v3669 = vpop.f32.mrb[0].mxu0
    %v3670 = vpop.f32.mrb[0].mxu0
    %v3671 = vadd.f32 0.0, %v3670
    %v3672 = vpop.f32.mrb[0].mxu0
    %3673 = vdwg.mxu0
    %v3675 = vsel %vm1387, %v3623, 0
    %3677 = vmatprep.subr.bf16.mxu0 0
    %3678 = vmatpush1.bf16.msra.mxu0 %v1436
    %3679 = vmatprep.subr.bf16.mxu0 0
    %3680 = vmatpush1.bf16.msra.mxu0 0
    %3681 = vmatprep.subr.bf16.mxu0 0
    %3682 = vmatpush1.bf16.msra.mxu0 0
    %3683 = vmatprep.subr.bf16.mxu0 0
    %3684 = vmatpush1.bf16.msra.mxu0 0
    %3685 = vmatprep.subr.bf16.mxu0 0
    %3686 = vmatpush1.bf16.msra.mxu0 0
    %3687 = vmatprep.subr.bf16.mxu0 0
    %3688 = vmatpush1.bf16.msra.mxu0 0
    %3689 = vmatprep.subr.bf16.mxu0 0
    %3690 = vmatpush1.bf16.msra.mxu0 0
    %3691 = vmatprep.subr.bf16.mxu0 0
    %3692 = vmatpush1.bf16.msra.mxu0 0
    %3693 = vmatprep.subr.bf16.mxu0 0
    %3694 = vmatpush1.bf16.msra.mxu0 0
    %3695 = vmatprep.subr.bf16.mxu0 0
    %3696 = vmatpush1.bf16.msra.mxu0 0
    %3697 = vmatprep.subr.bf16.mxu0 0
    %3698 = vmatpush1.bf16.msra.mxu0 0
    %3699 = vmatprep.subr.bf16.mxu0 0
    %3700 = vmatpush1.bf16.msra.mxu0 0
    %3701 = vmatprep.subr.bf16.mxu0 0
    %3702 = vmatpush1.bf16.msra.mxu0 0
    %3703 = vmatprep.subr.bf16.mxu0 0
    %3704 = vmatpush1.bf16.msra.mxu0 0
    %3705 = vmatprep.subr.bf16.mxu0 0
    %3706 = vmatpush1.bf16.msra.mxu0 0
    %3707 = vmatprep.subr.bf16.mxu0 0
    %3708 = vmatpush1.bf16.msra.mxu0 0
    %3709 = vmatprep.mubr.bf16.mxu0 0
    %3710 = vmatmul.mubr.bf16.gmra.mrb[0].mxu0 %v3675
    %v3711 = vpop.f32.mrb[0].mxu0
    %v3712 = vadd.f32 0.0, %v3711
    %v3713 = vpop.f32.mrb[0].mxu0
    %v3714 = vpop.f32.mrb[0].mxu0
    %v3715 = vadd.f32 0.0, %v3714
    %v3716 = vpop.f32.mrb[0].mxu0
    %3717 = vdwg.mxu0
    %v3719 = vsel %vm1387, %v3624, 0
    %3721 = vmatprep.subr.bf16.mxu0 0
    %3722 = vmatpush1.bf16.msra.mxu0 %v1486
    %3723 = vmatprep.subr.bf16.mxu0 0
    %3724 = vmatpush1.bf16.msra.mxu0 0
    %3725 = vmatprep.subr.bf16.mxu0 0
    %3726 = vmatpush1.bf16.msra.mxu0 0
    %3727 = vmatprep.subr.bf16.mxu0 0
    %3728 = vmatpush1.bf16.msra.mxu0 0
    %3729 = vmatprep.subr.bf16.mxu0 0
    %3730 = vmatpush1.bf16.msra.mxu0 0
    %3731 = vmatprep.subr.bf16.mxu0 0
    %3732 = vmatpush1.bf16.msra.mxu0 0
    %3733 = vmatprep.subr.bf16.mxu0 0
    %3734 = vmatpush1.bf16.msra.mxu0 0
    %3735 = vmatprep.subr.bf16.mxu0 0
    %3736 = vmatpush1.bf16.msra.mxu0 0
    %3737 = vmatprep.subr.bf16.mxu0 0
    %3738 = vmatpush1.bf16.msra.mxu0 0
    %3739 = vmatprep.subr.bf16.mxu0 0
    %3740 = vmatpush1.bf16.msra.mxu0 0
    %3741 = vmatprep.subr.bf16.mxu0 0
    %3742 = vmatpush1.bf16.msra.mxu0 0
    %3743 = vmatprep.subr.bf16.mxu0 0
    %3744 = vmatpush1.bf16.msra.mxu0 0
    %3745 = vmatprep.subr.bf16.mxu0 0
    %3746 = vmatpush1.bf16.msra.mxu0 0
    %3747 = vmatprep.subr.bf16.mxu0 0
    %3748 = vmatpush1.bf16.msra.mxu0 0
    %3749 = vmatprep.subr.bf16.mxu0 0
    %3750 = vmatpush1.bf16.msra.mxu0 0
    %3751 = vmatprep.subr.bf16.mxu0 0
    %3752 = vmatpush1.bf16.msra.mxu0 0
    %3753 = vmatprep.mubr.bf16.mxu0 0
    %3754 = vmatmul.mubr.bf16.gmra.mrb[0].mxu0 %v3719
    %v3755 = vpop.f32.mrb[0].mxu0
    %v3756 = vadd.f32 0.0, %v3755
    %v3757 = vpop.f32.mrb[0].mxu0
    %v3758 = vpop.f32.mrb[0].mxu0
    %v3759 = vadd.f32 0.0, %v3758
    %v3760 = vpop.f32.mrb[0].mxu0
    %3761 = vdwg.mxu0
    %v3763 = vsel %vm1387, %v3625, 0
    %3765 = vmatprep.subr.bf16.mxu0 0
    %3766 = vmatpush1.bf16.msra.mxu0 %v1536
    %3767 = vmatprep.subr.bf16.mxu0 0
    %3768 = vmatpush1.bf16.msra.mxu0 0
    %3769 = vmatprep.subr.bf16.mxu0 0
    %3770 = vmatpush1.bf16.msra.mxu0 0
    %3771 = vmatprep.subr.bf16.mxu0 0
    %3772 = vmatpush1.bf16.msra.mxu0 0
    %3773 = vmatprep.subr.bf16.mxu0 0
    %3774 = vmatpush1.bf16.msra.mxu0 0
    %3775 = vmatprep.subr.bf16.mxu0 0
    %3776 = vmatpush1.bf16.msra.mxu0 0
    %3777 = vmatprep.subr.bf16.mxu0 0
    %3778 = vmatpush1.bf16.msra.mxu0 0
    %3779 = vmatprep.subr.bf16.mxu0 0
    %3780 = vmatpush1.bf16.msra.mxu0 0
    %3781 = vmatprep.subr.bf16.mxu0 0
    %3782 = vmatpush1.bf16.msra.mxu0 0
    %3783 = vmatprep.subr.bf16.mxu0 0
    %3784 = vmatpush1.bf16.msra.mxu0 0
    %3785 = vmatprep.subr.bf16.mxu0 0
    %3786 = vmatpush1.bf16.msra.mxu0 0
    %3787 = vmatprep.subr.bf16.mxu0 0
    %3788 = vmatpush1.bf16.msra.mxu0 0
    %3789 = vmatprep.subr.bf16.mxu0 0
    %3790 = vmatpush1.bf16.msra.mxu0 0
    %3791 = vmatprep.subr.bf16.mxu0 0
    %3792 = vmatpush1.bf16.msra.mxu0 0
    %3793 = vmatprep.subr.bf16.mxu0 0
    %3794 = vmatpush1.bf16.msra.mxu0 0
    %3795 = vmatprep.subr.bf16.mxu0 0
    %3796 = vmatpush1.bf16.msra.mxu0 0
    %3797 = vmatprep.mubr.bf16.mxu0 0
    %3798 = vmatmul.mubr.bf16.gmra.mrb[0].mxu0 %v3763
    %v3799 = vpop.f32.mrb[0].mxu0
    %v3800 = vadd.f32 0.0, %v3799
    %v3801 = vpop.f32.mrb[0].mxu0
    %v3802 = vpop.f32.mrb[0].mxu0
    %v3803 = vadd.f32 0.0, %v3802
    %v3804 = vpop.f32.mrb[0].mxu0
    %3805 = vdwg.mxu0
    %v3807 = vsel %vm1387, %v3626, 0
    %3809 = vmatprep.subr.bf16.mxu0 0
    %3810 = vmatpush1.bf16.msra.mxu0 %v1586
    %3811 = vmatprep.subr.bf16.mxu0 0
    %3812 = vmatpush1.bf16.msra.mxu0 0
    %3813 = vmatprep.subr.bf16.mxu0 0
    %3814 = vmatpush1.bf16.msra.mxu0 0
    %3815 = vmatprep.subr.bf16.mxu0 0
    %3816 = vmatpush1.bf16.msra.mxu0 0
    %3817 = vmatprep.subr.bf16.mxu0 0
    %3818 = vmatpush1.bf16.msra.mxu0 0
    %3819 = vmatprep.subr.bf16.mxu0 0
    %3820 = vmatpush1.bf16.msra.mxu0 0
    %3821 = vmatprep.subr.bf16.mxu0 0
    %3822 = vmatpush1.bf16.msra.mxu0 0
    %3823 = vmatprep.subr.bf16.mxu0 0
    %3824 = vmatpush1.bf16.msra.mxu0 0
    %3825 = vmatprep.subr.bf16.mxu0 0
    %3826 = vmatpush1.bf16.msra.mxu0 0
    %3827 = vmatprep.subr.bf16.mxu0 0
    %3828 = vmatpush1.bf16.msra.mxu0 0
    %3829 = vmatprep.subr.bf16.mxu0 0
    %3830 = vmatpush1.bf16.msra.mxu0 0
    %3831 = vmatprep.subr.bf16.mxu0 0
    %3832 = vmatpush1.bf16.msra.mxu0 0
    %3833 = vmatprep.subr.bf16.mxu0 0
    %3834 = vmatpush1.bf16.msra.mxu0 0
    %3835 = vmatprep.subr.bf16.mxu0 0
    %3836 = vmatpush1.bf16.msra.mxu0 0
    %3837 = vmatprep.subr.bf16.mxu0 0
    %3838 = vmatpush1.bf16.msra.mxu0 0
    %3839 = vmatprep.subr.bf16.mxu0 0
    %3840 = vmatpush1.bf16.msra.mxu0 0
    %3841 = vmatprep.mubr.bf16.mxu0 0
    %3842 = vmatmul.mubr.bf16.gmra.mrb[0].mxu0 %v3807
    %v3843 = vpop.f32.mrb[0].mxu0
    %v3844 = vadd.f32 0.0, %v3843
    %v3845 = vpop.f32.mrb[0].mxu0
    %v3846 = vpop.f32.mrb[0].mxu0
    %v3847 = vadd.f32 0.0, %v3846
    %v3848 = vpop.f32.mrb[0].mxu0
    %3849 = vdwg.mxu0
    %v3851 = vsel %vm1387, %v3627, 0
    %3853 = vmatprep.subr.bf16.mxu0 0
    %3854 = vmatpush1.bf16.msra.mxu0 %v1636
    %3855 = vmatprep.subr.bf16.mxu0 0
    %3856 = vmatpush1.bf16.msra.mxu0 0
    %3857 = vmatprep.subr.bf16.mxu0 0
    %3858 = vmatpush1.bf16.msra.mxu0 0
    %3859 = vmatprep.subr.bf16.mxu0 0
    %3860 = vmatpush1.bf16.msra.mxu0 0
    %3861 = vmatprep.subr.bf16.mxu0 0
    %3862 = vmatpush1.bf16.msra.mxu0 0
    %3863 = vmatprep.subr.bf16.mxu0 0
    %3864 = vmatpush1.bf16.msra.mxu0 0
    %3865 = vmatprep.subr.bf16.mxu0 0
    %3866 = vmatpush1.bf16.msra.mxu0 0
    %3867 = vmatprep.subr.bf16.mxu0 0
    %3868 = vmatpush1.bf16.msra.mxu0 0
    %3869 = vmatprep.subr.bf16.mxu0 0
    %3870 = vmatpush1.bf16.msra.mxu0 0
    %3871 = vmatprep.subr.bf16.mxu0 0
    %3872 = vmatpush1.bf16.msra.mxu0 0
    %3873 = vmatprep.subr.bf16.mxu0 0
    %3874 = vmatpush1.bf16.msra.mxu0 0
    %3875 = vmatprep.subr.bf16.mxu0 0
    %3876 = vmatpush1.bf16.msra.mxu0 0
    %3877 = vmatprep.subr.bf16.mxu0 0
    %3878 = vmatpush1.bf16.msra.mxu0 0
    %3879 = vmatprep.subr.bf16.mxu0 0
    %3880 = vmatpush1.bf16.msra.mxu0 0
    %3881 = vmatprep.subr.bf16.mxu0 0
    %3882 = vmatpush1.bf16.msra.mxu0 0
    %3883 = vmatprep.subr.bf16.mxu0 0
    %3884 = vmatpush1.bf16.msra.mxu0 0
    %3885 = vmatprep.mubr.bf16.mxu0 0
    %3886 = vmatmul.mubr.bf16.gmra.mrb[0].mxu0 %v3851
    %v3887 = vpop.f32.mrb[0].mxu0
    %v3888 = vadd.f32 0.0, %v3887
    %v3889 = vpop.f32.mrb[0].mxu0
    %v3890 = vpop.f32.mrb[0].mxu0
    %v3891 = vadd.f32 0.0, %v3890
    %v3892 = vpop.f32.mrb[0].mxu0
    %3893 = vdwg.mxu0
    %v3895 = vsel %vm1387, %v3628, 0
    %3897 = vmatprep.subr.bf16.mxu0 0
    %3898 = vmatpush1.bf16.msra.mxu0 %v1686
    %3899 = vmatprep.subr.bf16.mxu0 0
    %3900 = vmatpush1.bf16.msra.mxu0 0
    %3901 = vmatprep.subr.bf16.mxu0 0
    %3902 = vmatpush1.bf16.msra.mxu0 0
    %3903 = vmatprep.subr.bf16.mxu0 0
    %3904 = vmatpush1.bf16.msra.mxu0 0
    %3905 = vmatprep.subr.bf16.mxu0 0
    %3906 = vmatpush1.bf16.msra.mxu0 0
    %3907 = vmatprep.subr.bf16.mxu0 0
    %3908 = vmatpush1.bf16.msra.mxu0 0
    %3909 = vmatprep.subr.bf16.mxu0 0
    %3910 = vmatpush1.bf16.msra.mxu0 0
    %3911 = vmatprep.subr.bf16.mxu0 0
    %3912 = vmatpush1.bf16.msra.mxu0 0
    %3913 = vmatprep.subr.bf16.mxu0 0
    %3914 = vmatpush1.bf16.msra.mxu0 0
    %3915 = vmatprep.subr.bf16.mxu0 0
    %3916 = vmatpush1.bf16.msra.mxu0 0
    %3917 = vmatprep.subr.bf16.mxu0 0
    %3918 = vmatpush1.bf16.msra.mxu0 0
    %3919 = vmatprep.subr.bf16.mxu0 0
    %3920 = vmatpush1.bf16.msra.mxu0 0
    %3921 = vmatprep.subr.bf16.mxu0 0
    %3922 = vmatpush1.bf16.msra.mxu0 0
    %3923 = vmatprep.subr.bf16.mxu0 0
    %3924 = vmatpush1.bf16.msra.mxu0 0
    %3925 = vmatprep.subr.bf16.mxu0 0
    %3926 = vmatpush1.bf16.msra.mxu0 0
    %3927 = vmatprep.subr.bf16.mxu0 0
    %3928 = vmatpush1.bf16.msra.mxu0 0
    %3929 = vmatprep.mubr.bf16.mxu0 0
    %3930 = vmatmul.mubr.bf16.gmra.mrb[0].mxu0 %v3895
    %v3931 = vpop.f32.mrb[0].mxu0
    %v3932 = vadd.f32 0.0, %v3931
    %v3933 = vpop.f32.mrb[0].mxu0
    %v3934 = vpop.f32.mrb[0].mxu0
    %v3935 = vadd.f32 0.0, %v3934
    %v3936 = vpop.f32.mrb[0].mxu0
    %3937 = vdwg.mxu0
    %v3939 = vsel %vm1387, %v3629, 0
    %3941 = vmatprep.subr.bf16.mxu0 0
    %3942 = vmatpush1.bf16.msra.mxu0 %v1736
    %3943 = vmatprep.subr.bf16.mxu0 0
    %3944 = vmatpush1.bf16.msra.mxu0 0
    %3945 = vmatprep.subr.bf16.mxu0 0
    %3946 = vmatpush1.bf16.msra.mxu0 0
    %3947 = vmatprep.subr.bf16.mxu0 0
    %3948 = vmatpush1.bf16.msra.mxu0 0
    %3949 = vmatprep.subr.bf16.mxu0 0
    %3950 = vmatpush1.bf16.msra.mxu0 0
    %3951 = vmatprep.subr.bf16.mxu0 0
    %3952 = vmatpush1.bf16.msra.mxu0 0
    %3953 = vmatprep.subr.bf16.mxu0 0
    %3954 = vmatpush1.bf16.msra.mxu0 0
    %3955 = vmatprep.subr.bf16.mxu0 0
    %3956 = vmatpush1.bf16.msra.mxu0 0
    %3957 = vmatprep.subr.bf16.mxu0 0
    %3958 = vmatpush1.bf16.msra.mxu0 0
    %3959 = vmatprep.subr.bf16.mxu0 0
    %3960 = vmatpush1.bf16.msra.mxu0 0
    %3961 = vmatprep.subr.bf16.mxu0 0
    %3962 = vmatpush1.bf16.msra.mxu0 0
    %3963 = vmatprep.subr.bf16.mxu0 0
    %3964 = vmatpush1.bf16.msra.mxu0 0
    %3965 = vmatprep.subr.bf16.mxu0 0
    %3966 = vmatpush1.bf16.msra.mxu0 0
    %3967 = vmatprep.subr.bf16.mxu0 0
    %3968 = vmatpush1.bf16.msra.mxu0 0
    %3969 = vmatprep.subr.bf16.mxu0 0
    %3970 = vmatpush1.bf16.msra.mxu0 0
    %3971 = vmatprep.subr.bf16.mxu0 0
    %3972 = vmatpush1.bf16.msra.mxu0 0
    %3973 = vmatprep.mubr.bf16.mxu0 0
    %3974 = vmatmul.mubr.bf16.gmra.mrb[0].mxu0 %v3939
    %v3975 = vpop.f32.mrb[0].mxu0
    %v3976 = vadd.f32 0.0, %v3975
    %v3977 = vpop.f32.mrb[0].mxu0
    %v3978 = vpop.f32.mrb[0].mxu0
    %v3979 = vadd.f32 0.0, %v3978
    %v3980 = vpop.f32.mrb[0].mxu0
    %3981 = vdwg.mxu0
    %v3982 = vpack.c.bf16 %v3671, %v3668
    %v3983 = vpack.c.bf16 %v3715, %v3712
    %v3984 = vpack.c.bf16 %v3759, %v3756
    %v3985 = vpack.c.bf16 %v3803, %v3800
    %v3986 = vpack.c.bf16 %v3847, %v3844
    %v3987 = vpack.c.bf16 %v3891, %v3888
    %v3988 = vpack.c.bf16 %v3935, %v3932
    %v3989 = vpack.c.bf16 %v3979, %v3976
    %3990 = vmatprep.subr.bf16.mxu0 0
    %3991 = vmatpush1.bf16.msra.mxu0 %v3982
    %3992 = vmatprep.subr.bf16.mxu0 0
    %3993 = vmatpush1.bf16.msra.mxu0 0
    %3994 = vmatprep.subr.bf16.mxu0 0
    %3995 = vmatpush1.bf16.msra.mxu0 0
    %3996 = vmatprep.subr.bf16.mxu0 0
    %3997 = vmatpush1.bf16.msra.mxu0 0
    %3998 = vmatprep.subr.bf16.mxu0 0
    %3999 = vmatpush1.bf16.msra.mxu0 0
    %4000 = vmatprep.subr.bf16.mxu0 0
    %4001 = vmatpush1.bf16.msra.mxu0 0
    %4002 = vmatprep.subr.bf16.mxu0 0
    %4003 = vmatpush1.bf16.msra.mxu0 0
    %4004 = vmatprep.subr.bf16.mxu0 0
    %4005 = vmatpush1.bf16.msra.mxu0 0
    %4006 = vmatprep.subr.bf16.mxu0 0
    %4007 = vmatpush1.bf16.msra.mxu0 0
    %4008 = vmatprep.subr.bf16.mxu0 0
    %4009 = vmatpush1.bf16.msra.mxu0 0
    %4010 = vmatprep.subr.bf16.mxu0 0
    %4011 = vmatpush1.bf16.msra.mxu0 0
    %4012 = vmatprep.subr.bf16.mxu0 0
    %4013 = vmatpush1.bf16.msra.mxu0 0
    %4014 = vmatprep.subr.bf16.mxu0 0
    %4015 = vmatpush1.bf16.msra.mxu0 0
    %4016 = vmatprep.subr.bf16.mxu0 0
    %4017 = vmatpush1.bf16.msra.mxu0 0
    %4018 = vmatprep.subr.bf16.mxu0 0
    %4019 = vmatpush1.bf16.msra.mxu0 0
    %4020 = vmatprep.subr.bf16.mxu0 0
    %4021 = vmatpush1.bf16.msra.mxu0 0
    %4022 = vmatprep.mubr.bf16.mxu0 0
    %4023 = vmatmul.mubr.bf16.gmra.mrb[0].mxu0 %v1801
    %v4024 = vpop.f32.mrb[0].mxu0
    %v4025 = vadd.f32 0.0, %v4024
    %v4026 = vpop.f32.mrb[0].mxu0
    %v4027 = vpop.f32.mrb[0].mxu0
    %v4028 = vadd.f32 0.0, %v4027
    %v4029 = vpop.f32.mrb[0].mxu0
    %4030 = vmatprep.mubr.bf16.mxu0 0
    %4031 = vmatmul.mubr.bf16.gmra.mrb[0].mxu0 %v1804
    %v4032 = vpop.f32.mrb[0].mxu0
    %v4033 = vadd.f32 0.0, %v4032
    %v4034 = vpop.f32.mrb[0].mxu0
    %v4035 = vpop.f32.mrb[0].mxu0
    %v4036 = vadd.f32 0.0, %v4035
    %v4037 = vpop.f32.mrb[0].mxu0
    %4038 = vdwg.mxu0
    %4039 = vmatprep.subr.bf16.mxu0 0
    %4040 = vmatpush1.bf16.msra.mxu0 %v3983
    %4041 = vmatprep.subr.bf16.mxu0 0
    %4042 = vmatpush1.bf16.msra.mxu0 0
    %4043 = vmatprep.subr.bf16.mxu0 0
    %4044 = vmatpush1.bf16.msra.mxu0 0
    %4045 = vmatprep.subr.bf16.mxu0 0
    %4046 = vmatpush1.bf16.msra.mxu0 0
    %4047 = vmatprep.subr.bf16.mxu0 0
    %4048 = vmatpush1.bf16.msra.mxu0 0
    %4049 = vmatprep.subr.bf16.mxu0 0
    %4050 = vmatpush1.bf16.msra.mxu0 0
    %4051 = vmatprep.subr.bf16.mxu0 0
    %4052 = vmatpush1.bf16.msra.mxu0 0
    %4053 = vmatprep.subr.bf16.mxu0 0
    %4054 = vmatpush1.bf16.msra.mxu0 0
    %4055 = vmatprep.subr.bf16.mxu0 0
    %4056 = vmatpush1.bf16.msra.mxu0 0
    %4057 = vmatprep.subr.bf16.mxu0 0
    %4058 = vmatpush1.bf16.msra.mxu0 0
    %4059 = vmatprep.subr.bf16.mxu0 0
    %4060 = vmatpush1.bf16.msra.mxu0 0
    %4061 = vmatprep.subr.bf16.mxu0 0
    %4062 = vmatpush1.bf16.msra.mxu0 0
    %4063 = vmatprep.subr.bf16.mxu0 0
    %4064 = vmatpush1.bf16.msra.mxu0 0
    %4065 = vmatprep.subr.bf16.mxu0 0
    %4066 = vmatpush1.bf16.msra.mxu0 0
    %4067 = vmatprep.subr.bf16.mxu0 0
    %4068 = vmatpush1.bf16.msra.mxu0 0
    %4069 = vmatprep.subr.bf16.mxu0 0
    %4070 = vmatpush1.bf16.msra.mxu0 0
    %4071 = vmatprep.mubr.bf16.mxu0 0
    %4072 = vmatmul.mubr.bf16.gmra.mrb[0].mxu0 %v1866
    %v4073 = vpop.f32.mrb[0].mxu0
    %v4074 = vadd.f32 0.0, %v4073
    %v4075 = vpop.f32.mrb[0].mxu0
    %v4076 = vpop.f32.mrb[0].mxu0
    %v4077 = vadd.f32 0.0, %v4076
    %v4078 = vpop.f32.mrb[0].mxu0
    %4079 = vmatprep.mubr.bf16.mxu0 0
    %4080 = vmatmul.mubr.bf16.gmra.mrb[0].mxu0 %v1869
    %v4081 = vpop.f32.mrb[0].mxu0
    %v4082 = vadd.f32 0.0, %v4081
    %v4083 = vpop.f32.mrb[0].mxu0
    %v4084 = vpop.f32.mrb[0].mxu0
    %v4085 = vadd.f32 0.0, %v4084
    %v4086 = vpop.f32.mrb[0].mxu0
    %4087 = vdwg.mxu0
    %4088 = vmatprep.subr.bf16.mxu0 0
    %4089 = vmatpush1.bf16.msra.mxu0 %v3984
    %4090 = vmatprep.subr.bf16.mxu0 0
    %4091 = vmatpush1.bf16.msra.mxu0 0
    %4092 = vmatprep.subr.bf16.mxu0 0
    %4093 = vmatpush1.bf16.msra.mxu0 0
    %4094 = vmatprep.subr.bf16.mxu0 0
    %4095 = vmatpush1.bf16.msra.mxu0 0
    %4096 = vmatprep.subr.bf16.mxu0 0
    %4097 = vmatpush1.bf16.msra.mxu0 0
    %4098 = vmatprep.subr.bf16.mxu0 0
    %4099 = vmatpush1.bf16.msra.mxu0 0
    %4100 = vmatprep.subr.bf16.mxu0 0
    %4101 = vmatpush1.bf16.msra.mxu0 0
    %4102 = vmatprep.subr.bf16.mxu0 0
    %4103 = vmatpush1.bf16.msra.mxu0 0
    %4104 = vmatprep.subr.bf16.mxu0 0
    %4105 = vmatpush1.bf16.msra.mxu0 0
    %4106 = vmatprep.subr.bf16.mxu0 0
    %4107 = vmatpush1.bf16.msra.mxu0 0
    %4108 = vmatprep.subr.bf16.mxu0 0
    %4109 = vmatpush1.bf16.msra.mxu0 0
    %4110 = vmatprep.subr.bf16.mxu0 0
    %4111 = vmatpush1.bf16.msra.mxu0 0
    %4112 = vmatprep.subr.bf16.mxu0 0
    %4113 = vmatpush1.bf16.msra.mxu0 0
    %4114 = vmatprep.subr.bf16.mxu0 0
    %4115 = vmatpush1.bf16.msra.mxu0 0
    %4116 = vmatprep.subr.bf16.mxu0 0
    %4117 = vmatpush1.bf16.msra.mxu0 0
    %4118 = vmatprep.subr.bf16.mxu0 0
    %4119 = vmatpush1.bf16.msra.mxu0 0
    %4120 = vmatprep.mubr.bf16.mxu0 0
    %4121 = vmatmul.mubr.bf16.gmra.mrb[0].mxu0 %v1931
    %v4122 = vpop.f32.mrb[0].mxu0
    %v4123 = vadd.f32 0.0, %v4122
    %v4124 = vpop.f32.mrb[0].mxu0
    %v4125 = vpop.f32.mrb[0].mxu0
    %v4126 = vadd.f32 0.0, %v4125
    %v4127 = vpop.f32.mrb[0].mxu0
    %4128 = vmatprep.mubr.bf16.mxu0 0
    %4129 = vmatmul.mubr.bf16.gmra.mrb[0].mxu0 %v1934
    %v4130 = vpop.f32.mrb[0].mxu0
    %v4131 = vadd.f32 0.0, %v4130
    %v4132 = vpop.f32.mrb[0].mxu0
    %v4133 = vpop.f32.mrb[0].mxu0
    %v4134 = vadd.f32 0.0, %v4133
    %v4135 = vpop.f32.mrb[0].mxu0
    %4136 = vdwg.mxu0
    %4137 = vmatprep.subr.bf16.mxu0 0
    %4138 = vmatpush1.bf16.msra.mxu0 %v3985
    %4139 = vmatprep.subr.bf16.mxu0 0
    %4140 = vmatpush1.bf16.msra.mxu0 0
    %4141 = vmatprep.subr.bf16.mxu0 0
    %4142 = vmatpush1.bf16.msra.mxu0 0
    %4143 = vmatprep.subr.bf16.mxu0 0
    %4144 = vmatpush1.bf16.msra.mxu0 0
    %4145 = vmatprep.subr.bf16.mxu0 0
    %4146 = vmatpush1.bf16.msra.mxu0 0
    %4147 = vmatprep.subr.bf16.mxu0 0
    %4148 = vmatpush1.bf16.msra.mxu0 0
    %4149 = vmatprep.subr.bf16.mxu0 0
    %4150 = vmatpush1.bf16.msra.mxu0 0
    %4151 = vmatprep.subr.bf16.mxu0 0
    %4152 = vmatpush1.bf16.msra.mxu0 0
    %4153 = vmatprep.subr.bf16.mxu0 0
    %4154 = vmatpush1.bf16.msra.mxu0 0
    %4155 = vmatprep.subr.bf16.mxu0 0
    %4156 = vmatpush1.bf16.msra.mxu0 0
    %4157 = vmatprep.subr.bf16.mxu0 0
    %4158 = vmatpush1.bf16.msra.mxu0 0
    %4159 = vmatprep.subr.bf16.mxu0 0
    %4160 = vmatpush1.bf16.msra.mxu0 0
    %4161 = vmatprep.subr.bf16.mxu0 0
    %4162 = vmatpush1.bf16.msra.mxu0 0
    %4163 = vmatprep.subr.bf16.mxu0 0
    %4164 = vmatpush1.bf16.msra.mxu0 0
    %4165 = vmatprep.subr.bf16.mxu0 0
    %4166 = vmatpush1.bf16.msra.mxu0 0
    %4167 = vmatprep.subr.bf16.mxu0 0
    %4168 = vmatpush1.bf16.msra.mxu0 0
    %4169 = vmatprep.mubr.bf16.mxu0 0
    %4170 = vmatmul.mubr.bf16.gmra.mrb[0].mxu0 %v1996
    %v4171 = vpop.f32.mrb[0].mxu0
    %v4172 = vadd.f32 0.0, %v4171
    %v4173 = vpop.f32.mrb[0].mxu0
    %v4174 = vpop.f32.mrb[0].mxu0
    %v4175 = vadd.f32 0.0, %v4174
    %v4176 = vpop.f32.mrb[0].mxu0
    %4177 = vmatprep.mubr.bf16.mxu0 0
    %4178 = vmatmul.mubr.bf16.gmra.mrb[0].mxu0 %v1999
    %v4179 = vpop.f32.mrb[0].mxu0
    %v4180 = vadd.f32 0.0, %v4179
    %v4181 = vpop.f32.mrb[0].mxu0
    %v4182 = vpop.f32.mrb[0].mxu0
    %v4183 = vadd.f32 0.0, %v4182
    %v4184 = vpop.f32.mrb[0].mxu0
    %4185 = vdwg.mxu0
    %4186 = vmatprep.subr.bf16.mxu0 0
    %4187 = vmatpush1.bf16.msra.mxu0 %v3986
    %4188 = vmatprep.subr.bf16.mxu0 0
    %4189 = vmatpush1.bf16.msra.mxu0 0
    %4190 = vmatprep.subr.bf16.mxu0 0
    %4191 = vmatpush1.bf16.msra.mxu0 0
    %4192 = vmatprep.subr.bf16.mxu0 0
    %4193 = vmatpush1.bf16.msra.mxu0 0
    %4194 = vmatprep.subr.bf16.mxu0 0
    %4195 = vmatpush1.bf16.msra.mxu0 0
    %4196 = vmatprep.subr.bf16.mxu0 0
    %4197 = vmatpush1.bf16.msra.mxu0 0
    %4198 = vmatprep.subr.bf16.mxu0 0
    %4199 = vmatpush1.bf16.msra.mxu0 0
    %4200 = vmatprep.subr.bf16.mxu0 0
    %4201 = vmatpush1.bf16.msra.mxu0 0
    %4202 = vmatprep.subr.bf16.mxu0 0
    %4203 = vmatpush1.bf16.msra.mxu0 0
    %4204 = vmatprep.subr.bf16.mxu0 0
    %4205 = vmatpush1.bf16.msra.mxu0 0
    %4206 = vmatprep.subr.bf16.mxu0 0
    %4207 = vmatpush1.bf16.msra.mxu0 0
    %4208 = vmatprep.subr.bf16.mxu0 0
    %4209 = vmatpush1.bf16.msra.mxu0 0
    %4210 = vmatprep.subr.bf16.mxu0 0
    %4211 = vmatpush1.bf16.msra.mxu0 0
    %4212 = vmatprep.subr.bf16.mxu0 0
    %4213 = vmatpush1.bf16.msra.mxu0 0
    %4214 = vmatprep.subr.bf16.mxu0 0
    %4215 = vmatpush1.bf16.msra.mxu0 0
    %4216 = vmatprep.subr.bf16.mxu0 0
    %4217 = vmatpush1.bf16.msra.mxu0 0
    %4218 = vmatprep.mubr.bf16.mxu0 0
    %4219 = vmatmul.mubr.bf16.gmra.mrb[0].mxu0 %v2061
    %v4220 = vpop.f32.mrb[0].mxu0
    %v4221 = vadd.f32 0.0, %v4220
    %v4222 = vpop.f32.mrb[0].mxu0
    %v4223 = vpop.f32.mrb[0].mxu0
    %v4224 = vadd.f32 0.0, %v4223
    %v4225 = vpop.f32.mrb[0].mxu0
    %4226 = vmatprep.mubr.bf16.mxu0 0
    %4227 = vmatmul.mubr.bf16.gmra.mrb[0].mxu0 %v2064
    %v4228 = vpop.f32.mrb[0].mxu0
    %v4229 = vadd.f32 0.0, %v4228
    %v4230 = vpop.f32.mrb[0].mxu0
    %v4231 = vpop.f32.mrb[0].mxu0
    %v4232 = vadd.f32 0.0, %v4231
    %v4233 = vpop.f32.mrb[0].mxu0
    %4234 = vdwg.mxu0
    %4235 = vmatprep.subr.bf16.mxu0 0
    %4236 = vmatpush1.bf16.msra.mxu0 %v3987
    %4237 = vmatprep.subr.bf16.mxu0 0
    %4238 = vmatpush1.bf16.msra.mxu0 0
    %4239 = vmatprep.subr.bf16.mxu0 0
    %4240 = vmatpush1.bf16.msra.mxu0 0
    %4241 = vmatprep.subr.bf16.mxu0 0
    %4242 = vmatpush1.bf16.msra.mxu0 0
    %4243 = vmatprep.subr.bf16.mxu0 0
    %4244 = vmatpush1.bf16.msra.mxu0 0
    %4245 = vmatprep.subr.bf16.mxu0 0
    %4246 = vmatpush1.bf16.msra.mxu0 0
    %4247 = vmatprep.subr.bf16.mxu0 0
    %4248 = vmatpush1.bf16.msra.mxu0 0
    %4249 = vmatprep.subr.bf16.mxu0 0
    %4250 = vmatpush1.bf16.msra.mxu0 0
    %4251 = vmatprep.subr.bf16.mxu0 0
    %4252 = vmatpush1.bf16.msra.mxu0 0
    %4253 = vmatprep.subr.bf16.mxu0 0
    %4254 = vmatpush1.bf16.msra.mxu0 0
    %4255 = vmatprep.subr.bf16.mxu0 0
    %4256 = vmatpush1.bf16.msra.mxu0 0
    %4257 = vmatprep.subr.bf16.mxu0 0
    %4258 = vmatpush1.bf16.msra.mxu0 0
    %4259 = vmatprep.subr.bf16.mxu0 0
    %4260 = vmatpush1.bf16.msra.mxu0 0
    %4261 = vmatprep.subr.bf16.mxu0 0
    %4262 = vmatpush1.bf16.msra.mxu0 0
    %4263 = vmatprep.subr.bf16.mxu0 0
    %4264 = vmatpush1.bf16.msra.mxu0 0
    %4265 = vmatprep.subr.bf16.mxu0 0
    %4266 = vmatpush1.bf16.msra.mxu0 0
    %4267 = vmatprep.mubr.bf16.mxu0 0
    %4268 = vmatmul.mubr.bf16.gmra.mrb[0].mxu0 %v2126
    %v4269 = vpop.f32.mrb[0].mxu0
    %v4270 = vadd.f32 0.0, %v4269
    %v4271 = vpop.f32.mrb[0].mxu0
    %v4272 = vpop.f32.mrb[0].mxu0
    %v4273 = vadd.f32 0.0, %v4272
    %v4274 = vpop.f32.mrb[0].mxu0
    %4275 = vmatprep.mubr.bf16.mxu0 0
    %4276 = vmatmul.mubr.bf16.gmra.mrb[0].mxu0 %v2129
    %v4277 = vpop.f32.mrb[0].mxu0
    %v4278 = vadd.f32 0.0, %v4277
    %v4279 = vpop.f32.mrb[0].mxu0
    %v4280 = vpop.f32.mrb[0].mxu0
    %v4281 = vadd.f32 0.0, %v4280
    %v4282 = vpop.f32.mrb[0].mxu0
    %4283 = vdwg.mxu0
    %4284 = vmatprep.subr.bf16.mxu0 0
    %4285 = vmatpush1.bf16.msra.mxu0 %v3988
    %4286 = vmatprep.subr.bf16.mxu0 0
    %4287 = vmatpush1.bf16.msra.mxu0 0
    %4288 = vmatprep.subr.bf16.mxu0 0
    %4289 = vmatpush1.bf16.msra.mxu0 0
    %4290 = vmatprep.subr.bf16.mxu0 0
    %4291 = vmatpush1.bf16.msra.mxu0 0
    %4292 = vmatprep.subr.bf16.mxu0 0
    %4293 = vmatpush1.bf16.msra.mxu0 0
    %4294 = vmatprep.subr.bf16.mxu0 0
    %4295 = vmatpush1.bf16.msra.mxu0 0
    %4296 = vmatprep.subr.bf16.mxu0 0
    %4297 = vmatpush1.bf16.msra.mxu0 0
    %4298 = vmatprep.subr.bf16.mxu0 0
    %4299 = vmatpush1.bf16.msra.mxu0 0
    %4300 = vmatprep.subr.bf16.mxu0 0
    %4301 = vmatpush1.bf16.msra.mxu0 0
    %4302 = vmatprep.subr.bf16.mxu0 0
    %4303 = vmatpush1.bf16.msra.mxu0 0
    %4304 = vmatprep.subr.bf16.mxu0 0
    %4305 = vmatpush1.bf16.msra.mxu0 0
    %4306 = vmatprep.subr.bf16.mxu0 0
    %4307 = vmatpush1.bf16.msra.mxu0 0
    %4308 = vmatprep.subr.bf16.mxu0 0
    %4309 = vmatpush1.bf16.msra.mxu0 0
    %4310 = vmatprep.subr.bf16.mxu0 0
    %4311 = vmatpush1.bf16.msra.mxu0 0
    %4312 = vmatprep.subr.bf16.mxu0 0
    %4313 = vmatpush1.bf16.msra.mxu0 0
    %4314 = vmatprep.subr.bf16.mxu0 0
    %4315 = vmatpush1.bf16.msra.mxu0 0
    %4316 = vmatprep.mubr.bf16.mxu0 0
    %4317 = vmatmul.mubr.bf16.gmra.mrb[0].mxu0 %v2191
    %v4318 = vpop.f32.mrb[0].mxu0
    %v4319 = vadd.f32 0.0, %v4318
    %v4320 = vpop.f32.mrb[0].mxu0
    %v4321 = vpop.f32.mrb[0].mxu0
    %v4322 = vadd.f32 0.0, %v4321
    %v4323 = vpop.f32.mrb[0].mxu0
    %4324 = vmatprep.mubr.bf16.mxu0 0
    %4325 = vmatmul.mubr.bf16.gmra.mrb[0].mxu0 %v2194
    %v4326 = vpop.f32.mrb[0].mxu0
    %v4327 = vadd.f32 0.0, %v4326
    %v4328 = vpop.f32.mrb[0].mxu0
    %v4329 = vpop.f32.mrb[0].mxu0
    %v4330 = vadd.f32 0.0, %v4329
    %v4331 = vpop.f32.mrb[0].mxu0
    %4332 = vdwg.mxu0
    %4333 = vmatprep.subr.bf16.mxu0 0
    %4334 = vmatpush1.bf16.msra.mxu0 %v3989
    %4335 = vmatprep.subr.bf16.mxu0 0
    %4336 = vmatpush1.bf16.msra.mxu0 0
    %4337 = vmatprep.subr.bf16.mxu0 0
    %4338 = vmatpush1.bf16.msra.mxu0 0
    %4339 = vmatprep.subr.bf16.mxu0 0
    %4340 = vmatpush1.bf16.msra.mxu0 0
    %4341 = vmatprep.subr.bf16.mxu0 0
    %4342 = vmatpush1.bf16.msra.mxu0 0
    %4343 = vmatprep.subr.bf16.mxu0 0
    %4344 = vmatpush1.bf16.msra.mxu0 0
    %4345 = vmatprep.subr.bf16.mxu0 0
    %4346 = vmatpush1.bf16.msra.mxu0 0
    %4347 = vmatprep.subr.bf16.mxu0 0
    %4348 = vmatpush1.bf16.msra.mxu0 0
    %4349 = vmatprep.subr.bf16.mxu0 0
    %4350 = vmatpush1.bf16.msra.mxu0 0
    %4351 = vmatprep.subr.bf16.mxu0 0
    %4352 = vmatpush1.bf16.msra.mxu0 0
    %4353 = vmatprep.subr.bf16.mxu0 0
    %4354 = vmatpush1.bf16.msra.mxu0 0
    %4355 = vmatprep.subr.bf16.mxu0 0
    %4356 = vmatpush1.bf16.msra.mxu0 0
    %4357 = vmatprep.subr.bf16.mxu0 0
    %4358 = vmatpush1.bf16.msra.mxu0 0
    %4359 = vmatprep.subr.bf16.mxu0 0
    %4360 = vmatpush1.bf16.msra.mxu0 0
    %4361 = vmatprep.subr.bf16.mxu0 0
    %4362 = vmatpush1.bf16.msra.mxu0 0
    %4363 = vmatprep.subr.bf16.mxu0 0
    %4364 = vmatpush1.bf16.msra.mxu0 0
    %4365 = vmatprep.mubr.bf16.mxu0 0
    %4366 = vmatmul.mubr.bf16.gmra.mrb[0].mxu0 %v2256
    %v4367 = vpop.f32.mrb[0].mxu0
    %v4368 = vadd.f32 0.0, %v4367
    %v4369 = vpop.f32.mrb[0].mxu0
    %v4370 = vpop.f32.mrb[0].mxu0
    %v4371 = vadd.f32 0.0, %v4370
    %v4372 = vpop.f32.mrb[0].mxu0
    %4373 = vmatprep.mubr.bf16.mxu0 0
    %4374 = vmatmul.mubr.bf16.gmra.mrb[0].mxu0 %v2259
    %v4375 = vpop.f32.mrb[0].mxu0
    %v4376 = vadd.f32 0.0, %v4375
    %v4377 = vpop.f32.mrb[0].mxu0
    %v4378 = vpop.f32.mrb[0].mxu0
    %v4379 = vadd.f32 0.0, %v4378
    %v4380 = vpop.f32.mrb[0].mxu0
    %4381 = vdwg.mxu0
    %s4382 = scalar_lea.vmem [#allocation2], 256
    %4383 = vst.msk [vmem:[%s4382] sm:$0xff] %vm2310, %v4025
    %4384 = vst.msk [vmem:[%s4382 + $0x8] sm:$0xff] %vm2310, %v4028
    %4385 = vst.msk [vmem:[%s4382 + $0x10] sm:$0xff] %vm2310, %v4033
    %4386 = vst.msk [vmem:[%s4382 + $0x18] sm:$0xff] %vm2310, %v4036
    %4387 = vst.msk [vmem:[%s4382 + $0x20] sm:$0xff] %vm2310, %v4074
    %4388 = vst.msk [vmem:[%s4382 + $0x28] sm:$0xff] %vm2310, %v4077
    %4389 = vst.msk [vmem:[%s4382 + $0x30] sm:$0xff] %vm2310, %v4082
    %4390 = vst.msk [vmem:[%s4382 + $0x38] sm:$0xff] %vm2310, %v4085
    %4391 = vst.msk [vmem:[%s4382 + $0x40] sm:$0xff] %vm2310, %v4123
    %4392 = vst.msk [vmem:[%s4382 + $0x48] sm:$0xff] %vm2310, %v4126
    %4393 = vst.msk [vmem:[%s4382 + $0x50] sm:$0xff] %vm2310, %v4131
    %4394 = vst.msk [vmem:[%s4382 + $0x58] sm:$0xff] %vm2310, %v4134
    %4395 = vst.msk [vmem:[%s4382 + $0x60] sm:$0xff] %vm2310, %v4172
    %4396 = vst.msk [vmem:[%s4382 + $0x68] sm:$0xff] %vm2310, %v4175
    %4397 = vst.msk [vmem:[%s4382 + $0x70] sm:$0xff] %vm2310, %v4180
    %4398 = vst.msk [vmem:[%s4382 + $0x78] sm:$0xff] %vm2310, %v4183
    %4399 = vst.msk [vmem:[%s4382 + $0x80] sm:$0xff] %vm2310, %v4221
    %4400 = vst.msk [vmem:[%s4382 + $0x88] sm:$0xff] %vm2310, %v4224
    %4401 = vst.msk [vmem:[%s4382 + $0x90] sm:$0xff] %vm2310, %v4229
    %4402 = vst.msk [vmem:[%s4382 + $0x98] sm:$0xff] %vm2310, %v4232
    %4403 = vst.msk [vmem:[%s4382 + $0xa0] sm:$0xff] %vm2310, %v4270
    %4404 = vst.msk [vmem:[%s4382 + $0xa8] sm:$0xff] %vm2310, %v4273
    %4405 = vst.msk [vmem:[%s4382 + $0xb0] sm:$0xff] %vm2310, %v4278
    %4406 = vst.msk [vmem:[%s4382 + $0xb8] sm:$0xff] %vm2310, %v4281
    %4407 = vst.msk [vmem:[%s4382 + $0xc0] sm:$0xff] %vm2310, %v4319
    %4408 = vst.msk [vmem:[%s4382 + $0xc8] sm:$0xff] %vm2310, %v4322
    %4409 = vst.msk [vmem:[%s4382 + $0xd0] sm:$0xff] %vm2310, %v4327
    %4410 = vst.msk [vmem:[%s4382 + $0xd8] sm:$0xff] %vm2310, %v4330
    %4411 = vst.msk [vmem:[%s4382 + $0xe0] sm:$0xff] %vm2310, %v4368
    %4412 = vst.msk [vmem:[%s4382 + $0xe8] sm:$0xff] %vm2310, %v4371
    %4413 = vst.msk [vmem:[%s4382 + $0xf0] sm:$0xff] %vm2310, %v4376
    %4414 = vst.msk [vmem:[%s4382 + $0xf8] sm:$0xff] %vm2310, %v4379
    // Predicated region
    $region22: #{conv3x3_bilinear.1} parent=1 // pred_check
      _
    $region23: #{conv3x3_bilinear.1} parent=1 // pred_check_branch
      %4416 = sbr.rel (0) target = $region25
    $region24: #{conv3x3_bilinear.1} parent=1 // pred_region
      %s4418 = ssub.s32 8192, 8192
      %4419 = vsyncadd [#allocation3], %s4418
      %s4420 = sshll.u32 [#allocation2], 4
      %s4421 = int_to_ptr.vmem [resolvable:$true] %s4420
      %4426 = dma.vmem_to_hbm [thread:$0]  %s4421, 8192, %s5, [#allocation3], 128, 128, 8
    $region25: #{conv3x3_bilinear.1} parent=1 // pred_fallthru
      _
    // Predicated region
    $region26: #{conv3x3_bilinear.1} parent=1 // pred_check
      _
    $region27: #{conv3x3_bilinear.1} parent=1 // pred_check_branch
      %4428 = sbr.rel (0) target = $region29
    $region28: #{conv3x3_bilinear.1} parent=1 // pred_region
      %4429 = dma.done [#allocation3], 8192
    $region29: #{conv3x3_bilinear.1} parent=1 // pred_fallthru
      _
    %4430 = vsyncpa [#allocation3], 1

</llo_original>
